<compile_context>
chip_gen: v7x
topology: tpu7x:2x2x1
jax: 0.10.0
libtpu: 0.0.40
codegen_flags: <defaults>
</compile_context>

<pallas_src>
import functools

import jax
import jax.numpy as jnp
from jax import lax
from jax.experimental import pallas as pl
from jax.experimental.pallas import tpu as pltpu


def _transformer_block_kernel(
    x_ref,                      # (R, C)  f32,  R = b_tile * N flattened rows
    ln1_w_ref, ln1_b_ref,       # (1, C)  f32
    wqkv_ref,                   # (C, 3C) bf16  columns ordered [q*scale | k | v]
    wo_ref, bo_ref,             # (C, C) bf16, (1, C) f32
    ln2_w_ref, ln2_b_ref,       # (1, C)  f32
    w1_ref, b1_ref,             # (C, 4C) bf16, (1, 4C) f32
    w2_ref, b2_ref,             # (4C, C) bf16, (1, C) f32
    o_ref,                      # (R, C)  f32
    attn_sc,                    # (R, C)  f32 VMEM scratch: concatenated head outputs
    *, B_TILE, N, C, H, HS,
):
    x = x_ref[...]  # (R, C) f32

    def layernorm(h, w, b):
        mu = jnp.mean(h, axis=-1, keepdims=True)
        var = jnp.mean((h - mu) * (h - mu), axis=-1, keepdims=True)  # biased, like torch
        return (h - mu) * lax.rsqrt(var + 1e-5) * w + b

    # ---------------- attention branch ----------------
    h1 = layernorm(x, ln1_w_ref[...], ln1_b_ref[...])

    # Fused QKV projection over all R rows at once (softmax scale pre-folded into q columns).
    qkv = jnp.dot(h1.astype(jnp.bfloat16), wqkv_ref[...],
                  preferred_element_type=jnp.float32)                 # (R, 3C) f32
    qkv_bf = qkv.astype(jnp.bfloat16)                                 # single cast, then slices

    # Additive causal bias, hoisted out of the per-(batch, head) loop.  Large finite negative
    # (not -inf) so a fully-masked row can never produce NaN.
    row = lax.broadcasted_iota(jnp.int32, (N, N), 0)
    col = lax.broadcasted_iota(jnp.int32, (N, N), 1)
    causal_bias = jnp.where(col <= row, 0.0, -1e30).astype(jnp.float32)   # (N, N)

    contract_last = (((1,), (1,)), ((), ()))  # contract axis 1 of both operands (no .T / XLU)

    # Per-(batch, head) attention.  Head outputs go into static column slices of the f32
    # scratch; the output projection is done once over all rows/heads afterwards.
    # NOTE: with HS=8 the per-head column slices are lane-unaligned (XLU copies per head);
    #       real configs with HS >= 128 make this free, so no restructure here.
    for b in range(B_TILE):                    # small compile-time constants -> fully unrolled
        r0 = b * N
        for hd in range(H):
            qh = qkv_bf[r0:r0 + N, hd * HS:(hd + 1) * HS]                     # (N, HS)
            kh = qkv_bf[r0:r0 + N, C + hd * HS:C + (hd + 1) * HS]
            vh = qkv_bf[r0:r0 + N, 2 * C + hd * HS:2 * C + (hd + 1) * HS]

            s = lax.dot_general(qh, kh, dimension_numbers=contract_last,
                                preferred_element_type=jnp.float32)           # (N, N) f32
            s = s + causal_bias
            s_max = jnp.max(s, axis=-1, keepdims=True)
            p = jnp.exp(s - s_max)
            # exact reciprocal: EUP slot is idle here, keeps softmax close to the torch ref
            p = p * pl.reciprocal(jnp.sum(p, axis=-1, keepdims=True), approx=False)

            attn_sc[r0:r0 + N, hd * HS:(hd + 1) * HS] = jnp.dot(
                p.astype(jnp.bfloat16), vh, preferred_element_type=jnp.float32)  # (N, HS)

    # Single output projection (K = C contraction, one MXU push instead of H folds).
    attn = jnp.dot(attn_sc[...].astype(jnp.bfloat16), wo_ref[...],
                   preferred_element_type=jnp.float32) + bo_ref[...]          # (R, C) f32
    x1 = attn + x   # residual (dropout = identity in eval mode)

    # ---------------- FFN branch ----------------
    h2 = layernorm(x1, ln2_w_ref[...], ln2_b_ref[...])
    z = jnp.dot(h2.astype(jnp.bfloat16), w1_ref[...],
                preferred_element_type=jnp.float32) + b1_ref[...]             # (R, 4C) f32
    # GELU (tanh approximation), same as nn.GELU(approximate='tanh'); stays f32 (EUP tanh)
    g = 0.5 * z * (1.0 + jnp.tanh(0.7978845608028654 * (z + 0.044715 * z * z * z)))
    ffn = jnp.dot(g.astype(jnp.bfloat16), w2_ref[...],
                  preferred_element_type=jnp.float32) + b2_ref[...]           # (R, C) f32

    o_ref[...] = (ffn + x1).astype(o_ref.dtype)


def transformer_block(x, params, n_heads, *, b_tile=None):
    """x: (B, N, C) float32. params: dict of weights. Returns (B, N, C)."""
    B, N, C = x.shape
    H = n_heads
    assert C % H == 0
    HS = C // H

    if b_tile is None:
        # Keep grid length >= 2 so both v7x TensorCores get work; on single-TC v5e/v6e
        # pass b_tile=B for the largest tile that fits VMEM.
        b_tile = B // 2 if (B >= 2 and B % 2 == 0) else B
    assert B % b_tile == 0
    R = b_tile * N   # flattened rows per grid step -> fills the MXU M dimension

    kernel = functools.partial(
        _transformer_block_kernel, B_TILE=b_tile, N=N, C=C, H=H, HS=HS
    )

    weight_order = [
        "ln1_w", "ln1_b", "w_qkv", "wo", "bo",
        "ln2_w", "ln2_b", "w1", "b1", "w2", "b2",
    ]
    weight_args = [params[k] for k in weight_order]

    def full_spec(shape):
        # whole-array block, same weights at every grid step
        return pl.BlockSpec(shape, lambda i, _nd=len(shape): (0,) * _nd)

    # Activations presented as a flat (B*N, C) matrix (wrapper reshape is free in XLA).
    x2d = x.reshape(B * N, C)

    in_specs = [pl.BlockSpec((R, C), lambda i: (i, 0))] + [
        full_spec(w.shape) for w in weight_args
    ]

    # Crude VMEM budget: double-buffered activation + weight blocks + scratch, with headroom,
    # capped at v7x's 64 MiB physical VMEM.  (At toy sizes this resolves to the 32 MiB default.)
    weight_bytes = sum(int(w.size) * w.dtype.itemsize for w in weight_args)
    act_bytes = 2 * 2 * (R * C * 4)            # in + out blocks, double-buffered
    scratch_bytes = R * C * 4
    vmem_limit = int(min(64 * 2**20,
                         max(32 * 2**20,
                             act_bytes + 2 * weight_bytes + scratch_bytes + 4 * 2**20)))

    out2d = pl.pallas_call(
        kernel,
        out_shape=jax.ShapeDtypeStruct((B * N, C), x.dtype),
        grid_spec=pltpu.PrefetchScalarGridSpec(
            num_scalar_prefetch=0,
            grid=(B // b_tile,),
            in_specs=in_specs,
            out_specs=pl.BlockSpec((R, C), lambda i: (i, 0)),
            scratch_shapes=[pltpu.VMEM((R, C), jnp.float32)],
        ),
        compiler_params=pltpu.CompilerParams(
            dimension_semantics=("parallel",),   # grid >= 2 -> both v7x TensorCores used
            vmem_limit_bytes=vmem_limit,
        ),
    )(x2d, *weight_args)

    return out2d.reshape(B, N, C)


def init_params(key, embed_dim, n_heads):
    C = embed_dim
    HS = C // n_heads
    scale = HS ** (-0.5)
    ks = jax.random.split(key, 8)
    std = 0.02

    # to_qkv: torch Linear(C, 3C, bias=False).  x @ W_qkv with W_qkv (C, 3C) (= torch weight.T).
    # The module reshapes qkv to (B, N, C, 3), so q/k/v are the *interleaved* column triples of
    # W_qkv.  Deinterleave on the host, pack as contiguous [q | k | v] blocks, and fold the
    # softmax scale (HS**-0.5) into the q block so the kernel is one fused matmul + static slices.
    w_qkv_raw = std * jax.random.normal(ks[0], (C, 3 * C), jnp.float32)
    w_qkv = jnp.concatenate(
        [scale * w_qkv_raw[:, 0::3], w_qkv_raw[:, 1::3], w_qkv_raw[:, 2::3]], axis=1
    )

    bf16 = jnp.bfloat16
    params = {
        "ln1_w": jnp.ones((1, C), jnp.float32),
        "ln1_b": jnp.zeros((1, C), jnp.float32),
        "w_qkv": w_qkv.astype(bf16),                                                   # (C, 3C)
        "wo": (std * jax.random.normal(ks[1], (C, C), jnp.float32)).astype(bf16),      # (C, C)
        "bo": std * jax.random.normal(ks[2], (1, C), jnp.float32),
        "ln2_w": jnp.ones((1, C), jnp.float32),
        "ln2_b": jnp.zeros((1, C), jnp.float32),
        "w1": (std * jax.random.normal(ks[3], (C, 4 * C), jnp.float32)).astype(bf16),  # (C, 4C)
        "b1": std * jax.random.normal(ks[4], (1, 4 * C), jnp.float32),
        "w2": (std * jax.random.normal(ks[5], (4 * C, C), jnp.float32)).astype(bf16),  # (4C, C)
        "b2": std * jax.random.normal(ks[6], (1, C), jnp.float32),
    }
    return params


if __name__ == "__main__":
    # cfg: embed_dim=32, n_heads=4, drop_rate=0.0 (dropout is identity at eval anyway).
    # B=8 so b_tile=4 -> 32 flattened rows per grid step and grid=2 (both v7x TensorCores).
    B, N, C, H = 8, 8, 32, 4

    key = jax.random.PRNGKey(0)
    k_x, k_p = jax.random.split(key)
    x = jax.random.normal(k_x, (B, N, C), jnp.float32)
    params = init_params(k_p, C, n_heads=H)

    out = transformer_block(x, params, n_heads=H)
    jax.block_until_ready(out)
    assert out.shape == (B, N, C) and out.dtype == jnp.float32
    assert bool(jnp.isfinite(out).all())
    print("KERNEL_OK")
</pallas_src>

<mosaic_0001>
module attributes {stable_mosaic.version = 11 : i64} {
  func.func @_transformer_block_kernel(%arg0: i32, %arg1: memref<32x32xf32, #tpu.memory_space<vmem>>, %arg2: memref<1x32xf32, #tpu.memory_space<vmem>>, %arg3: memref<1x32xf32, #tpu.memory_space<vmem>>, %arg4: memref<32x96xbf16, #tpu.memory_space<vmem>>, %arg5: memref<32x32xbf16, #tpu.memory_space<vmem>>, %arg6: memref<1x32xf32, #tpu.memory_space<vmem>>, %arg7: memref<1x32xf32, #tpu.memory_space<vmem>>, %arg8: memref<1x32xf32, #tpu.memory_space<vmem>>, %arg9: memref<32x128xbf16, #tpu.memory_space<vmem>>, %arg10: memref<1x128xf32, #tpu.memory_space<vmem>>, %arg11: memref<128x32xbf16, #tpu.memory_space<vmem>>, %arg12: memref<1x32xf32, #tpu.memory_space<vmem>>, %arg13: memref<32x32xf32, #tpu.memory_space<vmem>>, %arg14: memref<32x32xf32, #tpu.memory_space<vmem>>) attributes {dimension_semantics = [#tpu.dimension_semantics<parallel>], iteration_bounds = array<i64: 2>, scalar_prefetch = 0 : i64, scratch_operands = 1 : i64, tpu.core_type = #tpu.core_type<tc>, window_params = [{transform_indices = @transform_0, window_bounds = array<i64: 32, 32>}, {pipeline_mode = #tpu.pipeline_mode<synchronous>, transform_indices = @transform_1, window_bounds = array<i64: 1, 32>}, {pipeline_mode = #tpu.pipeline_mode<synchronous>, transform_indices = @transform_2, window_bounds = array<i64: 1, 32>}, {pipeline_mode = #tpu.pipeline_mode<synchronous>, transform_indices = @transform_3, window_bounds = array<i64: 32, 96>}, {pipeline_mode = #tpu.pipeline_mode<synchronous>, transform_indices = @transform_4, window_bounds = array<i64: 32, 32>}, {pipeline_mode = #tpu.pipeline_mode<synchronous>, transform_indices = @transform_5, window_bounds = array<i64: 1, 32>}, {pipeline_mode = #tpu.pipeline_mode<synchronous>, transform_indices = @transform_6, window_bounds = array<i64: 1, 32>}, {pipeline_mode = #tpu.pipeline_mode<synchronous>, transform_indices = @transform_7, window_bounds = array<i64: 1, 32>}, {pipeline_mode = #tpu.pipeline_mode<synchronous>, transform_indices = @transform_8, window_bounds = array<i64: 32, 128>}, {pipeline_mode = #tpu.pipeline_mode<synchronous>, transform_indices = @transform_9, window_bounds = array<i64: 1, 128>}, {pipeline_mode = #tpu.pipeline_mode<synchronous>, transform_indices = @transform_10, window_bounds = array<i64: 128, 32>}, {pipeline_mode = #tpu.pipeline_mode<synchronous>, transform_indices = @transform_11, window_bounds = array<i64: 1, 32>}, {transform_indices = @transform_12, window_bounds = array<i64: 32, 32>}]} {
    %c0 = arith.constant 0 : index
    %c0_0 = arith.constant 0 : index
    %0 = vector.load %arg1[%c0, %c0_0] : memref<32x32xf32, #tpu.memory_space<vmem>>, vector<32x32xf32>
    %c0_1 = arith.constant 0 : index
    %c0_2 = arith.constant 0 : index
    %1 = vector.load %arg2[%c0_1, %c0_2] : memref<1x32xf32, #tpu.memory_space<vmem>>, vector<1x32xf32>
    %c0_3 = arith.constant 0 : index
    %c0_4 = arith.constant 0 : index
    %2 = vector.load %arg3[%c0_3, %c0_4] : memref<1x32xf32, #tpu.memory_space<vmem>>, vector<1x32xf32>
    %cst = arith.constant dense<0.000000e+00> : vector<32xf32>
    %3 = vector.multi_reduction <add>, %0, %cst [1] : vector<32x32xf32> to vector<32xf32>
    %4 = vector.shape_cast %3 : vector<32xf32> to vector<32x1xf32>
    %cst_5 = arith.constant 3.200000e+01 : f32
    %5 = vector.broadcast %cst_5 : f32 to vector<32x1xf32>
    %6 = arith.divf %4, %5 : vector<32x1xf32>
    %7 = vector.broadcast %6 : vector<32x1xf32> to vector<32x32xf32>
    %8 = arith.subf %0, %7 : vector<32x32xf32>
    %9 = vector.broadcast %6 : vector<32x1xf32> to vector<32x32xf32>
    %10 = arith.subf %0, %9 : vector<32x32xf32>
    %11 = arith.mulf %8, %10 : vector<32x32xf32>
    %cst_6 = arith.constant dense<0.000000e+00> : vector<32xf32>
    %12 = vector.multi_reduction <add>, %11, %cst_6 [1] : vector<32x32xf32> to vector<32xf32>
    %13 = vector.shape_cast %12 : vector<32xf32> to vector<32x1xf32>
    %cst_7 = arith.constant 3.200000e+01 : f32
    %14 = vector.broadcast %cst_7 : f32 to vector<32x1xf32>
    %15 = arith.divf %13, %14 : vector<32x1xf32>
    %16 = vector.broadcast %6 : vector<32x1xf32> to vector<32x32xf32>
    %17 = arith.subf %0, %16 : vector<32x32xf32>
    %cst_8 = arith.constant 9.99999974E-6 : f32
    %18 = vector.broadcast %cst_8 : f32 to vector<32x1xf32>
    %19 = arith.addf %15, %18 : vector<32x1xf32>
    %20 = math.rsqrt %19 : vector<32x1xf32>
    %21 = vector.broadcast %20 : vector<32x1xf32> to vector<32x32xf32>
    %22 = arith.mulf %17, %21 : vector<32x32xf32>
    %23 = vector.broadcast %1 : vector<1x32xf32> to vector<32x32xf32>
    %24 = arith.mulf %22, %23 : vector<32x32xf32>
    %25 = vector.broadcast %2 : vector<1x32xf32> to vector<32x32xf32>
    %26 = arith.addf %24, %25 : vector<32x32xf32>
    %27 = arith.truncf %26 : vector<32x32xf32> to vector<32x32xbf16>
    %c0_9 = arith.constant 0 : index
    %c0_10 = arith.constant 0 : index
    %28 = vector.load %arg4[%c0_9, %c0_10] : memref<32x96xbf16, #tpu.memory_space<vmem>>, vector<32x96xbf16>
    %cst_11 = arith.constant dense<0.000000e+00> : vector<32x96xf32>
    %29 = tpu.matmul %27, %28, %cst_11 {dimension_numbers = #tpu.dot_dimension_numbers<[1], [0], [0], [1], [0, 0, 1, 1], [], []>} : vector<32x32xbf16>, vector<32x96xbf16>, vector<32x96xf32> -> vector<32x96xf32>
    %30 = arith.truncf %29 : vector<32x96xf32> to vector<32x96xbf16>
    %31 = tpu.iota {dimensions = array<i32: 0>} : vector<8x8xi32>
    %32 = tpu.iota {dimensions = array<i32: 1>} : vector<8x8xi32>
    %33 = arith.cmpi sle, %32, %31 : vector<8x8xi32>
    %cst_12 = arith.constant 0.000000e+00 : f32
    %cst_13 = arith.constant -1.000000e+30 : f32
    %34 = vector.broadcast %cst_12 : f32 to vector<8x8xf32>
    %35 = vector.broadcast %cst_13 : f32 to vector<8x8xf32>
    %36 = arith.select %33, %34, %35 : vector<8x8xi1>, vector<8x8xf32>
    %37 = vector.extract_strided_slice %30 {offsets = [0, 0], sizes = [8, 8], strides = [1, 1]} : vector<32x96xbf16> to vector<8x8xbf16>
    %38 = vector.extract_strided_slice %30 {offsets = [0, 32], sizes = [8, 8], strides = [1, 1]} : vector<32x96xbf16> to vector<8x8xbf16>
    %39 = vector.extract_strided_slice %30 {offsets = [0, 64], sizes = [8, 8], strides = [1, 1]} : vector<32x96xbf16> to vector<8x8xbf16>
    %cst_14 = arith.constant dense<0.000000e+00> : vector<8x8xf32>
    %40 = tpu.matmul %37, %38, %cst_14 {dimension_numbers = #tpu.dot_dimension_numbers<[1], [1], [0], [0], [0, 0, 1, 0], [], []>} : vector<8x8xbf16>, vector<8x8xbf16>, vector<8x8xf32> -> vector<8x8xf32>
    %41 = arith.addf %40, %36 : vector<8x8xf32>
    %cst_15 = arith.constant dense<0xFF800000> : vector<8xf32>
    %42 = vector.multi_reduction <maximumf>, %41, %cst_15 [1] : vector<8x8xf32> to vector<8xf32>
    %43 = vector.shape_cast %42 : vector<8xf32> to vector<8x1xf32>
    %44 = vector.broadcast %43 : vector<8x1xf32> to vector<8x8xf32>
    %45 = arith.subf %41, %44 : vector<8x8xf32>
    %46 = math.exp %45 : vector<8x8xf32>
    %cst_16 = arith.constant dense<0.000000e+00> : vector<8xf32>
    %47 = vector.multi_reduction <add>, %46, %cst_16 [1] : vector<8x8xf32> to vector<8xf32>
    %48 = vector.shape_cast %47 : vector<8xf32> to vector<8x1xf32>
    %49 = tpu.reciprocal %48 : vector<8x1xf32> -> vector<8x1xf32>
    %50 = vector.broadcast %49 : vector<8x1xf32> to vector<8x8xf32>
    %51 = arith.mulf %46, %50 : vector<8x8xf32>
    %52 = arith.truncf %51 : vector<8x8xf32> to vector<8x8xbf16>
    %cst_17 = arith.constant dense<0.000000e+00> : vector<8x8xf32>
    %53 = tpu.matmul %52, %39, %cst_17 {dimension_numbers = #tpu.dot_dimension_numbers<[1], [0], [0], [1], [0, 0, 1, 1], [], []>} : vector<8x8xbf16>, vector<8x8xbf16>, vector<8x8xf32> -> vector<8x8xf32>
    %c0_18 = arith.constant 0 : index
    %c0_19 = arith.constant 0 : index
    %54 = vector.load %arg14[%c0_18, %c0_19] : memref<32x32xf32, #tpu.memory_space<vmem>>, vector<8x8xf32>
    tpu.vector_store %arg14[%c0_18, %c0_19], %53 {strides = array<i32>} : memref<32x32xf32, #tpu.memory_space<vmem>>, vector<8x8xf32>,
    %55 = vector.extract_strided_slice %30 {offsets = [0, 8], sizes = [8, 8], strides = [1, 1]} : vector<32x96xbf16> to vector<8x8xbf16>
    %56 = vector.extract_strided_slice %30 {offsets = [0, 40], sizes = [8, 8], strides = [1, 1]} : vector<32x96xbf16> to vector<8x8xbf16>
    %57 = vector.extract_strided_slice %30 {offsets = [0, 72], sizes = [8, 8], strides = [1, 1]} : vector<32x96xbf16> to vector<8x8xbf16>
    %cst_20 = arith.constant dense<0.000000e+00> : vector<8x8xf32>
    %58 = tpu.matmul %55, %56, %cst_20 {dimension_numbers = #tpu.dot_dimension_numbers<[1], [1], [0], [0], [0, 0, 1, 0], [], []>} : vector<8x8xbf16>, vector<8x8xbf16>, vector<8x8xf32> -> vector<8x8xf32>
    %59 = arith.addf %58, %36 : vector<8x8xf32>
    %cst_21 = arith.constant dense<0xFF800000> : vector<8xf32>
    %60 = vector.multi_reduction <maximumf>, %59, %cst_21 [1] : vector<8x8xf32> to vector<8xf32>
    %61 = vector.shape_cast %60 : vector<8xf32> to vector<8x1xf32>
    %62 = vector.broadcast %61 : vector<8x1xf32> to vector<8x8xf32>
    %63 = arith.subf %59, %62 : vector<8x8xf32>
    %64 = math.exp %63 : vector<8x8xf32>
    %cst_22 = arith.constant dense<0.000000e+00> : vector<8xf32>
    %65 = vector.multi_reduction <add>, %64, %cst_22 [1] : vector<8x8xf32> to vector<8xf32>
    %66 = vector.shape_cast %65 : vector<8xf32> to vector<8x1xf32>
    %67 = tpu.reciprocal %66 : vector<8x1xf32> -> vector<8x1xf32>
    %68 = vector.broadcast %67 : vector<8x1xf32> to vector<8x8xf32>
    %69 = arith.mulf %64, %68 : vector<8x8xf32>
    %70 = arith.truncf %69 : vector<8x8xf32> to vector<8x8xbf16>
    %cst_23 = arith.constant dense<0.000000e+00> : vector<8x8xf32>
    %71 = tpu.matmul %70, %57, %cst_23 {dimension_numbers = #tpu.dot_dimension_numbers<[1], [0], [0], [1], [0, 0, 1, 1], [], []>} : vector<8x8xbf16>, vector<8x8xbf16>, vector<8x8xf32> -> vector<8x8xf32>
    %c0_24 = arith.constant 0 : index
    %c8 = arith.constant 8 : index
    %72 = vector.load %arg14[%c0_24, %c8] : memref<32x32xf32, #tpu.memory_space<vmem>>, vector<8x8xf32>
    tpu.vector_store %arg14[%c0_24, %c8], %71 {strides = array<i32>} : memref<32x32xf32, #tpu.memory_space<vmem>>, vector<8x8xf32>,
    %73 = vector.extract_strided_slice %30 {offsets = [0, 16], sizes = [8, 8], strides = [1, 1]} : vector<32x96xbf16> to vector<8x8xbf16>
    %74 = vector.extract_strided_slice %30 {offsets = [0, 48], sizes = [8, 8], strides = [1, 1]} : vector<32x96xbf16> to vector<8x8xbf16>
    %75 = vector.extract_strided_slice %30 {offsets = [0, 80], sizes = [8, 8], strides = [1, 1]} : vector<32x96xbf16> to vector<8x8xbf16>
    %cst_25 = arith.constant dense<0.000000e+00> : vector<8x8xf32>
    %76 = tpu.matmul %73, %74, %cst_25 {dimension_numbers = #tpu.dot_dimension_numbers<[1], [1], [0], [0], [0, 0, 1, 0], [], []>} : vector<8x8xbf16>, vector<8x8xbf16>, vector<8x8xf32> -> vector<8x8xf32>
    %77 = arith.addf %76, %36 : vector<8x8xf32>
    %cst_26 = arith.constant dense<0xFF800000> : vector<8xf32>
    %78 = vector.multi_reduction <maximumf>, %77, %cst_26 [1] : vector<8x8xf32> to vector<8xf32>
    %79 = vector.shape_cast %78 : vector<8xf32> to vector<8x1xf32>
    %80 = vector.broadcast %79 : vector<8x1xf32> to vector<8x8xf32>
    %81 = arith.subf %77, %80 : vector<8x8xf32>
    %82 = math.exp %81 : vector<8x8xf32>
    %cst_27 = arith.constant dense<0.000000e+00> : vector<8xf32>
    %83 = vector.multi_reduction <add>, %82, %cst_27 [1] : vector<8x8xf32> to vector<8xf32>
    %84 = vector.shape_cast %83 : vector<8xf32> to vector<8x1xf32>
    %85 = tpu.reciprocal %84 : vector<8x1xf32> -> vector<8x1xf32>
    %86 = vector.broadcast %85 : vector<8x1xf32> to vector<8x8xf32>
    %87 = arith.mulf %82, %86 : vector<8x8xf32>
    %88 = arith.truncf %87 : vector<8x8xf32> to vector<8x8xbf16>
    %cst_28 = arith.constant dense<0.000000e+00> : vector<8x8xf32>
    %89 = tpu.matmul %88, %75, %cst_28 {dimension_numbers = #tpu.dot_dimension_numbers<[1], [0], [0], [1], [0, 0, 1, 1], [], []>} : vector<8x8xbf16>, vector<8x8xbf16>, vector<8x8xf32> -> vector<8x8xf32>
    %c0_29 = arith.constant 0 : index
    %c16 = arith.constant 16 : index
    %90 = vector.load %arg14[%c0_29, %c16] : memref<32x32xf32, #tpu.memory_space<vmem>>, vector<8x8xf32>
    tpu.vector_store %arg14[%c0_29, %c16], %89 {strides = array<i32>} : memref<32x32xf32, #tpu.memory_space<vmem>>, vector<8x8xf32>,
    %91 = vector.extract_strided_slice %30 {offsets = [0, 24], sizes = [8, 8], strides = [1, 1]} : vector<32x96xbf16> to vector<8x8xbf16>
    %92 = vector.extract_strided_slice %30 {offsets = [0, 56], sizes = [8, 8], strides = [1, 1]} : vector<32x96xbf16> to vector<8x8xbf16>
    %93 = vector.extract_strided_slice %30 {offsets = [0, 88], sizes = [8, 8], strides = [1, 1]} : vector<32x96xbf16> to vector<8x8xbf16>
    %cst_30 = arith.constant dense<0.000000e+00> : vector<8x8xf32>
    %94 = tpu.matmul %91, %92, %cst_30 {dimension_numbers = #tpu.dot_dimension_numbers<[1], [1], [0], [0], [0, 0, 1, 0], [], []>} : vector<8x8xbf16>, vector<8x8xbf16>, vector<8x8xf32> -> vector<8x8xf32>
    %95 = arith.addf %94, %36 : vector<8x8xf32>
    %cst_31 = arith.constant dense<0xFF800000> : vector<8xf32>
    %96 = vector.multi_reduction <maximumf>, %95, %cst_31 [1] : vector<8x8xf32> to vector<8xf32>
    %97 = vector.shape_cast %96 : vector<8xf32> to vector<8x1xf32>
    %98 = vector.broadcast %97 : vector<8x1xf32> to vector<8x8xf32>
    %99 = arith.subf %95, %98 : vector<8x8xf32>
    %100 = math.exp %99 : vector<8x8xf32>
    %cst_32 = arith.constant dense<0.000000e+00> : vector<8xf32>
    %101 = vector.multi_reduction <add>, %100, %cst_32 [1] : vector<8x8xf32> to vector<8xf32>
    %102 = vector.shape_cast %101 : vector<8xf32> to vector<8x1xf32>
    %103 = tpu.reciprocal %102 : vector<8x1xf32> -> vector<8x1xf32>
    %104 = vector.broadcast %103 : vector<8x1xf32> to vector<8x8xf32>
    %105 = arith.mulf %100, %104 : vector<8x8xf32>
    %106 = arith.truncf %105 : vector<8x8xf32> to vector<8x8xbf16>
    %cst_33 = arith.constant dense<0.000000e+00> : vector<8x8xf32>
    %107 = tpu.matmul %106, %93, %cst_33 {dimension_numbers = #tpu.dot_dimension_numbers<[1], [0], [0], [1], [0, 0, 1, 1], [], []>} : vector<8x8xbf16>, vector<8x8xbf16>, vector<8x8xf32> -> vector<8x8xf32>
    %c0_34 = arith.constant 0 : index
    %c24 = arith.constant 24 : index
    %108 = vector.load %arg14[%c0_34, %c24] : memref<32x32xf32, #tpu.memory_space<vmem>>, vector<8x8xf32>
    tpu.vector_store %arg14[%c0_34, %c24], %107 {strides = array<i32>} : memref<32x32xf32, #tpu.memory_space<vmem>>, vector<8x8xf32>,
    %109 = vector.extract_strided_slice %30 {offsets = [8, 0], sizes = [8, 8], strides = [1, 1]} : vector<32x96xbf16> to vector<8x8xbf16>
    %110 = vector.extract_strided_slice %30 {offsets = [8, 32], sizes = [8, 8], strides = [1, 1]} : vector<32x96xbf16> to vector<8x8xbf16>
    %111 = vector.extract_strided_slice %30 {offsets = [8, 64], sizes = [8, 8], strides = [1, 1]} : vector<32x96xbf16> to vector<8x8xbf16>
    %cst_35 = arith.constant dense<0.000000e+00> : vector<8x8xf32>
    %112 = tpu.matmul %109, %110, %cst_35 {dimension_numbers = #tpu.dot_dimension_numbers<[1], [1], [0], [0], [0, 0, 1, 0], [], []>} : vector<8x8xbf16>, vector<8x8xbf16>, vector<8x8xf32> -> vector<8x8xf32>
    %113 = arith.addf %112, %36 : vector<8x8xf32>
    %cst_36 = arith.constant dense<0xFF800000> : vector<8xf32>
    %114 = vector.multi_reduction <maximumf>, %113, %cst_36 [1] : vector<8x8xf32> to vector<8xf32>
    %115 = vector.shape_cast %114 : vector<8xf32> to vector<8x1xf32>
    %116 = vector.broadcast %115 : vector<8x1xf32> to vector<8x8xf32>
    %117 = arith.subf %113, %116 : vector<8x8xf32>
    %118 = math.exp %117 : vector<8x8xf32>
    %cst_37 = arith.constant dense<0.000000e+00> : vector<8xf32>
    %119 = vector.multi_reduction <add>, %118, %cst_37 [1] : vector<8x8xf32> to vector<8xf32>
    %120 = vector.shape_cast %119 : vector<8xf32> to vector<8x1xf32>
    %121 = tpu.reciprocal %120 : vector<8x1xf32> -> vector<8x1xf32>
    %122 = vector.broadcast %121 : vector<8x1xf32> to vector<8x8xf32>
    %123 = arith.mulf %118, %122 : vector<8x8xf32>
    %124 = arith.truncf %123 : vector<8x8xf32> to vector<8x8xbf16>
    %cst_38 = arith.constant dense<0.000000e+00> : vector<8x8xf32>
    %125 = tpu.matmul %124, %111, %cst_38 {dimension_numbers = #tpu.dot_dimension_numbers<[1], [0], [0], [1], [0, 0, 1, 1], [], []>} : vector<8x8xbf16>, vector<8x8xbf16>, vector<8x8xf32> -> vector<8x8xf32>
    %c8_39 = arith.constant 8 : index
    %c0_40 = arith.constant 0 : index
    %126 = vector.load %arg14[%c8_39, %c0_40] : memref<32x32xf32, #tpu.memory_space<vmem>>, vector<8x8xf32>
    tpu.vector_store %arg14[%c8_39, %c0_40], %125 {strides = array<i32>} : memref<32x32xf32, #tpu.memory_space<vmem>>, vector<8x8xf32>,
    %127 = vector.extract_strided_slice %30 {offsets = [8, 8], sizes = [8, 8], strides = [1, 1]} : vector<32x96xbf16> to vector<8x8xbf16>
    %128 = vector.extract_strided_slice %30 {offsets = [8, 40], sizes = [8, 8], strides = [1, 1]} : vector<32x96xbf16> to vector<8x8xbf16>
    %129 = vector.extract_strided_slice %30 {offsets = [8, 72], sizes = [8, 8], strides = [1, 1]} : vector<32x96xbf16> to vector<8x8xbf16>
    %cst_41 = arith.constant dense<0.000000e+00> : vector<8x8xf32>
    %130 = tpu.matmul %127, %128, %cst_41 {dimension_numbers = #tpu.dot_dimension_numbers<[1], [1], [0], [0], [0, 0, 1, 0], [], []>} : vector<8x8xbf16>, vector<8x8xbf16>, vector<8x8xf32> -> vector<8x8xf32>
    %131 = arith.addf %130, %36 : vector<8x8xf32>
    %cst_42 = arith.constant dense<0xFF800000> : vector<8xf32>
    %132 = vector.multi_reduction <maximumf>, %131, %cst_42 [1] : vector<8x8xf32> to vector<8xf32>
    %133 = vector.shape_cast %132 : vector<8xf32> to vector<8x1xf32>
    %134 = vector.broadcast %133 : vector<8x1xf32> to vector<8x8xf32>
    %135 = arith.subf %131, %134 : vector<8x8xf32>
    %136 = math.exp %135 : vector<8x8xf32>
    %cst_43 = arith.constant dense<0.000000e+00> : vector<8xf32>
    %137 = vector.multi_reduction <add>, %136, %cst_43 [1] : vector<8x8xf32> to vector<8xf32>
    %138 = vector.shape_cast %137 : vector<8xf32> to vector<8x1xf32>
    %139 = tpu.reciprocal %138 : vector<8x1xf32> -> vector<8x1xf32>
    %140 = vector.broadcast %139 : vector<8x1xf32> to vector<8x8xf32>
    %141 = arith.mulf %136, %140 : vector<8x8xf32>
    %142 = arith.truncf %141 : vector<8x8xf32> to vector<8x8xbf16>
    %cst_44 = arith.constant dense<0.000000e+00> : vector<8x8xf32>
    %143 = tpu.matmul %142, %129, %cst_44 {dimension_numbers = #tpu.dot_dimension_numbers<[1], [0], [0], [1], [0, 0, 1, 1], [], []>} : vector<8x8xbf16>, vector<8x8xbf16>, vector<8x8xf32> -> vector<8x8xf32>
    %c8_45 = arith.constant 8 : index
    %c8_46 = arith.constant 8 : index
    %144 = vector.load %arg14[%c8_45, %c8_46] : memref<32x32xf32, #tpu.memory_space<vmem>>, vector<8x8xf32>
    tpu.vector_store %arg14[%c8_45, %c8_46], %143 {strides = array<i32>} : memref<32x32xf32, #tpu.memory_space<vmem>>, vector<8x8xf32>,
    %145 = vector.extract_strided_slice %30 {offsets = [8, 16], sizes = [8, 8], strides = [1, 1]} : vector<32x96xbf16> to vector<8x8xbf16>
    %146 = vector.extract_strided_slice %30 {offsets = [8, 48], sizes = [8, 8], strides = [1, 1]} : vector<32x96xbf16> to vector<8x8xbf16>
    %147 = vector.extract_strided_slice %30 {offsets = [8, 80], sizes = [8, 8], strides = [1, 1]} : vector<32x96xbf16> to vector<8x8xbf16>
    %cst_47 = arith.constant dense<0.000000e+00> : vector<8x8xf32>
    %148 = tpu.matmul %145, %146, %cst_47 {dimension_numbers = #tpu.dot_dimension_numbers<[1], [1], [0], [0], [0, 0, 1, 0], [], []>} : vector<8x8xbf16>, vector<8x8xbf16>, vector<8x8xf32> -> vector<8x8xf32>
    %149 = arith.addf %148, %36 : vector<8x8xf32>
    %cst_48 = arith.constant dense<0xFF800000> : vector<8xf32>
    %150 = vector.multi_reduction <maximumf>, %149, %cst_48 [1] : vector<8x8xf32> to vector<8xf32>
    %151 = vector.shape_cast %150 : vector<8xf32> to vector<8x1xf32>
    %152 = vector.broadcast %151 : vector<8x1xf32> to vector<8x8xf32>
    %153 = arith.subf %149, %152 : vector<8x8xf32>
    %154 = math.exp %153 : vector<8x8xf32>
    %cst_49 = arith.constant dense<0.000000e+00> : vector<8xf32>
    %155 = vector.multi_reduction <add>, %154, %cst_49 [1] : vector<8x8xf32> to vector<8xf32>
    %156 = vector.shape_cast %155 : vector<8xf32> to vector<8x1xf32>
    %157 = tpu.reciprocal %156 : vector<8x1xf32> -> vector<8x1xf32>
    %158 = vector.broadcast %157 : vector<8x1xf32> to vector<8x8xf32>
    %159 = arith.mulf %154, %158 : vector<8x8xf32>
    %160 = arith.truncf %159 : vector<8x8xf32> to vector<8x8xbf16>
    %cst_50 = arith.constant dense<0.000000e+00> : vector<8x8xf32>
    %161 = tpu.matmul %160, %147, %cst_50 {dimension_numbers = #tpu.dot_dimension_numbers<[1], [0], [0], [1], [0, 0, 1, 1], [], []>} : vector<8x8xbf16>, vector<8x8xbf16>, vector<8x8xf32> -> vector<8x8xf32>
    %c8_51 = arith.constant 8 : index
    %c16_52 = arith.constant 16 : index
    %162 = vector.load %arg14[%c8_51, %c16_52] : memref<32x32xf32, #tpu.memory_space<vmem>>, vector<8x8xf32>
    tpu.vector_store %arg14[%c8_51, %c16_52], %161 {strides = array<i32>} : memref<32x32xf32, #tpu.memory_space<vmem>>, vector<8x8xf32>,
    %163 = vector.extract_strided_slice %30 {offsets = [8, 24], sizes = [8, 8], strides = [1, 1]} : vector<32x96xbf16> to vector<8x8xbf16>
    %164 = vector.extract_strided_slice %30 {offsets = [8, 56], sizes = [8, 8], strides = [1, 1]} : vector<32x96xbf16> to vector<8x8xbf16>
    %165 = vector.extract_strided_slice %30 {offsets = [8, 88], sizes = [8, 8], strides = [1, 1]} : vector<32x96xbf16> to vector<8x8xbf16>
    %cst_53 = arith.constant dense<0.000000e+00> : vector<8x8xf32>
    %166 = tpu.matmul %163, %164, %cst_53 {dimension_numbers = #tpu.dot_dimension_numbers<[1], [1], [0], [0], [0, 0, 1, 0], [], []>} : vector<8x8xbf16>, vector<8x8xbf16>, vector<8x8xf32> -> vector<8x8xf32>
    %167 = arith.addf %166, %36 : vector<8x8xf32>
    %cst_54 = arith.constant dense<0xFF800000> : vector<8xf32>
    %168 = vector.multi_reduction <maximumf>, %167, %cst_54 [1] : vector<8x8xf32> to vector<8xf32>
    %169 = vector.shape_cast %168 : vector<8xf32> to vector<8x1xf32>
    %170 = vector.broadcast %169 : vector<8x1xf32> to vector<8x8xf32>
    %171 = arith.subf %167, %170 : vector<8x8xf32>
    %172 = math.exp %171 : vector<8x8xf32>
    %cst_55 = arith.constant dense<0.000000e+00> : vector<8xf32>
    %173 = vector.multi_reduction <add>, %172, %cst_55 [1] : vector<8x8xf32> to vector<8xf32>
    %174 = vector.shape_cast %173 : vector<8xf32> to vector<8x1xf32>
    %175 = tpu.reciprocal %174 : vector<8x1xf32> -> vector<8x1xf32>
    %176 = vector.broadcast %175 : vector<8x1xf32> to vector<8x8xf32>
    %177 = arith.mulf %172, %176 : vector<8x8xf32>
    %178 = arith.truncf %177 : vector<8x8xf32> to vector<8x8xbf16>
    %cst_56 = arith.constant dense<0.000000e+00> : vector<8x8xf32>
    %179 = tpu.matmul %178, %165, %cst_56 {dimension_numbers = #tpu.dot_dimension_numbers<[1], [0], [0], [1], [0, 0, 1, 1], [], []>} : vector<8x8xbf16>, vector<8x8xbf16>, vector<8x8xf32> -> vector<8x8xf32>
    %c8_57 = arith.constant 8 : index
    %c24_58 = arith.constant 24 : index
    %180 = vector.load %arg14[%c8_57, %c24_58] : memref<32x32xf32, #tpu.memory_space<vmem>>, vector<8x8xf32>
    tpu.vector_store %arg14[%c8_57, %c24_58], %179 {strides = array<i32>} : memref<32x32xf32, #tpu.memory_space<vmem>>, vector<8x8xf32>,
    %181 = vector.extract_strided_slice %30 {offsets = [16, 0], sizes = [8, 8], strides = [1, 1]} : vector<32x96xbf16> to vector<8x8xbf16>
    %182 = vector.extract_strided_slice %30 {offsets = [16, 32], sizes = [8, 8], strides = [1, 1]} : vector<32x96xbf16> to vector<8x8xbf16>
    %183 = vector.extract_strided_slice %30 {offsets = [16, 64], sizes = [8, 8], strides = [1, 1]} : vector<32x96xbf16> to vector<8x8xbf16>
    %cst_59 = arith.constant dense<0.000000e+00> : vector<8x8xf32>
    %184 = tpu.matmul %181, %182, %cst_59 {dimension_numbers = #tpu.dot_dimension_numbers<[1], [1], [0], [0], [0, 0, 1, 0], [], []>} : vector<8x8xbf16>, vector<8x8xbf16>, vector<8x8xf32> -> vector<8x8xf32>
    %185 = arith.addf %184, %36 : vector<8x8xf32>
    %cst_60 = arith.constant dense<0xFF800000> : vector<8xf32>
    %186 = vector.multi_reduction <maximumf>, %185, %cst_60 [1] : vector<8x8xf32> to vector<8xf32>
    %187 = vector.shape_cast %186 : vector<8xf32> to vector<8x1xf32>
    %188 = vector.broadcast %187 : vector<8x1xf32> to vector<8x8xf32>
    %189 = arith.subf %185, %188 : vector<8x8xf32>
    %190 = math.exp %189 : vector<8x8xf32>
    %cst_61 = arith.constant dense<0.000000e+00> : vector<8xf32>
    %191 = vector.multi_reduction <add>, %190, %cst_61 [1] : vector<8x8xf32> to vector<8xf32>
    %192 = vector.shape_cast %191 : vector<8xf32> to vector<8x1xf32>
    %193 = tpu.reciprocal %192 : vector<8x1xf32> -> vector<8x1xf32>
    %194 = vector.broadcast %193 : vector<8x1xf32> to vector<8x8xf32>
    %195 = arith.mulf %190, %194 : vector<8x8xf32>
    %196 = arith.truncf %195 : vector<8x8xf32> to vector<8x8xbf16>
    %cst_62 = arith.constant dense<0.000000e+00> : vector<8x8xf32>
    %197 = tpu.matmul %196, %183, %cst_62 {dimension_numbers = #tpu.dot_dimension_numbers<[1], [0], [0], [1], [0, 0, 1, 1], [], []>} : vector<8x8xbf16>, vector<8x8xbf16>, vector<8x8xf32> -> vector<8x8xf32>
    %c16_63 = arith.constant 16 : index
    %c0_64 = arith.constant 0 : index
    %198 = vector.load %arg14[%c16_63, %c0_64] : memref<32x32xf32, #tpu.memory_space<vmem>>, vector<8x8xf32>
    tpu.vector_store %arg14[%c16_63, %c0_64], %197 {strides = array<i32>} : memref<32x32xf32, #tpu.memory_space<vmem>>, vector<8x8xf32>,
    %199 = vector.extract_strided_slice %30 {offsets = [16, 8], sizes = [8, 8], strides = [1, 1]} : vector<32x96xbf16> to vector<8x8xbf16>
    %200 = vector.extract_strided_slice %30 {offsets = [16, 40], sizes = [8, 8], strides = [1, 1]} : vector<32x96xbf16> to vector<8x8xbf16>
    %201 = vector.extract_strided_slice %30 {offsets = [16, 72], sizes = [8, 8], strides = [1, 1]} : vector<32x96xbf16> to vector<8x8xbf16>
    %cst_65 = arith.constant dense<0.000000e+00> : vector<8x8xf32>
    %202 = tpu.matmul %199, %200, %cst_65 {dimension_numbers = #tpu.dot_dimension_numbers<[1], [1], [0], [0], [0, 0, 1, 0], [], []>} : vector<8x8xbf16>, vector<8x8xbf16>, vector<8x8xf32> -> vector<8x8xf32>
    %203 = arith.addf %202, %36 : vector<8x8xf32>
    %cst_66 = arith.constant dense<0xFF800000> : vector<8xf32>
    %204 = vector.multi_reduction <maximumf>, %203, %cst_66 [1] : vector<8x8xf32> to vector<8xf32>
    %205 = vector.shape_cast %204 : vector<8xf32> to vector<8x1xf32>
    %206 = vector.broadcast %205 : vector<8x1xf32> to vector<8x8xf32>
    %207 = arith.subf %203, %206 : vector<8x8xf32>
    %208 = math.exp %207 : vector<8x8xf32>
    %cst_67 = arith.constant dense<0.000000e+00> : vector<8xf32>
    %209 = vector.multi_reduction <add>, %208, %cst_67 [1] : vector<8x8xf32> to vector<8xf32>
    %210 = vector.shape_cast %209 : vector<8xf32> to vector<8x1xf32>
    %211 = tpu.reciprocal %210 : vector<8x1xf32> -> vector<8x1xf32>
    %212 = vector.broadcast %211 : vector<8x1xf32> to vector<8x8xf32>
    %213 = arith.mulf %208, %212 : vector<8x8xf32>
    %214 = arith.truncf %213 : vector<8x8xf32> to vector<8x8xbf16>
    %cst_68 = arith.constant dense<0.000000e+00> : vector<8x8xf32>
    %215 = tpu.matmul %214, %201, %cst_68 {dimension_numbers = #tpu.dot_dimension_numbers<[1], [0], [0], [1], [0, 0, 1, 1], [], []>} : vector<8x8xbf16>, vector<8x8xbf16>, vector<8x8xf32> -> vector<8x8xf32>
    %c16_69 = arith.constant 16 : index
    %c8_70 = arith.constant 8 : index
    %216 = vector.load %arg14[%c16_69, %c8_70] : memref<32x32xf32, #tpu.memory_space<vmem>>, vector<8x8xf32>
    tpu.vector_store %arg14[%c16_69, %c8_70], %215 {strides = array<i32>} : memref<32x32xf32, #tpu.memory_space<vmem>>, vector<8x8xf32>,
    %217 = vector.extract_strided_slice %30 {offsets = [16, 16], sizes = [8, 8], strides = [1, 1]} : vector<32x96xbf16> to vector<8x8xbf16>
    %218 = vector.extract_strided_slice %30 {offsets = [16, 48], sizes = [8, 8], strides = [1, 1]} : vector<32x96xbf16> to vector<8x8xbf16>
    %219 = vector.extract_strided_slice %30 {offsets = [16, 80], sizes = [8, 8], strides = [1, 1]} : vector<32x96xbf16> to vector<8x8xbf16>
    %cst_71 = arith.constant dense<0.000000e+00> : vector<8x8xf32>
    %220 = tpu.matmul %217, %218, %cst_71 {dimension_numbers = #tpu.dot_dimension_numbers<[1], [1], [0], [0], [0, 0, 1, 0], [], []>} : vector<8x8xbf16>, vector<8x8xbf16>, vector<8x8xf32> -> vector<8x8xf32>
    %221 = arith.addf %220, %36 : vector<8x8xf32>
    %cst_72 = arith.constant dense<0xFF800000> : vector<8xf32>
    %222 = vector.multi_reduction <maximumf>, %221, %cst_72 [1] : vector<8x8xf32> to vector<8xf32>
    %223 = vector.shape_cast %222 : vector<8xf32> to vector<8x1xf32>
    %224 = vector.broadcast %223 : vector<8x1xf32> to vector<8x8xf32>
    %225 = arith.subf %221, %224 : vector<8x8xf32>
    %226 = math.exp %225 : vector<8x8xf32>
    %cst_73 = arith.constant dense<0.000000e+00> : vector<8xf32>
    %227 = vector.multi_reduction <add>, %226, %cst_73 [1] : vector<8x8xf32> to vector<8xf32>
    %228 = vector.shape_cast %227 : vector<8xf32> to vector<8x1xf32>
    %229 = tpu.reciprocal %228 : vector<8x1xf32> -> vector<8x1xf32>
    %230 = vector.broadcast %229 : vector<8x1xf32> to vector<8x8xf32>
    %231 = arith.mulf %226, %230 : vector<8x8xf32>
    %232 = arith.truncf %231 : vector<8x8xf32> to vector<8x8xbf16>
    %cst_74 = arith.constant dense<0.000000e+00> : vector<8x8xf32>
    %233 = tpu.matmul %232, %219, %cst_74 {dimension_numbers = #tpu.dot_dimension_numbers<[1], [0], [0], [1], [0, 0, 1, 1], [], []>} : vector<8x8xbf16>, vector<8x8xbf16>, vector<8x8xf32> -> vector<8x8xf32>
    %c16_75 = arith.constant 16 : index
    %c16_76 = arith.constant 16 : index
    %234 = vector.load %arg14[%c16_75, %c16_76] : memref<32x32xf32, #tpu.memory_space<vmem>>, vector<8x8xf32>
    tpu.vector_store %arg14[%c16_75, %c16_76], %233 {strides = array<i32>} : memref<32x32xf32, #tpu.memory_space<vmem>>, vector<8x8xf32>,
    %235 = vector.extract_strided_slice %30 {offsets = [16, 24], sizes = [8, 8], strides = [1, 1]} : vector<32x96xbf16> to vector<8x8xbf16>
    %236 = vector.extract_strided_slice %30 {offsets = [16, 56], sizes = [8, 8], strides = [1, 1]} : vector<32x96xbf16> to vector<8x8xbf16>
    %237 = vector.extract_strided_slice %30 {offsets = [16, 88], sizes = [8, 8], strides = [1, 1]} : vector<32x96xbf16> to vector<8x8xbf16>
    %cst_77 = arith.constant dense<0.000000e+00> : vector<8x8xf32>
    %238 = tpu.matmul %235, %236, %cst_77 {dimension_numbers = #tpu.dot_dimension_numbers<[1], [1], [0], [0], [0, 0, 1, 0], [], []>} : vector<8x8xbf16>, vector<8x8xbf16>, vector<8x8xf32> -> vector<8x8xf32>
    %239 = arith.addf %238, %36 : vector<8x8xf32>
    %cst_78 = arith.constant dense<0xFF800000> : vector<8xf32>
    %240 = vector.multi_reduction <maximumf>, %239, %cst_78 [1] : vector<8x8xf32> to vector<8xf32>
    %241 = vector.shape_cast %240 : vector<8xf32> to vector<8x1xf32>
    %242 = vector.broadcast %241 : vector<8x1xf32> to vector<8x8xf32>
    %243 = arith.subf %239, %242 : vector<8x8xf32>
    %244 = math.exp %243 : vector<8x8xf32>
    %cst_79 = arith.constant dense<0.000000e+00> : vector<8xf32>
    %245 = vector.multi_reduction <add>, %244, %cst_79 [1] : vector<8x8xf32> to vector<8xf32>
    %246 = vector.shape_cast %245 : vector<8xf32> to vector<8x1xf32>
    %247 = tpu.reciprocal %246 : vector<8x1xf32> -> vector<8x1xf32>
    %248 = vector.broadcast %247 : vector<8x1xf32> to vector<8x8xf32>
    %249 = arith.mulf %244, %248 : vector<8x8xf32>
    %250 = arith.truncf %249 : vector<8x8xf32> to vector<8x8xbf16>
    %cst_80 = arith.constant dense<0.000000e+00> : vector<8x8xf32>
    %251 = tpu.matmul %250, %237, %cst_80 {dimension_numbers = #tpu.dot_dimension_numbers<[1], [0], [0], [1], [0, 0, 1, 1], [], []>} : vector<8x8xbf16>, vector<8x8xbf16>, vector<8x8xf32> -> vector<8x8xf32>
    %c16_81 = arith.constant 16 : index
    %c24_82 = arith.constant 24 : index
    %252 = vector.load %arg14[%c16_81, %c24_82] : memref<32x32xf32, #tpu.memory_space<vmem>>, vector<8x8xf32>
    tpu.vector_store %arg14[%c16_81, %c24_82], %251 {strides = array<i32>} : memref<32x32xf32, #tpu.memory_space<vmem>>, vector<8x8xf32>,
    %253 = vector.extract_strided_slice %30 {offsets = [24, 0], sizes = [8, 8], strides = [1, 1]} : vector<32x96xbf16> to vector<8x8xbf16>
    %254 = vector.extract_strided_slice %30 {offsets = [24, 32], sizes = [8, 8], strides = [1, 1]} : vector<32x96xbf16> to vector<8x8xbf16>
    %255 = vector.extract_strided_slice %30 {offsets = [24, 64], sizes = [8, 8], strides = [1, 1]} : vector<32x96xbf16> to vector<8x8xbf16>
    %cst_83 = arith.constant dense<0.000000e+00> : vector<8x8xf32>
    %256 = tpu.matmul %253, %254, %cst_83 {dimension_numbers = #tpu.dot_dimension_numbers<[1], [1], [0], [0], [0, 0, 1, 0], [], []>} : vector<8x8xbf16>, vector<8x8xbf16>, vector<8x8xf32> -> vector<8x8xf32>
    %257 = arith.addf %256, %36 : vector<8x8xf32>
    %cst_84 = arith.constant dense<0xFF800000> : vector<8xf32>
    %258 = vector.multi_reduction <maximumf>, %257, %cst_84 [1] : vector<8x8xf32> to vector<8xf32>
    %259 = vector.shape_cast %258 : vector<8xf32> to vector<8x1xf32>
    %260 = vector.broadcast %259 : vector<8x1xf32> to vector<8x8xf32>
    %261 = arith.subf %257, %260 : vector<8x8xf32>
    %262 = math.exp %261 : vector<8x8xf32>
    %cst_85 = arith.constant dense<0.000000e+00> : vector<8xf32>
    %263 = vector.multi_reduction <add>, %262, %cst_85 [1] : vector<8x8xf32> to vector<8xf32>
    %264 = vector.shape_cast %263 : vector<8xf32> to vector<8x1xf32>
    %265 = tpu.reciprocal %264 : vector<8x1xf32> -> vector<8x1xf32>
    %266 = vector.broadcast %265 : vector<8x1xf32> to vector<8x8xf32>
    %267 = arith.mulf %262, %266 : vector<8x8xf32>
    %268 = arith.truncf %267 : vector<8x8xf32> to vector<8x8xbf16>
    %cst_86 = arith.constant dense<0.000000e+00> : vector<8x8xf32>
    %269 = tpu.matmul %268, %255, %cst_86 {dimension_numbers = #tpu.dot_dimension_numbers<[1], [0], [0], [1], [0, 0, 1, 1], [], []>} : vector<8x8xbf16>, vector<8x8xbf16>, vector<8x8xf32> -> vector<8x8xf32>
    %c24_87 = arith.constant 24 : index
    %c0_88 = arith.constant 0 : index
    %270 = vector.load %arg14[%c24_87, %c0_88] : memref<32x32xf32, #tpu.memory_space<vmem>>, vector<8x8xf32>
    tpu.vector_store %arg14[%c24_87, %c0_88], %269 {strides = array<i32>} : memref<32x32xf32, #tpu.memory_space<vmem>>, vector<8x8xf32>,
    %271 = vector.extract_strided_slice %30 {offsets = [24, 8], sizes = [8, 8], strides = [1, 1]} : vector<32x96xbf16> to vector<8x8xbf16>
    %272 = vector.extract_strided_slice %30 {offsets = [24, 40], sizes = [8, 8], strides = [1, 1]} : vector<32x96xbf16> to vector<8x8xbf16>
    %273 = vector.extract_strided_slice %30 {offsets = [24, 72], sizes = [8, 8], strides = [1, 1]} : vector<32x96xbf16> to vector<8x8xbf16>
    %cst_89 = arith.constant dense<0.000000e+00> : vector<8x8xf32>
    %274 = tpu.matmul %271, %272, %cst_89 {dimension_numbers = #tpu.dot_dimension_numbers<[1], [1], [0], [0], [0, 0, 1, 0], [], []>} : vector<8x8xbf16>, vector<8x8xbf16>, vector<8x8xf32> -> vector<8x8xf32>
    %275 = arith.addf %274, %36 : vector<8x8xf32>
    %cst_90 = arith.constant dense<0xFF800000> : vector<8xf32>
    %276 = vector.multi_reduction <maximumf>, %275, %cst_90 [1] : vector<8x8xf32> to vector<8xf32>
    %277 = vector.shape_cast %276 : vector<8xf32> to vector<8x1xf32>
    %278 = vector.broadcast %277 : vector<8x1xf32> to vector<8x8xf32>
    %279 = arith.subf %275, %278 : vector<8x8xf32>
    %280 = math.exp %279 : vector<8x8xf32>
    %cst_91 = arith.constant dense<0.000000e+00> : vector<8xf32>
    %281 = vector.multi_reduction <add>, %280, %cst_91 [1] : vector<8x8xf32> to vector<8xf32>
    %282 = vector.shape_cast %281 : vector<8xf32> to vector<8x1xf32>
    %283 = tpu.reciprocal %282 : vector<8x1xf32> -> vector<8x1xf32>
    %284 = vector.broadcast %283 : vector<8x1xf32> to vector<8x8xf32>
    %285 = arith.mulf %280, %284 : vector<8x8xf32>
    %286 = arith.truncf %285 : vector<8x8xf32> to vector<8x8xbf16>
    %cst_92 = arith.constant dense<0.000000e+00> : vector<8x8xf32>
    %287 = tpu.matmul %286, %273, %cst_92 {dimension_numbers = #tpu.dot_dimension_numbers<[1], [0], [0], [1], [0, 0, 1, 1], [], []>} : vector<8x8xbf16>, vector<8x8xbf16>, vector<8x8xf32> -> vector<8x8xf32>
    %c24_93 = arith.constant 24 : index
    %c8_94 = arith.constant 8 : index
    %288 = vector.load %arg14[%c24_93, %c8_94] : memref<32x32xf32, #tpu.memory_space<vmem>>, vector<8x8xf32>
    tpu.vector_store %arg14[%c24_93, %c8_94], %287 {strides = array<i32>} : memref<32x32xf32, #tpu.memory_space<vmem>>, vector<8x8xf32>,
    %289 = vector.extract_strided_slice %30 {offsets = [24, 16], sizes = [8, 8], strides = [1, 1]} : vector<32x96xbf16> to vector<8x8xbf16>
    %290 = vector.extract_strided_slice %30 {offsets = [24, 48], sizes = [8, 8], strides = [1, 1]} : vector<32x96xbf16> to vector<8x8xbf16>
    %291 = vector.extract_strided_slice %30 {offsets = [24, 80], sizes = [8, 8], strides = [1, 1]} : vector<32x96xbf16> to vector<8x8xbf16>
    %cst_95 = arith.constant dense<0.000000e+00> : vector<8x8xf32>
    %292 = tpu.matmul %289, %290, %cst_95 {dimension_numbers = #tpu.dot_dimension_numbers<[1], [1], [0], [0], [0, 0, 1, 0], [], []>} : vector<8x8xbf16>, vector<8x8xbf16>, vector<8x8xf32> -> vector<8x8xf32>
    %293 = arith.addf %292, %36 : vector<8x8xf32>
    %cst_96 = arith.constant dense<0xFF800000> : vector<8xf32>
    %294 = vector.multi_reduction <maximumf>, %293, %cst_96 [1] : vector<8x8xf32> to vector<8xf32>
    %295 = vector.shape_cast %294 : vector<8xf32> to vector<8x1xf32>
    %296 = vector.broadcast %295 : vector<8x1xf32> to vector<8x8xf32>
    %297 = arith.subf %293, %296 : vector<8x8xf32>
    %298 = math.exp %297 : vector<8x8xf32>
    %cst_97 = arith.constant dense<0.000000e+00> : vector<8xf32>
    %299 = vector.multi_reduction <add>, %298, %cst_97 [1] : vector<8x8xf32> to vector<8xf32>
    %300 = vector.shape_cast %299 : vector<8xf32> to vector<8x1xf32>
    %301 = tpu.reciprocal %300 : vector<8x1xf32> -> vector<8x1xf32>
    %302 = vector.broadcast %301 : vector<8x1xf32> to vector<8x8xf32>
    %303 = arith.mulf %298, %302 : vector<8x8xf32>
    %304 = arith.truncf %303 : vector<8x8xf32> to vector<8x8xbf16>
    %cst_98 = arith.constant dense<0.000000e+00> : vector<8x8xf32>
    %305 = tpu.matmul %304, %291, %cst_98 {dimension_numbers = #tpu.dot_dimension_numbers<[1], [0], [0], [1], [0, 0, 1, 1], [], []>} : vector<8x8xbf16>, vector<8x8xbf16>, vector<8x8xf32> -> vector<8x8xf32>
    %c24_99 = arith.constant 24 : index
    %c16_100 = arith.constant 16 : index
    %306 = vector.load %arg14[%c24_99, %c16_100] : memref<32x32xf32, #tpu.memory_space<vmem>>, vector<8x8xf32>
    tpu.vector_store %arg14[%c24_99, %c16_100], %305 {strides = array<i32>} : memref<32x32xf32, #tpu.memory_space<vmem>>, vector<8x8xf32>,
    %307 = vector.extract_strided_slice %30 {offsets = [24, 24], sizes = [8, 8], strides = [1, 1]} : vector<32x96xbf16> to vector<8x8xbf16>
    %308 = vector.extract_strided_slice %30 {offsets = [24, 56], sizes = [8, 8], strides = [1, 1]} : vector<32x96xbf16> to vector<8x8xbf16>
    %309 = vector.extract_strided_slice %30 {offsets = [24, 88], sizes = [8, 8], strides = [1, 1]} : vector<32x96xbf16> to vector<8x8xbf16>
    %cst_101 = arith.constant dense<0.000000e+00> : vector<8x8xf32>
    %310 = tpu.matmul %307, %308, %cst_101 {dimension_numbers = #tpu.dot_dimension_numbers<[1], [1], [0], [0], [0, 0, 1, 0], [], []>} : vector<8x8xbf16>, vector<8x8xbf16>, vector<8x8xf32> -> vector<8x8xf32>
    %311 = arith.addf %310, %36 : vector<8x8xf32>
    %cst_102 = arith.constant dense<0xFF800000> : vector<8xf32>
    %312 = vector.multi_reduction <maximumf>, %311, %cst_102 [1] : vector<8x8xf32> to vector<8xf32>
    %313 = vector.shape_cast %312 : vector<8xf32> to vector<8x1xf32>
    %314 = vector.broadcast %313 : vector<8x1xf32> to vector<8x8xf32>
    %315 = arith.subf %311, %314 : vector<8x8xf32>
    %316 = math.exp %315 : vector<8x8xf32>
    %cst_103 = arith.constant dense<0.000000e+00> : vector<8xf32>
    %317 = vector.multi_reduction <add>, %316, %cst_103 [1] : vector<8x8xf32> to vector<8xf32>
    %318 = vector.shape_cast %317 : vector<8xf32> to vector<8x1xf32>
    %319 = tpu.reciprocal %318 : vector<8x1xf32> -> vector<8x1xf32>
    %320 = vector.broadcast %319 : vector<8x1xf32> to vector<8x8xf32>
    %321 = arith.mulf %316, %320 : vector<8x8xf32>
    %322 = arith.truncf %321 : vector<8x8xf32> to vector<8x8xbf16>
    %cst_104 = arith.constant dense<0.000000e+00> : vector<8x8xf32>
    %323 = tpu.matmul %322, %309, %cst_104 {dimension_numbers = #tpu.dot_dimension_numbers<[1], [0], [0], [1], [0, 0, 1, 1], [], []>} : vector<8x8xbf16>, vector<8x8xbf16>, vector<8x8xf32> -> vector<8x8xf32>
    %c24_105 = arith.constant 24 : index
    %c24_106 = arith.constant 24 : index
    %324 = vector.load %arg14[%c24_105, %c24_106] : memref<32x32xf32, #tpu.memory_space<vmem>>, vector<8x8xf32>
    tpu.vector_store %arg14[%c24_105, %c24_106], %323 {strides = array<i32>} : memref<32x32xf32, #tpu.memory_space<vmem>>, vector<8x8xf32>,
    %c0_107 = arith.constant 0 : index
    %c0_108 = arith.constant 0 : index
    %325 = vector.load %arg14[%c0_107, %c0_108] : memref<32x32xf32, #tpu.memory_space<vmem>>, vector<32x32xf32>
    %326 = arith.truncf %325 : vector<32x32xf32> to vector<32x32xbf16>
    %c0_109 = arith.constant 0 : index
    %c0_110 = arith.constant 0 : index
    %327 = vector.load %arg5[%c0_109, %c0_110] : memref<32x32xbf16, #tpu.memory_space<vmem>>, vector<32x32xbf16>
    %cst_111 = arith.constant dense<0.000000e+00> : vector<32x32xf32>
    %328 = tpu.matmul %326, %327, %cst_111 {dimension_numbers = #tpu.dot_dimension_numbers<[1], [0], [0], [1], [0, 0, 1, 1], [], []>} : vector<32x32xbf16>, vector<32x32xbf16>, vector<32x32xf32> -> vector<32x32xf32>
    %c0_112 = arith.constant 0 : index
    %c0_113 = arith.constant 0 : index
    %329 = vector.load %arg6[%c0_112, %c0_113] : memref<1x32xf32, #tpu.memory_space<vmem>>, vector<1x32xf32>
    %330 = vector.broadcast %329 : vector<1x32xf32> to vector<32x32xf32>
    %331 = arith.addf %328, %330 : vector<32x32xf32>
    %332 = arith.addf %331, %0 : vector<32x32xf32>
    %c0_114 = arith.constant 0 : index
    %c0_115 = arith.constant 0 : index
    %333 = vector.load %arg7[%c0_114, %c0_115] : memref<1x32xf32, #tpu.memory_space<vmem>>, vector<1x32xf32>
    %c0_116 = arith.constant 0 : index
    %c0_117 = arith.constant 0 : index
    %334 = vector.load %arg8[%c0_116, %c0_117] : memref<1x32xf32, #tpu.memory_space<vmem>>, vector<1x32xf32>
    %cst_118 = arith.constant dense<0.000000e+00> : vector<32xf32>
    %335 = vector.multi_reduction <add>, %332, %cst_118 [1] : vector<32x32xf32> to vector<32xf32>
    %336 = vector.shape_cast %335 : vector<32xf32> to vector<32x1xf32>
    %cst_119 = arith.constant 3.200000e+01 : f32
    %337 = vector.broadcast %cst_119 : f32 to vector<32x1xf32>
    %338 = arith.divf %336, %337 : vector<32x1xf32>
    %339 = vector.broadcast %338 : vector<32x1xf32> to vector<32x32xf32>
    %340 = arith.subf %332, %339 : vector<32x32xf32>
    %341 = vector.broadcast %338 : vector<32x1xf32> to vector<32x32xf32>
    %342 = arith.subf %332, %341 : vector<32x32xf32>
    %343 = arith.mulf %340, %342 : vector<32x32xf32>
    %cst_120 = arith.constant dense<0.000000e+00> : vector<32xf32>
    %344 = vector.multi_reduction <add>, %343, %cst_120 [1] : vector<32x32xf32> to vector<32xf32>
    %345 = vector.shape_cast %344 : vector<32xf32> to vector<32x1xf32>
    %cst_121 = arith.constant 3.200000e+01 : f32
    %346 = vector.broadcast %cst_121 : f32 to vector<32x1xf32>
    %347 = arith.divf %345, %346 : vector<32x1xf32>
    %348 = vector.broadcast %338 : vector<32x1xf32> to vector<32x32xf32>
    %349 = arith.subf %332, %348 : vector<32x32xf32>
    %cst_122 = arith.constant 9.99999974E-6 : f32
    %350 = vector.broadcast %cst_122 : f32 to vector<32x1xf32>
    %351 = arith.addf %347, %350 : vector<32x1xf32>
    %352 = math.rsqrt %351 : vector<32x1xf32>
    %353 = vector.broadcast %352 : vector<32x1xf32> to vector<32x32xf32>
    %354 = arith.mulf %349, %353 : vector<32x32xf32>
    %355 = vector.broadcast %333 : vector<1x32xf32> to vector<32x32xf32>
    %356 = arith.mulf %354, %355 : vector<32x32xf32>
    %357 = vector.broadcast %334 : vector<1x32xf32> to vector<32x32xf32>
    %358 = arith.addf %356, %357 : vector<32x32xf32>
    %359 = arith.truncf %358 : vector<32x32xf32> to vector<32x32xbf16>
    %c0_123 = arith.constant 0 : index
    %c0_124 = arith.constant 0 : index
    %360 = vector.load %arg9[%c0_123, %c0_124] : memref<32x128xbf16, #tpu.memory_space<vmem>>, vector<32x128xbf16>
    %cst_125 = arith.constant dense<0.000000e+00> : vector<32x128xf32>
    %361 = tpu.matmul %359, %360, %cst_125 {dimension_numbers = #tpu.dot_dimension_numbers<[1], [0], [0], [1], [0, 0, 1, 1], [], []>} : vector<32x32xbf16>, vector<32x128xbf16>, vector<32x128xf32> -> vector<32x128xf32>
    %c0_126 = arith.constant 0 : index
    %c0_127 = arith.constant 0 : index
    %362 = vector.load %arg10[%c0_126, %c0_127] : memref<1x128xf32, #tpu.memory_space<vmem>>, vector<1x128xf32>
    %363 = vector.broadcast %362 : vector<1x128xf32> to vector<32x128xf32>
    %364 = arith.addf %361, %363 : vector<32x128xf32>
    %cst_128 = arith.constant 5.000000e-01 : f32
    %365 = vector.broadcast %cst_128 : f32 to vector<32x128xf32>
    %366 = arith.mulf %365, %364 : vector<32x128xf32>
    %cst_129 = arith.constant 4.471500e-02 : f32
    %367 = vector.broadcast %cst_129 : f32 to vector<32x128xf32>
    %368 = arith.mulf %367, %364 : vector<32x128xf32>
    %369 = arith.mulf %368, %364 : vector<32x128xf32>
    %370 = arith.mulf %369, %364 : vector<32x128xf32>
    %371 = arith.addf %364, %370 : vector<32x128xf32>
    %cst_130 = arith.constant 0.797884583 : f32
    %372 = vector.broadcast %cst_130 : f32 to vector<32x128xf32>
    %373 = arith.mulf %372, %371 : vector<32x128xf32>
    %374 = math.tanh %373 : vector<32x128xf32>
    %cst_131 = arith.constant 1.000000e+00 : f32
    %375 = vector.broadcast %cst_131 : f32 to vector<32x128xf32>
    %376 = arith.addf %375, %374 : vector<32x128xf32>
    %377 = arith.mulf %366, %376 : vector<32x128xf32>
    %378 = arith.truncf %377 : vector<32x128xf32> to vector<32x128xbf16>
    %c0_132 = arith.constant 0 : index
    %c0_133 = arith.constant 0 : index
    %379 = vector.load %arg11[%c0_132, %c0_133] : memref<128x32xbf16, #tpu.memory_space<vmem>>, vector<128x32xbf16>
    %cst_134 = arith.constant dense<0.000000e+00> : vector<32x32xf32>
    %380 = tpu.matmul %378, %379, %cst_134 {dimension_numbers = #tpu.dot_dimension_numbers<[1], [0], [0], [1], [0, 0, 1, 1], [], []>} : vector<32x128xbf16>, vector<128x32xbf16>, vector<32x32xf32> -> vector<32x32xf32>
    %c0_135 = arith.constant 0 : index
    %c0_136 = arith.constant 0 : index
    %381 = vector.load %arg12[%c0_135, %c0_136] : memref<1x32xf32, #tpu.memory_space<vmem>>, vector<1x32xf32>
    %382 = vector.broadcast %381 : vector<1x32xf32> to vector<32x32xf32>
    %383 = arith.addf %380, %382 : vector<32x32xf32>
    %384 = arith.addf %383, %332 : vector<32x32xf32>
    %c0_137 = arith.constant 0 : index
    %c0_138 = arith.constant 0 : index
    %385 = vector.load %arg13[%c0_137, %c0_138] : memref<32x32xf32, #tpu.memory_space<vmem>>, vector<32x32xf32>
    tpu.vector_store %arg13[%c0_137, %c0_138], %384 {strides = array<i32>} : memref<32x32xf32, #tpu.memory_space<vmem>>, vector<32x32xf32>,
    return
  }
  func.func @transform_0(%arg0: i32) -> (i32, i32) {
    %c0_i32 = arith.constant 0 : i32
    %c0_i32_0 = arith.constant 0 : i32
    return %arg0, %c0_i32 : i32, i32
  }
  func.func @transform_1(%arg0: i32) -> (i32, i32) {
    %c0_i32 = arith.constant 0 : i32
    %c0_i32_0 = arith.constant 0 : i32
    %c0_i32_1 = arith.constant 0 : i32
    return %c0_i32, %c0_i32_0 : i32, i32
  }
  func.func @transform_2(%arg0: i32) -> (i32, i32) {
    %c0_i32 = arith.constant 0 : i32
    %c0_i32_0 = arith.constant 0 : i32
    %c0_i32_1 = arith.constant 0 : i32
    return %c0_i32, %c0_i32_0 : i32, i32
  }
  func.func @transform_3(%arg0: i32) -> (i32, i32) {
    %c0_i32 = arith.constant 0 : i32
    %c0_i32_0 = arith.constant 0 : i32
    %c0_i32_1 = arith.constant 0 : i32
    return %c0_i32, %c0_i32_0 : i32, i32
  }
  func.func @transform_4(%arg0: i32) -> (i32, i32) {
    %c0_i32 = arith.constant 0 : i32
    %c0_i32_0 = arith.constant 0 : i32
    %c0_i32_1 = arith.constant 0 : i32
    return %c0_i32, %c0_i32_0 : i32, i32
  }
  func.func @transform_5(%arg0: i32) -> (i32, i32) {
    %c0_i32 = arith.constant 0 : i32
    %c0_i32_0 = arith.constant 0 : i32
    %c0_i32_1 = arith.constant 0 : i32
    return %c0_i32, %c0_i32_0 : i32, i32
  }
  func.func @transform_6(%arg0: i32) -> (i32, i32) {
    %c0_i32 = arith.constant 0 : i32
    %c0_i32_0 = arith.constant 0 : i32
    %c0_i32_1 = arith.constant 0 : i32
    return %c0_i32, %c0_i32_0 : i32, i32
  }
  func.func @transform_7(%arg0: i32) -> (i32, i32) {
    %c0_i32 = arith.constant 0 : i32
    %c0_i32_0 = arith.constant 0 : i32
    %c0_i32_1 = arith.constant 0 : i32
    return %c0_i32, %c0_i32_0 : i32, i32
  }
  func.func @transform_8(%arg0: i32) -> (i32, i32) {
    %c0_i32 = arith.constant 0 : i32
    %c0_i32_0 = arith.constant 0 : i32
    %c0_i32_1 = arith.constant 0 : i32
    return %c0_i32, %c0_i32_0 : i32, i32
  }
  func.func @transform_9(%arg0: i32) -> (i32, i32) {
    %c0_i32 = arith.constant 0 : i32
    %c0_i32_0 = arith.constant 0 : i32
    %c0_i32_1 = arith.constant 0 : i32
    return %c0_i32, %c0_i32_0 : i32, i32
  }
  func.func @transform_10(%arg0: i32) -> (i32, i32) {
    %c0_i32 = arith.constant 0 : i32
    %c0_i32_0 = arith.constant 0 : i32
    %c0_i32_1 = arith.constant 0 : i32
    return %c0_i32, %c0_i32_0 : i32, i32
  }
  func.func @transform_11(%arg0: i32) -> (i32, i32) {
    %c0_i32 = arith.constant 0 : i32
    %c0_i32_0 = arith.constant 0 : i32
    %c0_i32_1 = arith.constant 0 : i32
    return %c0_i32, %c0_i32_0 : i32, i32
  }
  func.func @transform_12(%arg0: i32) -> (i32, i32) {
    %c0_i32 = arith.constant 0 : i32
    %c0_i32_0 = arith.constant 0 : i32
    return %arg0, %c0_i32 : i32, i32
  }
}

</mosaic_0001>

<llo_original>
// kernel: tpu_custom_call.1
$region0: #{tpu_custom_call.1}
  #allocation0 [shape = 'u32[]', space=smem, size = 0x4, offset = 0x4, fixed_abs, tag = 'smem constant byte address 0x4 - core index']
  #allocation1 [shape = 'u32[144,128]{1,0:T(1,128)}', space=vmem, size = 0x12000, scoped, tag = 'internal scratch']
  #allocation2 [shape = 'f32[32,32]{1,0:T(8,128)}', space=vmem, size = 0x4000, scoped, tag = 'scratch operand']
  %s0 = inlined_call_operand.vmem [shape: f32[64,32], index: 0, kind: input, shape index: {}]
  %s1 = inlined_call_operand.vmem [shape: f32[1,32], index: 1, kind: input, shape index: {}]
  %s2 = inlined_call_operand.vmem [shape: f32[1,32], index: 2, kind: input, shape index: {}]
  %s3 = inlined_call_operand.vmem [shape: bf16[32,96], index: 3, kind: input, shape index: {}]
  %s4 = inlined_call_operand.vmem [shape: bf16[32,32], index: 4, kind: input, shape index: {}]
  %s5 = inlined_call_operand.vmem [shape: f32[1,32], index: 5, kind: input, shape index: {}]
  %s6 = inlined_call_operand.vmem [shape: f32[1,32], index: 6, kind: input, shape index: {}]
  %s7 = inlined_call_operand.vmem [shape: f32[1,32], index: 7, kind: input, shape index: {}]
  %s8 = inlined_call_operand.vmem [shape: bf16[32,128], index: 8, kind: input, shape index: {}]
  %s9 = inlined_call_operand.vmem [shape: f32[1,128], index: 9, kind: input, shape index: {}]
  %s10 = inlined_call_operand.vmem [shape: bf16[128,32], index: 10, kind: input, shape index: {}]
  %s11 = inlined_call_operand.vmem [shape: f32[1,32], index: 11, kind: input, shape index: {}]
  %s12 = inlined_call_operand.vmem [shape: f32[64,32], index: 12, kind: output, shape index: {}]
  %s13 = sld [smem:[#allocation0]]
  $region81: #{tpu_custom_call.1} parent=0
    _
  %s15 = ssub.s32 1, %s13
  %s16 = scalar_select 0, %s15, %s13
  loop: start=0, step=1, limit=4
  $region2: #{tpu_custom_call.1} parent=0 // loop_pre_header
    _
  $region3: #{tpu_custom_call.1} parent=0 // loop_header
    %s18 = sphi 0, %s22
    %p19 = scmp.ge.s32.totalorder %s18, 4
    %s28 = sphi 0, %s30
    %s31 = sphi 0, %s28
    %s32 = sphi 0, %s31
    %s48 = sphi 0, %s32
    %s52 = sphi 0, %s52
    %s54 = sphi 0, %s52
    %s55 = sphi 0, %s54
    %s69 = sphi 0, %s55
    %s73 = sphi 0, %s73
    %s75 = sphi 0, %s73
    %s76 = sphi 0, %s75
    %s90 = sphi 0, %s76
    %s94 = sphi 0, %s94
    %s96 = sphi 0, %s94
    %s97 = sphi 0, %s96
    %s111 = sphi 0, %s97
    %s115 = sphi 0, %s115
    %s117 = sphi 0, %s115
    %s118 = sphi 0, %s117
    %s132 = sphi 0, %s118
    %s136 = sphi 0, %s136
    %s138 = sphi 0, %s136
    %s139 = sphi 0, %s138
    %s153 = sphi 0, %s139
    %s157 = sphi 0, %s157
    %s159 = sphi 0, %s157
    %s160 = sphi 0, %s159
    %s174 = sphi 0, %s160
    %s178 = sphi 0, %s178
    %s180 = sphi 0, %s178
    %s181 = sphi 0, %s180
    %s195 = sphi 0, %s181
    %s199 = sphi 0, %s199
    %s201 = sphi 0, %s199
    %s202 = sphi 0, %s201
    %s216 = sphi 0, %s202
    %s220 = sphi 0, %s220
    %s222 = sphi 0, %s220
    %s223 = sphi 0, %s222
    %s237 = sphi 0, %s223
    %s241 = sphi 0, %s241
    %s243 = sphi 0, %s241
    %s244 = sphi 0, %s243
    %s258 = sphi 0, %s244
    %s262 = sphi 0, %s262
    %s264 = sphi 0, %s262
    %s265 = sphi 0, %s264
    %s279 = sphi 0, %s265
    %s285 = sphi 0, %s287
    %s288 = sphi 0, %s285
    %s289 = sphi 0, %s288
    %s305 = sphi 0, %s289
  $region4: #{tpu_custom_call.1} parent=0 // loop_header_branch
    %21 = sbr.rel (%p19) target = $region8
  $region5: #{tpu_custom_call.1} parent=0 // loop_body
    %s23 = ssub.s32 %s18, 1
    %s24 = ssub.s32 %s18, 2
    %s25 = sadd.s32 %s18, 1
    %s26 = ssub.s32 %s18, %s25
    %p27 = scmp.eq.s32.totalorder %s26, 0
    %s29 = sadd.s32 %s28, 1
    %s30 = scalar_select %p27, %s28, %s29
    %p33 = pneg %p27
    %p34 = scmp.eq.s32.totalorder %s18, 1
    %p35 = por %p33, %p34
    %p36 = scmp.ne.s32.totalorder %s28, %s31
    %p37 = scmp.eq.s32.totalorder %s18, 0
    %p38 = por %p36, %p37
    %p39 = scmp.ne.s32.totalorder %s28, %s31
    %p40 = scmp.eq.s32.totalorder %s23, 1
    %p41 = por %p39, %p40
    %p42 = scmp.ne.s32.totalorder %s31, %s32
    %p43 = scmp.eq.s32.totalorder %s23, 0
    %p44 = por %p42, %p43
    %p45 = scmp.ne.s32.totalorder %s31, %s32
    %p46 = scmp.eq.s32.totalorder %s24, 1
    %p47 = por %p45, %p46
    %p49 = scmp.ne.s32.totalorder %s32, %s48
    %p50 = scmp.eq.s32.totalorder %s24, 0
    %p51 = por %p49, %p50
    %s53 = sadd.s32 %s52, 1
    %p56 = scmp.eq.s32.totalorder %s18, 1
    %p57 = scmp.ne.s32.totalorder %s52, %s54
    %p58 = scmp.eq.s32.totalorder %s18, 0
    %p59 = por %p57, %p58
    %p60 = scmp.ne.s32.totalorder %s52, %s54
    %p61 = scmp.eq.s32.totalorder %s23, 1
    %p62 = por %p60, %p61
    %p63 = scmp.ne.s32.totalorder %s54, %s55
    %p64 = scmp.eq.s32.totalorder %s23, 0
    %p65 = por %p63, %p64
    %p66 = scmp.ne.s32.totalorder %s54, %s55
    %p67 = scmp.eq.s32.totalorder %s24, 1
    %p68 = por %p66, %p67
    %p70 = scmp.ne.s32.totalorder %s55, %s69
    %p71 = scmp.eq.s32.totalorder %s24, 0
    %p72 = por %p70, %p71
    %s74 = sadd.s32 %s73, 1
    %p77 = scmp.eq.s32.totalorder %s18, 1
    %p78 = scmp.ne.s32.totalorder %s73, %s75
    %p79 = scmp.eq.s32.totalorder %s18, 0
    %p80 = por %p78, %p79
    %p81 = scmp.ne.s32.totalorder %s73, %s75
    %p82 = scmp.eq.s32.totalorder %s23, 1
    %p83 = por %p81, %p82
    %p84 = scmp.ne.s32.totalorder %s75, %s76
    %p85 = scmp.eq.s32.totalorder %s23, 0
    %p86 = por %p84, %p85
    %p87 = scmp.ne.s32.totalorder %s75, %s76
    %p88 = scmp.eq.s32.totalorder %s24, 1
    %p89 = por %p87, %p88
    %p91 = scmp.ne.s32.totalorder %s76, %s90
    %p92 = scmp.eq.s32.totalorder %s24, 0
    %p93 = por %p91, %p92
    %s95 = sadd.s32 %s94, 1
    %p98 = scmp.eq.s32.totalorder %s18, 1
    %p99 = scmp.ne.s32.totalorder %s94, %s96
    %p100 = scmp.eq.s32.totalorder %s18, 0
    %p101 = por %p99, %p100
    %p102 = scmp.ne.s32.totalorder %s94, %s96
    %p103 = scmp.eq.s32.totalorder %s23, 1
    %p104 = por %p102, %p103
    %p105 = scmp.ne.s32.totalorder %s96, %s97
    %p106 = scmp.eq.s32.totalorder %s23, 0
    %p107 = por %p105, %p106
    %p108 = scmp.ne.s32.totalorder %s96, %s97
    %p109 = scmp.eq.s32.totalorder %s24, 1
    %p110 = por %p108, %p109
    %p112 = scmp.ne.s32.totalorder %s97, %s111
    %p113 = scmp.eq.s32.totalorder %s24, 0
    %p114 = por %p112, %p113
    %s116 = sadd.s32 %s115, 1
    %p119 = scmp.eq.s32.totalorder %s18, 1
    %p120 = scmp.ne.s32.totalorder %s115, %s117
    %p121 = scmp.eq.s32.totalorder %s18, 0
    %p122 = por %p120, %p121
    %p123 = scmp.ne.s32.totalorder %s115, %s117
    %p124 = scmp.eq.s32.totalorder %s23, 1
    %p125 = por %p123, %p124
    %p126 = scmp.ne.s32.totalorder %s117, %s118
    %p127 = scmp.eq.s32.totalorder %s23, 0
    %p128 = por %p126, %p127
    %p129 = scmp.ne.s32.totalorder %s117, %s118
    %p130 = scmp.eq.s32.totalorder %s24, 1
    %p131 = por %p129, %p130
    %p133 = scmp.ne.s32.totalorder %s118, %s132
    %p134 = scmp.eq.s32.totalorder %s24, 0
    %p135 = por %p133, %p134
    %s137 = sadd.s32 %s136, 1
    %p140 = scmp.eq.s32.totalorder %s18, 1
    %p141 = scmp.ne.s32.totalorder %s136, %s138
    %p142 = scmp.eq.s32.totalorder %s18, 0
    %p143 = por %p141, %p142
    %p144 = scmp.ne.s32.totalorder %s136, %s138
    %p145 = scmp.eq.s32.totalorder %s23, 1
    %p146 = por %p144, %p145
    %p147 = scmp.ne.s32.totalorder %s138, %s139
    %p148 = scmp.eq.s32.totalorder %s23, 0
    %p149 = por %p147, %p148
    %p150 = scmp.ne.s32.totalorder %s138, %s139
    %p151 = scmp.eq.s32.totalorder %s24, 1
    %p152 = por %p150, %p151
    %p154 = scmp.ne.s32.totalorder %s139, %s153
    %p155 = scmp.eq.s32.totalorder %s24, 0
    %p156 = por %p154, %p155
    %s158 = sadd.s32 %s157, 1
    %p161 = scmp.eq.s32.totalorder %s18, 1
    %p162 = scmp.ne.s32.totalorder %s157, %s159
    %p163 = scmp.eq.s32.totalorder %s18, 0
    %p164 = por %p162, %p163
    %p165 = scmp.ne.s32.totalorder %s157, %s159
    %p166 = scmp.eq.s32.totalorder %s23, 1
    %p167 = por %p165, %p166
    %p168 = scmp.ne.s32.totalorder %s159, %s160
    %p169 = scmp.eq.s32.totalorder %s23, 0
    %p170 = por %p168, %p169
    %p171 = scmp.ne.s32.totalorder %s159, %s160
    %p172 = scmp.eq.s32.totalorder %s24, 1
    %p173 = por %p171, %p172
    %p175 = scmp.ne.s32.totalorder %s160, %s174
    %p176 = scmp.eq.s32.totalorder %s24, 0
    %p177 = por %p175, %p176
    %s179 = sadd.s32 %s178, 1
    %p182 = scmp.eq.s32.totalorder %s18, 1
    %p183 = scmp.ne.s32.totalorder %s178, %s180
    %p184 = scmp.eq.s32.totalorder %s18, 0
    %p185 = por %p183, %p184
    %p186 = scmp.ne.s32.totalorder %s178, %s180
    %p187 = scmp.eq.s32.totalorder %s23, 1
    %p188 = por %p186, %p187
    %p189 = scmp.ne.s32.totalorder %s180, %s181
    %p190 = scmp.eq.s32.totalorder %s23, 0
    %p191 = por %p189, %p190
    %p192 = scmp.ne.s32.totalorder %s180, %s181
    %p193 = scmp.eq.s32.totalorder %s24, 1
    %p194 = por %p192, %p193
    %p196 = scmp.ne.s32.totalorder %s181, %s195
    %p197 = scmp.eq.s32.totalorder %s24, 0
    %p198 = por %p196, %p197
    %s200 = sadd.s32 %s199, 1
    %p203 = scmp.eq.s32.totalorder %s18, 1
    %p204 = scmp.ne.s32.totalorder %s199, %s201
    %p205 = scmp.eq.s32.totalorder %s18, 0
    %p206 = por %p204, %p205
    %p207 = scmp.ne.s32.totalorder %s199, %s201
    %p208 = scmp.eq.s32.totalorder %s23, 1
    %p209 = por %p207, %p208
    %p210 = scmp.ne.s32.totalorder %s201, %s202
    %p211 = scmp.eq.s32.totalorder %s23, 0
    %p212 = por %p210, %p211
    %p213 = scmp.ne.s32.totalorder %s201, %s202
    %p214 = scmp.eq.s32.totalorder %s24, 1
    %p215 = por %p213, %p214
    %p217 = scmp.ne.s32.totalorder %s202, %s216
    %p218 = scmp.eq.s32.totalorder %s24, 0
    %p219 = por %p217, %p218
    %s221 = sadd.s32 %s220, 1
    %p224 = scmp.eq.s32.totalorder %s18, 1
    %p225 = scmp.ne.s32.totalorder %s220, %s222
    %p226 = scmp.eq.s32.totalorder %s18, 0
    %p227 = por %p225, %p226
    %p228 = scmp.ne.s32.totalorder %s220, %s222
    %p229 = scmp.eq.s32.totalorder %s23, 1
    %p230 = por %p228, %p229
    %p231 = scmp.ne.s32.totalorder %s222, %s223
    %p232 = scmp.eq.s32.totalorder %s23, 0
    %p233 = por %p231, %p232
    %p234 = scmp.ne.s32.totalorder %s222, %s223
    %p235 = scmp.eq.s32.totalorder %s24, 1
    %p236 = por %p234, %p235
    %p238 = scmp.ne.s32.totalorder %s223, %s237
    %p239 = scmp.eq.s32.totalorder %s24, 0
    %p240 = por %p238, %p239
    %s242 = sadd.s32 %s241, 1
    %p245 = scmp.eq.s32.totalorder %s18, 1
    %p246 = scmp.ne.s32.totalorder %s241, %s243
    %p247 = scmp.eq.s32.totalorder %s18, 0
    %p248 = por %p246, %p247
    %p249 = scmp.ne.s32.totalorder %s241, %s243
    %p250 = scmp.eq.s32.totalorder %s23, 1
    %p251 = por %p249, %p250
    %p252 = scmp.ne.s32.totalorder %s243, %s244
    %p253 = scmp.eq.s32.totalorder %s23, 0
    %p254 = por %p252, %p253
    %p255 = scmp.ne.s32.totalorder %s243, %s244
    %p256 = scmp.eq.s32.totalorder %s24, 1
    %p257 = por %p255, %p256
    %p259 = scmp.ne.s32.totalorder %s244, %s258
    %p260 = scmp.eq.s32.totalorder %s24, 0
    %p261 = por %p259, %p260
    %s263 = sadd.s32 %s262, 1
    %p266 = scmp.eq.s32.totalorder %s18, 1
    %p267 = scmp.ne.s32.totalorder %s262, %s264
    %p268 = scmp.eq.s32.totalorder %s18, 0
    %p269 = por %p267, %p268
    %p270 = scmp.ne.s32.totalorder %s262, %s264
    %p271 = scmp.eq.s32.totalorder %s23, 1
    %p272 = por %p270, %p271
    %p273 = scmp.ne.s32.totalorder %s264, %s265
    %p274 = scmp.eq.s32.totalorder %s23, 0
    %p275 = por %p273, %p274
    %p276 = scmp.ne.s32.totalorder %s264, %s265
    %p277 = scmp.eq.s32.totalorder %s24, 1
    %p278 = por %p276, %p277
    %p280 = scmp.ne.s32.totalorder %s265, %s279
    %p281 = scmp.eq.s32.totalorder %s24, 0
    %p282 = por %p280, %p281
    %s283 = ssub.s32 %s18, %s25
    %p284 = scmp.eq.s32.totalorder %s283, 0
    %s286 = sadd.s32 %s285, 1
    %s287 = scalar_select %p284, %s285, %s286
    %p290 = pneg %p284
    %p291 = scmp.eq.s32.totalorder %s18, 1
    %p292 = por %p290, %p291
    %p293 = scmp.ne.s32.totalorder %s285, %s288
    %p294 = scmp.eq.s32.totalorder %s18, 0
    %p295 = por %p293, %p294
    %p296 = scmp.ne.s32.totalorder %s285, %s288
    %p297 = scmp.eq.s32.totalorder %s23, 1
    %p298 = por %p296, %p297
    %p299 = scmp.ne.s32.totalorder %s288, %s289
    %p300 = scmp.eq.s32.totalorder %s23, 0
    %p301 = por %p299, %p300
    %p302 = scmp.ne.s32.totalorder %s288, %s289
    %p303 = scmp.eq.s32.totalorder %s24, 1
    %p304 = por %p302, %p303
    %p306 = scmp.ne.s32.totalorder %s289, %s305
    %p307 = scmp.eq.s32.totalorder %s24, 0
    %p308 = por %p306, %p307
    %p309 = scmp.le.s32.totalorder 1, %s18
    %p310 = scmp.lt.s32.totalorder %s18, 3
    %p311 = pnand %p309, %p310
    %p312 = pneg %p311
    // Predicated region
    $region9: #{tpu_custom_call.1} parent=5 // pred_check
      _
    $region10: #{tpu_custom_call.1} parent=5 // pred_check_branch
      %314 = sbr.rel (%p311) target = $region12
    $region11: #{tpu_custom_call.1} parent=5 // pred_region
      %s315 = ssub.s32 %s18, 1
      // Predicated region
      $region13: #{tpu_custom_call.1} parent=11 // pred_check
        %p316 = pneg %p65
      $region14: #{tpu_custom_call.1} parent=11 // pred_check_branch
        %318 = sbr.rel (%p316) target = $region16
      $region15: #{tpu_custom_call.1} parent=11 // pred_region
        _
      $region16: #{tpu_custom_call.1} parent=11 // pred_fallthru
        _
      // Predicated region
      $region17: #{tpu_custom_call.1} parent=11 // pred_check
        %p319 = pneg %p86
      $region18: #{tpu_custom_call.1} parent=11 // pred_check_branch
        %321 = sbr.rel (%p319) target = $region20
      $region19: #{tpu_custom_call.1} parent=11 // pred_region
        _
      $region20: #{tpu_custom_call.1} parent=11 // pred_fallthru
        _
      // Predicated region
      $region21: #{tpu_custom_call.1} parent=11 // pred_check
        %p322 = pneg %p107
      $region22: #{tpu_custom_call.1} parent=11 // pred_check_branch
        %324 = sbr.rel (%p322) target = $region24
      $region23: #{tpu_custom_call.1} parent=11 // pred_region
        _
      $region24: #{tpu_custom_call.1} parent=11 // pred_fallthru
        _
      // Predicated region
      $region25: #{tpu_custom_call.1} parent=11 // pred_check
        %p325 = pneg %p128
      $region26: #{tpu_custom_call.1} parent=11 // pred_check_branch
        %327 = sbr.rel (%p325) target = $region28
      $region27: #{tpu_custom_call.1} parent=11 // pred_region
        _
      $region28: #{tpu_custom_call.1} parent=11 // pred_fallthru
        _
      // Predicated region
      $region29: #{tpu_custom_call.1} parent=11 // pred_check
        %p328 = pneg %p149
      $region30: #{tpu_custom_call.1} parent=11 // pred_check_branch
        %330 = sbr.rel (%p328) target = $region32
      $region31: #{tpu_custom_call.1} parent=11 // pred_region
        _
      $region32: #{tpu_custom_call.1} parent=11 // pred_fallthru
        _
      // Predicated region
      $region33: #{tpu_custom_call.1} parent=11 // pred_check
        %p331 = pneg %p170
      $region34: #{tpu_custom_call.1} parent=11 // pred_check_branch
        %333 = sbr.rel (%p331) target = $region36
      $region35: #{tpu_custom_call.1} parent=11 // pred_region
        _
      $region36: #{tpu_custom_call.1} parent=11 // pred_fallthru
        _
      // Predicated region
      $region37: #{tpu_custom_call.1} parent=11 // pred_check
        %p334 = pneg %p191
      $region38: #{tpu_custom_call.1} parent=11 // pred_check_branch
        %336 = sbr.rel (%p334) target = $region40
      $region39: #{tpu_custom_call.1} parent=11 // pred_region
        _
      $region40: #{tpu_custom_call.1} parent=11 // pred_fallthru
        _
      // Predicated region
      $region41: #{tpu_custom_call.1} parent=11 // pred_check
        %p337 = pneg %p212
      $region42: #{tpu_custom_call.1} parent=11 // pred_check_branch
        %339 = sbr.rel (%p337) target = $region44
      $region43: #{tpu_custom_call.1} parent=11 // pred_region
        _
      $region44: #{tpu_custom_call.1} parent=11 // pred_fallthru
        _
      // Predicated region
      $region45: #{tpu_custom_call.1} parent=11 // pred_check
        %p340 = pneg %p233
      $region46: #{tpu_custom_call.1} parent=11 // pred_check_branch
        %342 = sbr.rel (%p340) target = $region48
      $region47: #{tpu_custom_call.1} parent=11 // pred_region
        _
      $region48: #{tpu_custom_call.1} parent=11 // pred_fallthru
        _
      // Predicated region
      $region49: #{tpu_custom_call.1} parent=11 // pred_check
        %p343 = pneg %p254
      $region50: #{tpu_custom_call.1} parent=11 // pred_check_branch
        %345 = sbr.rel (%p343) target = $region52
      $region51: #{tpu_custom_call.1} parent=11 // pred_region
        _
      $region52: #{tpu_custom_call.1} parent=11 // pred_fallthru
        _
      // Predicated region
      $region53: #{tpu_custom_call.1} parent=11 // pred_check
        %p346 = pneg %p275
      $region54: #{tpu_custom_call.1} parent=11 // pred_check_branch
        %348 = sbr.rel (%p346) target = $region56
      $region55: #{tpu_custom_call.1} parent=11 // pred_region
        _
      $region56: #{tpu_custom_call.1} parent=11 // pred_fallthru
        _
    $region12: #{tpu_custom_call.1} parent=5 // pred_fallthru
      _
    %p349 = scmp.lt.s32.totalorder %s18, 2
    // Predicated region
    $region57: #{tpu_custom_call.1} parent=5 // pred_check
      %p350 = pneg %p349
    $region58: #{tpu_custom_call.1} parent=5 // pred_check_branch
      %352 = sbr.rel (%p350) target = $region60
    $region59: #{tpu_custom_call.1} parent=5 // pred_region
      // Predicated region
      $region61: #{tpu_custom_call.1} parent=59 // pred_check
        %p353 = pneg %p38
      $region62: #{tpu_custom_call.1} parent=59 // pred_check_branch
        %355 = sbr.rel (%p353) target = $region64
      $region63: #{tpu_custom_call.1} parent=59 // pred_region
        %s356 = smul.u32 4, %s18
        %p357 = scmp.lt.s32.totalorder %s356, 7
        %s358 = scalar_select %p357, %s356, 7
        %s359 = smul.addr %s358, 8
        %s360 = scalar_lea.vmem %s0, %s359
        %s361 = smul.u32 4, %s18
      $region64: #{tpu_custom_call.1} parent=59 // pred_fallthru
        _
    $region60: #{tpu_custom_call.1} parent=5 // pred_fallthru
      _
    %p362 = scmp.le.s32.totalorder 1, %s18
    %p363 = scmp.lt.s32.totalorder %s18, 3
    %p364 = pnand %p362, %p363
    %p365 = pneg %p364
    // Predicated region
    $region65: #{tpu_custom_call.1} parent=5 // pred_check
      _
    $region66: #{tpu_custom_call.1} parent=5 // pred_check_branch
      %367 = sbr.rel (%p364) target = $region68
    $region67: #{tpu_custom_call.1} parent=5 // pred_region
      %s368 = ssub.s32 %s18, 1
      %s369 = smul.u32 4, %s23
      %p370 = scmp.lt.s32.totalorder %s369, 7
      %s371 = scalar_select %p370, %s369, 7
      %s372 = smul.addr %s371, 8
      %s373 = scalar_lea.vmem %s0, %s372
      %p374 = pneg %p44
      %p375 = pneg %p41
      %p376 = pneg %p65
      %p377 = pneg %p62
      %p378 = pneg %p86
      %p379 = pneg %p83
      %p380 = pneg %p107
      %p381 = pneg %p104
      %p382 = pneg %p128
      %p383 = pneg %p125
      %p384 = pneg %p149
      %p385 = pneg %p146
      %p386 = pneg %p170
      %p387 = pneg %p167
      %p388 = pneg %p191
      %p389 = pneg %p188
      %p390 = pneg %p212
      %p391 = pneg %p209
      %p392 = pneg %p233
      %p393 = pneg %p230
      %p394 = pneg %p254
      %p395 = pneg %p251
      %p396 = pneg %p275
      %p397 = pneg %p272
      %p398 = pneg %p301
      %p399 = pneg %p298
      %s400 = smul.u32 4, %s23
      %p401 = scmp.lt.s32.totalorder %s400, 7
      %s402 = scalar_select %p401, %s400, 7
      %s403 = smul.addr %s402, 8
      %s404 = scalar_lea.vmem %s12, %s403
      %s405 = smul.u32 4, %s23
      %p406 = scmp.lt.s32.totalorder %s405, 7
      %s407 = scalar_select %p406, %s405, 7
      %s408 = smul.addr %s407, 8
      %s409 = scalar_lea.vmem %s0, %s408
      %s410 = smul.u32 4, %s23
      %s411 = smul.u32 4, %s23
      %p412 = scmp.lt.s32.totalorder %s411, 7
      %s413 = scalar_select %p412, %s411, 7
      %s414 = smul.addr %s413, 8
      %s415 = scalar_lea.vmem %s12, %s414
      %s416 = smul.u32 4, %s23
      %v418 = vld [vmem:[%s409] sm:$0xff]
      %v419 = vld [vmem:[%s409 + $0x8] sm:$0xff]
      %v420 = vld [vmem:[%s409 + $0x10] sm:$0xff]
      %v421 = vld [vmem:[%s409 + $0x18] sm:$0xff]
      %v422 = vld [vmem:[%s1] sm:$0x1]
      %v423 = vld [vmem:[%s2] sm:$0x1]
      %vm424 = vcmask 261120
      %v425 = vsel %vm424, %v418, 0.0
      %426 = vadd.xlane.f32.xlu0 %v425
      %v427 = vpop.xlane.xlu0 %426
      %v428 = vsel %vm424, %v419, 0.0
      %429 = vadd.xlane.f32.xlu0 %v428
      %v430 = vpop.xlane.xlu0 %429
      %v431 = vsel %vm424, %v420, 0.0
      %432 = vadd.xlane.f32.xlu0 %v431
      %v433 = vpop.xlane.xlu0 %432
      %v434 = vsel %vm424, %v421, 0.0
      %435 = vadd.xlane.f32.xlu0 %v434
      %v436 = vpop.xlane.xlu0 %435
      %v437 = vrcp.pop 32.0
      %v438 = vmul.f32 %v427, %v437
      %v439 = vmul.f32 %v430, %v437
      %v440 = vmul.f32 %v433, %v437
      %v441 = vmul.f32 %v436, %v437
      %v442 = vsub.f32 %v418, %v438
      %v443 = vsub.f32 %v419, %v439
      %v444 = vsub.f32 %v420, %v440
      %v445 = vsub.f32 %v421, %v441
      %v446 = vmul.f32 %v442, %v442
      %v447 = vmul.f32 %v443, %v443
      %v448 = vmul.f32 %v444, %v444
      %v449 = vmul.f32 %v445, %v445
      %v450 = vsel %vm424, %v446, 0.0
      %451 = vadd.xlane.f32.xlu0 %v450
      %v452 = vpop.xlane.xlu0 %451
      %v453 = vsel %vm424, %v447, 0.0
      %454 = vadd.xlane.f32.xlu0 %v453
      %v455 = vpop.xlane.xlu0 %454
      %v456 = vsel %vm424, %v448, 0.0
      %457 = vadd.xlane.f32.xlu0 %v456
      %v458 = vpop.xlane.xlu0 %457
      %v459 = vsel %vm424, %v449, 0.0
      %460 = vadd.xlane.f32.xlu0 %v459
      %v461 = vpop.xlane.xlu0 %460
      %v462 = vmul.f32 %v452, %v437
      %v463 = vmul.f32 %v455, %v437
      %v464 = vmul.f32 %v458, %v437
      %v465 = vmul.f32 %v461, %v437
      %v466 = vadd.f32 %v462, 1e-05
      %v467 = vadd.f32 %v463, 1e-05
      %v468 = vadd.f32 %v464, 1e-05
      %v469 = vadd.f32 %v465, 1e-05
      %v470 = vrsqrt.pop %v466
      %v471 = vrsqrt.pop %v467
      %v472 = vrsqrt.pop %v468
      %v473 = vrsqrt.pop %v469
      %v474 = vmul.f32 %v442, %v470
      %v475 = vmul.f32 %v443, %v471
      %v476 = vmul.f32 %v444, %v472
      %v477 = vmul.f32 %v445, %v473
      %v479 = vlaneseq
      %v480 = vshrl.u32 %v479, 7
      %v481 = vsub.s32 0, %v480
      %v482 = vrot.slane %v422, %v481
      %v484 = vmul.f32 %v474, %v482
      %v485 = vmul.f32 %v475, %v482
      %v486 = vmul.f32 %v476, %v482
      %v487 = vmul.f32 %v477, %v482
      %v489 = vlaneseq
      %v490 = vshrl.u32 %v489, 7
      %v491 = vsub.s32 0, %v490
      %v492 = vrot.slane %v423, %v491
      %v494 = vadd.f32 %v484, %v492
      %v495 = vadd.f32 %v485, %v492
      %v496 = vadd.f32 %v486, %v492
      %v497 = vadd.f32 %v487, %v492
      %v498 = vpack.c.bf16 %v495, %v494
      %v499 = vpack.c.bf16 %v497, %v496
      %v500 = vld [vmem:[%s3] sm:$0xf]
      %v501 = vld [vmem:[%s3 + $0x4] sm:$0xf]
      %v502 = vld [vmem:[%s3 + $0x8] sm:$0xf]
      %v503 = vld [vmem:[%s3 + $0xc] sm:$0xf]
      %v508 = vunpack.c.l.b16 %v500
      %v509 = vunpack.c.l.b16 %v501
      %v510 = vunpack.c.l.b16 %v502
      %v511 = vunpack.c.l.b16 %v503
      %v512 = vpack.c.b16 %v509, %v508
      %v513 = vpack.c.b16 %v511, %v510
      %v517 = vsel %vm424, %v498, 0
      %v520 = vsel %vm424, %v499, 0
      %522 = vmatprep.subr.bf16.mxu0 0
      %523 = vmatpush1.bf16.msra.mxu0 %v512
      %524 = vmatprep.subr.bf16.mxu0 0
      %525 = vmatpush1.bf16.msra.mxu0 %v513
      %526 = vmatprep.subr.bf16.mxu0 0
      %527 = vmatpush1.bf16.msra.mxu0 0
      %528 = vmatprep.subr.bf16.mxu0 0
      %529 = vmatpush1.bf16.msra.mxu0 0
      %530 = vmatprep.subr.bf16.mxu0 0
      %531 = vmatpush1.bf16.msra.mxu0 0
      %532 = vmatprep.subr.bf16.mxu0 0
      %533 = vmatpush1.bf16.msra.mxu0 0
      %534 = vmatprep.subr.bf16.mxu0 0
      %535 = vmatpush1.bf16.msra.mxu0 0
      %536 = vmatprep.subr.bf16.mxu0 0
      %537 = vmatpush1.bf16.msra.mxu0 0
      %538 = vmatprep.subr.bf16.mxu0 0
      %539 = vmatpush1.bf16.msra.mxu0 0
      %540 = vmatprep.subr.bf16.mxu0 0
      %541 = vmatpush1.bf16.msra.mxu0 0
      %542 = vmatprep.subr.bf16.mxu0 0
      %543 = vmatpush1.bf16.msra.mxu0 0
      %544 = vmatprep.subr.bf16.mxu0 0
      %545 = vmatpush1.bf16.msra.mxu0 0
      %546 = vmatprep.subr.bf16.mxu0 0
      %547 = vmatpush1.bf16.msra.mxu0 0
      %548 = vmatprep.subr.bf16.mxu0 0
      %549 = vmatpush1.bf16.msra.mxu0 0
      %550 = vmatprep.subr.bf16.mxu0 0
      %551 = vmatpush1.bf16.msra.mxu0 0
      %552 = vmatprep.subr.bf16.mxu0 0
      %553 = vmatpush1.bf16.msra.mxu0 0
      %554 = vmatprep.mubr.bf16.mxu0 0
      %555 = vmatmul.mubr.bf16.gmra.mrb[0].mxu0 %v517
      %v556 = vpop.f32.mrb[0].mxu0
      %v557 = vadd.f32 0.0, %v556
      %v558 = vpop.f32.mrb[0].mxu0
      %v559 = vpop.f32.mrb[0].mxu0
      %v560 = vadd.f32 0.0, %v559
      %v561 = vpop.f32.mrb[0].mxu0
      %562 = vmatprep.mubr.bf16.mxu0 0
      %563 = vmatmul.mubr.bf16.gmra.mrb[0].mxu0 %v520
      %v564 = vpop.f32.mrb[0].mxu0
      %v565 = vadd.f32 0.0, %v564
      %v566 = vpop.f32.mrb[0].mxu0
      %v567 = vpop.f32.mrb[0].mxu0
      %v568 = vadd.f32 0.0, %v567
      %v569 = vpop.f32.mrb[0].mxu0
      %570 = vdwg.mxu0
      %v571 = vpack.c.bf16 %v560, %v557
      %v572 = vpack.c.bf16 %v568, %v565
      %v573 = vlaneseq
      %v574 = vshrl.u32 %v573, 7
      %v575 = vlaneseq
      %v576 = vand.u32 %v575, 127
      %vm577 = vcmp.le.s32.totalorder %v576, %v574
      %v578 = vsel %vm577, 0.0, -1e+30
      %580 = vrot.lane.b32.xlu0 %v571, 96
      %v581 = vpop.permute.xlu0 %580
      %vm582 = vcmask 64512
      %v584 = vsel %vm582, %v571, 0
      %v587 = vsel %vm582, %v581, 0
      %589 = vmatprep.subr.bf16.mxu0 0
      %590 = vmatpush1.bf16.xpose.msra.mxu0 %v587
      %591 = vmatprep.subr.bf16.mxu0 0
      %592 = vmatpush1.bf16.xpose.msra.mxu0 0
      %593 = vmatprep.subr.bf16.mxu0 0
      %594 = vmatpush1.bf16.xpose.msra.mxu0 0
      %595 = vmatprep.subr.bf16.mxu0 0
      %596 = vmatpush1.bf16.xpose.msra.mxu0 0
      %597 = vmatprep.subr.bf16.mxu0 0
      %598 = vmatpush1.bf16.xpose.msra.mxu0 0
      %599 = vmatprep.subr.bf16.mxu0 0
      %600 = vmatpush1.bf16.xpose.msra.mxu0 0
      %601 = vmatprep.subr.bf16.mxu0 0
      %602 = vmatpush1.bf16.xpose.msra.mxu0 0
      %603 = vmatprep.subr.bf16.mxu0 0
      %604 = vmatpush1.bf16.xpose.msra.mxu0 0
      %605 = vmatprep.subr.bf16.mxu0 0
      %606 = vmatpush1.bf16.xpose.msra.mxu0 0
      %607 = vmatprep.subr.bf16.mxu0 0
      %608 = vmatpush1.bf16.xpose.msra.mxu0 0
      %609 = vmatprep.subr.bf16.mxu0 0
      %610 = vmatpush1.bf16.xpose.msra.mxu0 0
      %611 = vmatprep.subr.bf16.mxu0 0
      %612 = vmatpush1.bf16.xpose.msra.mxu0 0
      %613 = vmatprep.subr.bf16.mxu0 0
      %614 = vmatpush1.bf16.xpose.msra.mxu0 0
      %615 = vmatprep.subr.bf16.mxu0 0
      %616 = vmatpush1.bf16.xpose.msra.mxu0 0
      %617 = vmatprep.subr.bf16.mxu0 0
      %618 = vmatpush1.bf16.xpose.msra.mxu0 0
      %619 = vmatprep.subr.bf16.mxu0 0
      %620 = vmatpush1.bf16.xpose.msra.mxu0 0
      %621 = vmatprep.mubr.bf16.mxu0 0
      %622 = vmatmul.mubr.bf16.gmra.mrb[0].mxu0 %v584
      %v623 = vpop.f32.mrb[0].mxu0
      %v624 = vadd.f32 %v578, %v623
      %v625 = vpop.f32.mrb[0].mxu0
      %v626 = vpop.f32.mrb[0].mxu0
      %v627 = vpop.f32.mrb[0].mxu0
      %628 = vdwg.mxu0
      %v629 = vsel %vm582, %v624, -inf
      %630 = vmax.xlane.f32.xlu0 %v629
      %v631 = vpop.xlane.xlu0 %630
      %v632 = vsub.f32 %v624, %v631
      %v633 = vmul.f32 %v632, 1.442695
      %v634 = vpow.pop %v633
      %v635 = vsel %vm582, %v634, 0.0
      %636 = vadd.xlane.f32.xlu0 %v635
      %v637 = vpop.xlane.xlu0 %636
      %v638 = vrcp.pop %v637
      %v639 = vmul.f32 %v634, %v638
      %v640 = vpack.c.bf16 %v639, %v639
      %641 = vrot.lane.b32.xlu0 %v571, 64
      %v642 = vpop.permute.xlu0 %641
      %v644 = vsel %vm582, %v640, 0
      %vm646 = vcmask 1043456
      %v648 = vsel %vm646, %v642, 0
      %650 = vmatprep.subr.bf16.mxu0 0
      %651 = vmatpush1.bf16.msra.mxu0 %v648
      %652 = vmatprep.subr.bf16.mxu0 0
      %653 = vmatpush1.bf16.msra.mxu0 0
      %654 = vmatprep.subr.bf16.mxu0 0
      %655 = vmatpush1.bf16.msra.mxu0 0
      %656 = vmatprep.subr.bf16.mxu0 0
      %657 = vmatpush1.bf16.msra.mxu0 0
      %658 = vmatprep.subr.bf16.mxu0 0
      %659 = vmatpush1.bf16.msra.mxu0 0
      %660 = vmatprep.subr.bf16.mxu0 0
      %661 = vmatpush1.bf16.msra.mxu0 0
      %662 = vmatprep.subr.bf16.mxu0 0
      %663 = vmatpush1.bf16.msra.mxu0 0
      %664 = vmatprep.subr.bf16.mxu0 0
      %665 = vmatpush1.bf16.msra.mxu0 0
      %666 = vmatprep.subr.bf16.mxu0 0
      %667 = vmatpush1.bf16.msra.mxu0 0
      %668 = vmatprep.subr.bf16.mxu0 0
      %669 = vmatpush1.bf16.msra.mxu0 0
      %670 = vmatprep.subr.bf16.mxu0 0
      %671 = vmatpush1.bf16.msra.mxu0 0
      %672 = vmatprep.subr.bf16.mxu0 0
      %673 = vmatpush1.bf16.msra.mxu0 0
      %674 = vmatprep.subr.bf16.mxu0 0
      %675 = vmatpush1.bf16.msra.mxu0 0
      %676 = vmatprep.subr.bf16.mxu0 0
      %677 = vmatpush1.bf16.msra.mxu0 0
      %678 = vmatprep.subr.bf16.mxu0 0
      %679 = vmatpush1.bf16.msra.mxu0 0
      %680 = vmatprep.subr.bf16.mxu0 0
      %681 = vmatpush1.bf16.msra.mxu0 0
      %682 = vmatprep.mubr.bf16.mxu0 0
      %683 = vmatmul.mubr.bf16.gmra.mrb[0].mxu0 %v644
      %v684 = vpop.f32.mrb[0].mxu0
      %v685 = vadd.f32 0.0, %v684
      %v686 = vpop.f32.mrb[0].mxu0
      %v687 = vpop.f32.mrb[0].mxu0
      %v688 = vpop.f32.mrb[0].mxu0
      %689 = vdwg.mxu0
      %690 = vst.msk [vmem:[#allocation2] sm:$0xff] %vm582, %v685
      %691 = vrot.lane.b32.xlu0 %v571, 120
      %v692 = vpop.permute.xlu0 %691
      %693 = vrot.lane.b32.xlu0 %v571, 88
      %v694 = vpop.permute.xlu0 %693
      %v696 = vsel %vm582, %v692, 0
      %v699 = vsel %vm582, %v694, 0
      %701 = vmatprep.subr.bf16.mxu0 0
      %702 = vmatpush1.bf16.xpose.msra.mxu0 %v699
      %703 = vmatprep.subr.bf16.mxu0 0
      %704 = vmatpush1.bf16.xpose.msra.mxu0 0
      %705 = vmatprep.subr.bf16.mxu0 0
      %706 = vmatpush1.bf16.xpose.msra.mxu0 0
      %707 = vmatprep.subr.bf16.mxu0 0
      %708 = vmatpush1.bf16.xpose.msra.mxu0 0
      %709 = vmatprep.subr.bf16.mxu0 0
      %710 = vmatpush1.bf16.xpose.msra.mxu0 0
      %711 = vmatprep.subr.bf16.mxu0 0
      %712 = vmatpush1.bf16.xpose.msra.mxu0 0
      %713 = vmatprep.subr.bf16.mxu0 0
      %714 = vmatpush1.bf16.xpose.msra.mxu0 0
      %715 = vmatprep.subr.bf16.mxu0 0
      %716 = vmatpush1.bf16.xpose.msra.mxu0 0
      %717 = vmatprep.subr.bf16.mxu0 0
      %718 = vmatpush1.bf16.xpose.msra.mxu0 0
      %719 = vmatprep.subr.bf16.mxu0 0
      %720 = vmatpush1.bf16.xpose.msra.mxu0 0
      %721 = vmatprep.subr.bf16.mxu0 0
      %722 = vmatpush1.bf16.xpose.msra.mxu0 0
      %723 = vmatprep.subr.bf16.mxu0 0
      %724 = vmatpush1.bf16.xpose.msra.mxu0 0
      %725 = vmatprep.subr.bf16.mxu0 0
      %726 = vmatpush1.bf16.xpose.msra.mxu0 0
      %727 = vmatprep.subr.bf16.mxu0 0
      %728 = vmatpush1.bf16.xpose.msra.mxu0 0
      %729 = vmatprep.subr.bf16.mxu0 0
      %730 = vmatpush1.bf16.xpose.msra.mxu0 0
      %731 = vmatprep.subr.bf16.mxu0 0
      %732 = vmatpush1.bf16.xpose.msra.mxu0 0
      %733 = vmatprep.mubr.bf16.mxu0 0
      %734 = vmatmul.mubr.bf16.gmra.mrb[0].mxu0 %v696
      %v735 = vpop.f32.mrb[0].mxu0
      %v736 = vadd.f32 %v578, %v735
      %v737 = vpop.f32.mrb[0].mxu0
      %v738 = vpop.f32.mrb[0].mxu0
      %v739 = vpop.f32.mrb[0].mxu0
      %740 = vdwg.mxu0
      %v741 = vsel %vm582, %v736, -inf
      %742 = vmax.xlane.f32.xlu0 %v741
      %v743 = vpop.xlane.xlu0 %742
      %v744 = vsub.f32 %v736, %v743
      %v745 = vmul.f32 %v744, 1.442695
      %v746 = vpow.pop %v745
      %v747 = vsel %vm582, %v746, 0.0
      %748 = vadd.xlane.f32.xlu0 %v747
      %v749 = vpop.xlane.xlu0 %748
      %v750 = vrcp.pop %v749
      %v751 = vmul.f32 %v746, %v750
      %v752 = vpack.c.bf16 %v751, %v751
      %753 = vrot.lane.b32.xlu0 %v571, 56
      %v754 = vpop.permute.xlu0 %753
      %v756 = vsel %vm582, %v752, 0
      %v759 = vsel %vm646, %v754, 0
      %761 = vmatprep.subr.bf16.mxu0 0
      %762 = vmatpush1.bf16.msra.mxu0 %v759
      %763 = vmatprep.subr.bf16.mxu0 0
      %764 = vmatpush1.bf16.msra.mxu0 0
      %765 = vmatprep.subr.bf16.mxu0 0
      %766 = vmatpush1.bf16.msra.mxu0 0
      %767 = vmatprep.subr.bf16.mxu0 0
      %768 = vmatpush1.bf16.msra.mxu0 0
      %769 = vmatprep.subr.bf16.mxu0 0
      %770 = vmatpush1.bf16.msra.mxu0 0
      %771 = vmatprep.subr.bf16.mxu0 0
      %772 = vmatpush1.bf16.msra.mxu0 0
      %773 = vmatprep.subr.bf16.mxu0 0
      %774 = vmatpush1.bf16.msra.mxu0 0
      %775 = vmatprep.subr.bf16.mxu0 0
      %776 = vmatpush1.bf16.msra.mxu0 0
      %777 = vmatprep.subr.bf16.mxu0 0
      %778 = vmatpush1.bf16.msra.mxu0 0
      %779 = vmatprep.subr.bf16.mxu0 0
      %780 = vmatpush1.bf16.msra.mxu0 0
      %781 = vmatprep.subr.bf16.mxu0 0
      %782 = vmatpush1.bf16.msra.mxu0 0
      %783 = vmatprep.subr.bf16.mxu0 0
      %784 = vmatpush1.bf16.msra.mxu0 0
      %785 = vmatprep.subr.bf16.mxu0 0
      %786 = vmatpush1.bf16.msra.mxu0 0
      %787 = vmatprep.subr.bf16.mxu0 0
      %788 = vmatpush1.bf16.msra.mxu0 0
      %789 = vmatprep.subr.bf16.mxu0 0
      %790 = vmatpush1.bf16.msra.mxu0 0
      %791 = vmatprep.subr.bf16.mxu0 0
      %792 = vmatpush1.bf16.msra.mxu0 0
      %793 = vmatprep.mubr.bf16.mxu0 0
      %794 = vmatmul.mubr.bf16.gmra.mrb[0].mxu0 %v756
      %v795 = vpop.f32.mrb[0].mxu0
      %v796 = vadd.f32 0.0, %v795
      %v797 = vpop.f32.mrb[0].mxu0
      %v798 = vpop.f32.mrb[0].mxu0
      %v799 = vpop.f32.mrb[0].mxu0
      %800 = vdwg.mxu0
      %802 = vrot.lane.b32.xlu0 %v796, 8
      %v803 = vpop.permute.xlu0 %802
      %vm805 = vcmask 130112
      %806 = vst.msk [vmem:[#allocation2] sm:$0xff] %vm805, %v803
      %807 = vrot.lane.b32.xlu0 %v571, 112
      %v808 = vpop.permute.xlu0 %807
      %809 = vrot.lane.b32.xlu0 %v571, 80
      %v810 = vpop.permute.xlu0 %809
      %v812 = vsel %vm582, %v808, 0
      %v815 = vsel %vm582, %v810, 0
      %817 = vmatprep.subr.bf16.mxu0 0
      %818 = vmatpush1.bf16.xpose.msra.mxu0 %v815
      %819 = vmatprep.subr.bf16.mxu0 0
      %820 = vmatpush1.bf16.xpose.msra.mxu0 0
      %821 = vmatprep.subr.bf16.mxu0 0
      %822 = vmatpush1.bf16.xpose.msra.mxu0 0
      %823 = vmatprep.subr.bf16.mxu0 0
      %824 = vmatpush1.bf16.xpose.msra.mxu0 0
      %825 = vmatprep.subr.bf16.mxu0 0
      %826 = vmatpush1.bf16.xpose.msra.mxu0 0
      %827 = vmatprep.subr.bf16.mxu0 0
      %828 = vmatpush1.bf16.xpose.msra.mxu0 0
      %829 = vmatprep.subr.bf16.mxu0 0
      %830 = vmatpush1.bf16.xpose.msra.mxu0 0
      %831 = vmatprep.subr.bf16.mxu0 0
      %832 = vmatpush1.bf16.xpose.msra.mxu0 0
      %833 = vmatprep.subr.bf16.mxu0 0
      %834 = vmatpush1.bf16.xpose.msra.mxu0 0
      %835 = vmatprep.subr.bf16.mxu0 0
      %836 = vmatpush1.bf16.xpose.msra.mxu0 0
      %837 = vmatprep.subr.bf16.mxu0 0
      %838 = vmatpush1.bf16.xpose.msra.mxu0 0
      %839 = vmatprep.subr.bf16.mxu0 0
      %840 = vmatpush1.bf16.xpose.msra.mxu0 0
      %841 = vmatprep.subr.bf16.mxu0 0
      %842 = vmatpush1.bf16.xpose.msra.mxu0 0
      %843 = vmatprep.subr.bf16.mxu0 0
      %844 = vmatpush1.bf16.xpose.msra.mxu0 0
      %845 = vmatprep.subr.bf16.mxu0 0
      %846 = vmatpush1.bf16.xpose.msra.mxu0 0
      %847 = vmatprep.subr.bf16.mxu0 0
      %848 = vmatpush1.bf16.xpose.msra.mxu0 0
      %849 = vmatprep.mubr.bf16.mxu0 0
      %850 = vmatmul.mubr.bf16.gmra.mrb[0].mxu0 %v812
      %v851 = vpop.f32.mrb[0].mxu0
      %v852 = vadd.f32 %v578, %v851
      %v853 = vpop.f32.mrb[0].mxu0
      %v854 = vpop.f32.mrb[0].mxu0
      %v855 = vpop.f32.mrb[0].mxu0
      %856 = vdwg.mxu0
      %v857 = vsel %vm582, %v852, -inf
      %858 = vmax.xlane.f32.xlu0 %v857
      %v859 = vpop.xlane.xlu0 %858
      %v860 = vsub.f32 %v852, %v859
      %v861 = vmul.f32 %v860, 1.442695
      %v862 = vpow.pop %v861
      %v863 = vsel %vm582, %v862, 0.0
      %864 = vadd.xlane.f32.xlu0 %v863
      %v865 = vpop.xlane.xlu0 %864
      %v866 = vrcp.pop %v865
      %v867 = vmul.f32 %v862, %v866
      %v868 = vpack.c.bf16 %v867, %v867
      %869 = vrot.lane.b32.xlu0 %v571, 48
      %v870 = vpop.permute.xlu0 %869
      %v872 = vsel %vm582, %v868, 0
      %v875 = vsel %vm646, %v870, 0
      %877 = vmatprep.subr.bf16.mxu0 0
      %878 = vmatpush1.bf16.msra.mxu0 %v875
      %879 = vmatprep.subr.bf16.mxu0 0
      %880 = vmatpush1.bf16.msra.mxu0 0
      %881 = vmatprep.subr.bf16.mxu0 0
      %882 = vmatpush1.bf16.msra.mxu0 0
      %883 = vmatprep.subr.bf16.mxu0 0
      %884 = vmatpush1.bf16.msra.mxu0 0
      %885 = vmatprep.subr.bf16.mxu0 0
      %886 = vmatpush1.bf16.msra.mxu0 0
      %887 = vmatprep.subr.bf16.mxu0 0
      %888 = vmatpush1.bf16.msra.mxu0 0
      %889 = vmatprep.subr.bf16.mxu0 0
      %890 = vmatpush1.bf16.msra.mxu0 0
      %891 = vmatprep.subr.bf16.mxu0 0
      %892 = vmatpush1.bf16.msra.mxu0 0
      %893 = vmatprep.subr.bf16.mxu0 0
      %894 = vmatpush1.bf16.msra.mxu0 0
      %895 = vmatprep.subr.bf16.mxu0 0
      %896 = vmatpush1.bf16.msra.mxu0 0
      %897 = vmatprep.subr.bf16.mxu0 0
      %898 = vmatpush1.bf16.msra.mxu0 0
      %899 = vmatprep.subr.bf16.mxu0 0
      %900 = vmatpush1.bf16.msra.mxu0 0
      %901 = vmatprep.subr.bf16.mxu0 0
      %902 = vmatpush1.bf16.msra.mxu0 0
      %903 = vmatprep.subr.bf16.mxu0 0
      %904 = vmatpush1.bf16.msra.mxu0 0
      %905 = vmatprep.subr.bf16.mxu0 0
      %906 = vmatpush1.bf16.msra.mxu0 0
      %907 = vmatprep.subr.bf16.mxu0 0
      %908 = vmatpush1.bf16.msra.mxu0 0
      %909 = vmatprep.mubr.bf16.mxu0 0
      %910 = vmatmul.mubr.bf16.gmra.mrb[0].mxu0 %v872
      %v911 = vpop.f32.mrb[0].mxu0
      %v912 = vadd.f32 0.0, %v911
      %v913 = vpop.f32.mrb[0].mxu0
      %v914 = vpop.f32.mrb[0].mxu0
      %v915 = vpop.f32.mrb[0].mxu0
      %916 = vdwg.mxu0
      %918 = vrot.lane.b32.xlu0 %v912, 16
      %v919 = vpop.permute.xlu0 %918
      %vm921 = vcmask 195712
      %922 = vst.msk [vmem:[#allocation2] sm:$0xff] %vm921, %v919
      %923 = vrot.lane.b32.xlu0 %v571, 104
      %v924 = vpop.permute.xlu0 %923
      %925 = vrot.lane.b32.xlu0 %v571, 72
      %v926 = vpop.permute.xlu0 %925
      %v928 = vsel %vm582, %v924, 0
      %v931 = vsel %vm582, %v926, 0
      %933 = vmatprep.subr.bf16.mxu0 0
      %934 = vmatpush1.bf16.xpose.msra.mxu0 %v931
      %935 = vmatprep.subr.bf16.mxu0 0
      %936 = vmatpush1.bf16.xpose.msra.mxu0 0
      %937 = vmatprep.subr.bf16.mxu0 0
      %938 = vmatpush1.bf16.xpose.msra.mxu0 0
      %939 = vmatprep.subr.bf16.mxu0 0
      %940 = vmatpush1.bf16.xpose.msra.mxu0 0
      %941 = vmatprep.subr.bf16.mxu0 0
      %942 = vmatpush1.bf16.xpose.msra.mxu0 0
      %943 = vmatprep.subr.bf16.mxu0 0
      %944 = vmatpush1.bf16.xpose.msra.mxu0 0
      %945 = vmatprep.subr.bf16.mxu0 0
      %946 = vmatpush1.bf16.xpose.msra.mxu0 0
      %947 = vmatprep.subr.bf16.mxu0 0
      %948 = vmatpush1.bf16.xpose.msra.mxu0 0
      %949 = vmatprep.subr.bf16.mxu0 0
      %950 = vmatpush1.bf16.xpose.msra.mxu0 0
      %951 = vmatprep.subr.bf16.mxu0 0
      %952 = vmatpush1.bf16.xpose.msra.mxu0 0
      %953 = vmatprep.subr.bf16.mxu0 0
      %954 = vmatpush1.bf16.xpose.msra.mxu0 0
      %955 = vmatprep.subr.bf16.mxu0 0
      %956 = vmatpush1.bf16.xpose.msra.mxu0 0
      %957 = vmatprep.subr.bf16.mxu0 0
      %958 = vmatpush1.bf16.xpose.msra.mxu0 0
      %959 = vmatprep.subr.bf16.mxu0 0
      %960 = vmatpush1.bf16.xpose.msra.mxu0 0
      %961 = vmatprep.subr.bf16.mxu0 0
      %962 = vmatpush1.bf16.xpose.msra.mxu0 0
      %963 = vmatprep.subr.bf16.mxu0 0
      %964 = vmatpush1.bf16.xpose.msra.mxu0 0
      %965 = vmatprep.mubr.bf16.mxu0 0
      %966 = vmatmul.mubr.bf16.gmra.mrb[0].mxu0 %v928
      %v967 = vpop.f32.mrb[0].mxu0
      %v968 = vadd.f32 %v578, %v967
      %v969 = vpop.f32.mrb[0].mxu0
      %v970 = vpop.f32.mrb[0].mxu0
      %v971 = vpop.f32.mrb[0].mxu0
      %972 = vdwg.mxu0
      %v973 = vsel %vm582, %v968, -inf
      %974 = vmax.xlane.f32.xlu0 %v973
      %v975 = vpop.xlane.xlu0 %974
      %v976 = vsub.f32 %v968, %v975
      %v977 = vmul.f32 %v976, 1.442695
      %v978 = vpow.pop %v977
      %v979 = vsel %vm582, %v978, 0.0
      %980 = vadd.xlane.f32.xlu0 %v979
      %v981 = vpop.xlane.xlu0 %980
      %v982 = vrcp.pop %v981
      %v983 = vmul.f32 %v978, %v982
      %v984 = vpack.c.bf16 %v983, %v983
      %985 = vrot.lane.b32.xlu0 %v571, 40
      %v986 = vpop.permute.xlu0 %985
      %v988 = vsel %vm582, %v984, 0
      %v991 = vsel %vm646, %v986, 0
      %993 = vmatprep.subr.bf16.mxu0 0
      %994 = vmatpush1.bf16.msra.mxu0 %v991
      %995 = vmatprep.subr.bf16.mxu0 0
      %996 = vmatpush1.bf16.msra.mxu0 0
      %997 = vmatprep.subr.bf16.mxu0 0
      %998 = vmatpush1.bf16.msra.mxu0 0
      %999 = vmatprep.subr.bf16.mxu0 0
      %1000 = vmatpush1.bf16.msra.mxu0 0
      %1001 = vmatprep.subr.bf16.mxu0 0
      %1002 = vmatpush1.bf16.msra.mxu0 0
      %1003 = vmatprep.subr.bf16.mxu0 0
      %1004 = vmatpush1.bf16.msra.mxu0 0
      %1005 = vmatprep.subr.bf16.mxu0 0
      %1006 = vmatpush1.bf16.msra.mxu0 0
      %1007 = vmatprep.subr.bf16.mxu0 0
      %1008 = vmatpush1.bf16.msra.mxu0 0
      %1009 = vmatprep.subr.bf16.mxu0 0
      %1010 = vmatpush1.bf16.msra.mxu0 0
      %1011 = vmatprep.subr.bf16.mxu0 0
      %1012 = vmatpush1.bf16.msra.mxu0 0
      %1013 = vmatprep.subr.bf16.mxu0 0
      %1014 = vmatpush1.bf16.msra.mxu0 0
      %1015 = vmatprep.subr.bf16.mxu0 0
      %1016 = vmatpush1.bf16.msra.mxu0 0
      %1017 = vmatprep.subr.bf16.mxu0 0
      %1018 = vmatpush1.bf16.msra.mxu0 0
      %1019 = vmatprep.subr.bf16.mxu0 0
      %1020 = vmatpush1.bf16.msra.mxu0 0
      %1021 = vmatprep.subr.bf16.mxu0 0
      %1022 = vmatpush1.bf16.msra.mxu0 0
      %1023 = vmatprep.subr.bf16.mxu0 0
      %1024 = vmatpush1.bf16.msra.mxu0 0
      %1025 = vmatprep.mubr.bf16.mxu0 0
      %1026 = vmatmul.mubr.bf16.gmra.mrb[0].mxu0 %v988
      %v1027 = vpop.f32.mrb[0].mxu0
      %v1028 = vadd.f32 0.0, %v1027
      %v1029 = vpop.f32.mrb[0].mxu0
      %v1030 = vpop.f32.mrb[0].mxu0
      %v1031 = vpop.f32.mrb[0].mxu0
      %1032 = vdwg.mxu0
      %1034 = vrot.lane.b32.xlu0 %v1028, 24
      %v1035 = vpop.permute.xlu0 %1034
      %vm1037 = vcmask 261312
      %1038 = vst.msk [vmem:[#allocation2] sm:$0xff] %vm1037, %v1035
      %v1039 = vrot.slane %v571, 4
      %1040 = vrot.lane.b32.xlu0 %v1039, 96
      %v1041 = vpop.permute.xlu0 %1040
      %v1043 = vsel %vm582, %v1039, 0
      %v1046 = vsel %vm582, %v1041, 0
      %1048 = vmatprep.subr.bf16.mxu0 0
      %1049 = vmatpush1.bf16.xpose.msra.mxu0 %v1046
      %1050 = vmatprep.subr.bf16.mxu0 0
      %1051 = vmatpush1.bf16.xpose.msra.mxu0 0
      %1052 = vmatprep.subr.bf16.mxu0 0
      %1053 = vmatpush1.bf16.xpose.msra.mxu0 0
      %1054 = vmatprep.subr.bf16.mxu0 0
      %1055 = vmatpush1.bf16.xpose.msra.mxu0 0
      %1056 = vmatprep.subr.bf16.mxu0 0
      %1057 = vmatpush1.bf16.xpose.msra.mxu0 0
      %1058 = vmatprep.subr.bf16.mxu0 0
      %1059 = vmatpush1.bf16.xpose.msra.mxu0 0
      %1060 = vmatprep.subr.bf16.mxu0 0
      %1061 = vmatpush1.bf16.xpose.msra.mxu0 0
      %1062 = vmatprep.subr.bf16.mxu0 0
      %1063 = vmatpush1.bf16.xpose.msra.mxu0 0
      %1064 = vmatprep.subr.bf16.mxu0 0
      %1065 = vmatpush1.bf16.xpose.msra.mxu0 0
      %1066 = vmatprep.subr.bf16.mxu0 0
      %1067 = vmatpush1.bf16.xpose.msra.mxu0 0
      %1068 = vmatprep.subr.bf16.mxu0 0
      %1069 = vmatpush1.bf16.xpose.msra.mxu0 0
      %1070 = vmatprep.subr.bf16.mxu0 0
      %1071 = vmatpush1.bf16.xpose.msra.mxu0 0
      %1072 = vmatprep.subr.bf16.mxu0 0
      %1073 = vmatpush1.bf16.xpose.msra.mxu0 0
      %1074 = vmatprep.subr.bf16.mxu0 0
      %1075 = vmatpush1.bf16.xpose.msra.mxu0 0
      %1076 = vmatprep.subr.bf16.mxu0 0
      %1077 = vmatpush1.bf16.xpose.msra.mxu0 0
      %1078 = vmatprep.subr.bf16.mxu0 0
      %1079 = vmatpush1.bf16.xpose.msra.mxu0 0
      %1080 = vmatprep.mubr.bf16.mxu0 0
      %1081 = vmatmul.mubr.bf16.gmra.mrb[0].mxu0 %v1043
      %v1082 = vpop.f32.mrb[0].mxu0
      %v1083 = vadd.f32 %v578, %v1082
      %v1084 = vpop.f32.mrb[0].mxu0
      %v1085 = vpop.f32.mrb[0].mxu0
      %v1086 = vpop.f32.mrb[0].mxu0
      %1087 = vdwg.mxu0
      %v1088 = vsel %vm582, %v1083, -inf
      %1089 = vmax.xlane.f32.xlu0 %v1088
      %v1090 = vpop.xlane.xlu0 %1089
      %v1091 = vsub.f32 %v1083, %v1090
      %v1092 = vmul.f32 %v1091, 1.442695
      %v1093 = vpow.pop %v1092
      %v1094 = vsel %vm582, %v1093, 0.0
      %1095 = vadd.xlane.f32.xlu0 %v1094
      %v1096 = vpop.xlane.xlu0 %1095
      %v1097 = vrcp.pop %v1096
      %v1098 = vmul.f32 %v1093, %v1097
      %v1099 = vpack.c.bf16 %v1098, %v1098
      %1100 = vrot.lane.b32.xlu0 %v1039, 64
      %v1101 = vpop.permute.xlu0 %1100
      %v1103 = vsel %vm582, %v1099, 0
      %v1106 = vsel %vm646, %v1101, 0
      %1108 = vmatprep.subr.bf16.mxu0 0
      %1109 = vmatpush1.bf16.msra.mxu0 %v1106
      %1110 = vmatprep.subr.bf16.mxu0 0
      %1111 = vmatpush1.bf16.msra.mxu0 0
      %1112 = vmatprep.subr.bf16.mxu0 0
      %1113 = vmatpush1.bf16.msra.mxu0 0
      %1114 = vmatprep.subr.bf16.mxu0 0
      %1115 = vmatpush1.bf16.msra.mxu0 0
      %1116 = vmatprep.subr.bf16.mxu0 0
      %1117 = vmatpush1.bf16.msra.mxu0 0
      %1118 = vmatprep.subr.bf16.mxu0 0
      %1119 = vmatpush1.bf16.msra.mxu0 0
      %1120 = vmatprep.subr.bf16.mxu0 0
      %1121 = vmatpush1.bf16.msra.mxu0 0
      %1122 = vmatprep.subr.bf16.mxu0 0
      %1123 = vmatpush1.bf16.msra.mxu0 0
      %1124 = vmatprep.subr.bf16.mxu0 0
      %1125 = vmatpush1.bf16.msra.mxu0 0
      %1126 = vmatprep.subr.bf16.mxu0 0
      %1127 = vmatpush1.bf16.msra.mxu0 0
      %1128 = vmatprep.subr.bf16.mxu0 0
      %1129 = vmatpush1.bf16.msra.mxu0 0
      %1130 = vmatprep.subr.bf16.mxu0 0
      %1131 = vmatpush1.bf16.msra.mxu0 0
      %1132 = vmatprep.subr.bf16.mxu0 0
      %1133 = vmatpush1.bf16.msra.mxu0 0
      %1134 = vmatprep.subr.bf16.mxu0 0
      %1135 = vmatpush1.bf16.msra.mxu0 0
      %1136 = vmatprep.subr.bf16.mxu0 0
      %1137 = vmatpush1.bf16.msra.mxu0 0
      %1138 = vmatprep.subr.bf16.mxu0 0
      %1139 = vmatpush1.bf16.msra.mxu0 0
      %1140 = vmatprep.mubr.bf16.mxu0 0
      %1141 = vmatmul.mubr.bf16.gmra.mrb[0].mxu0 %v1103
      %v1142 = vpop.f32.mrb[0].mxu0
      %v1143 = vadd.f32 0.0, %v1142
      %v1144 = vpop.f32.mrb[0].mxu0
      %v1145 = vpop.f32.mrb[0].mxu0
      %v1146 = vpop.f32.mrb[0].mxu0
      %1147 = vdwg.mxu0
      %1148 = vst.msk [vmem:[#allocation2 + $0x8] sm:$0xff] %vm582, %v1143
      %1149 = vrot.lane.b32.xlu0 %v1039, 120
      %v1150 = vpop.permute.xlu0 %1149
      %1151 = vrot.lane.b32.xlu0 %v1039, 88
      %v1152 = vpop.permute.xlu0 %1151
      %v1154 = vsel %vm582, %v1150, 0
      %v1157 = vsel %vm582, %v1152, 0
      %1159 = vmatprep.subr.bf16.mxu0 0
      %1160 = vmatpush1.bf16.xpose.msra.mxu0 %v1157
      %1161 = vmatprep.subr.bf16.mxu0 0
      %1162 = vmatpush1.bf16.xpose.msra.mxu0 0
      %1163 = vmatprep.subr.bf16.mxu0 0
      %1164 = vmatpush1.bf16.xpose.msra.mxu0 0
      %1165 = vmatprep.subr.bf16.mxu0 0
      %1166 = vmatpush1.bf16.xpose.msra.mxu0 0
      %1167 = vmatprep.subr.bf16.mxu0 0
      %1168 = vmatpush1.bf16.xpose.msra.mxu0 0
      %1169 = vmatprep.subr.bf16.mxu0 0
      %1170 = vmatpush1.bf16.xpose.msra.mxu0 0
      %1171 = vmatprep.subr.bf16.mxu0 0
      %1172 = vmatpush1.bf16.xpose.msra.mxu0 0
      %1173 = vmatprep.subr.bf16.mxu0 0
      %1174 = vmatpush1.bf16.xpose.msra.mxu0 0
      %1175 = vmatprep.subr.bf16.mxu0 0
      %1176 = vmatpush1.bf16.xpose.msra.mxu0 0
      %1177 = vmatprep.subr.bf16.mxu0 0
      %1178 = vmatpush1.bf16.xpose.msra.mxu0 0
      %1179 = vmatprep.subr.bf16.mxu0 0
      %1180 = vmatpush1.bf16.xpose.msra.mxu0 0
      %1181 = vmatprep.subr.bf16.mxu0 0
      %1182 = vmatpush1.bf16.xpose.msra.mxu0 0
      %1183 = vmatprep.subr.bf16.mxu0 0
      %1184 = vmatpush1.bf16.xpose.msra.mxu0 0
      %1185 = vmatprep.subr.bf16.mxu0 0
      %1186 = vmatpush1.bf16.xpose.msra.mxu0 0
      %1187 = vmatprep.subr.bf16.mxu0 0
      %1188 = vmatpush1.bf16.xpose.msra.mxu0 0
      %1189 = vmatprep.subr.bf16.mxu0 0
      %1190 = vmatpush1.bf16.xpose.msra.mxu0 0
      %1191 = vmatprep.mubr.bf16.mxu0 0
      %1192 = vmatmul.mubr.bf16.gmra.mrb[0].mxu0 %v1154
      %v1193 = vpop.f32.mrb[0].mxu0
      %v1194 = vadd.f32 %v578, %v1193
      %v1195 = vpop.f32.mrb[0].mxu0
      %v1196 = vpop.f32.mrb[0].mxu0
      %v1197 = vpop.f32.mrb[0].mxu0
      %1198 = vdwg.mxu0
      %v1199 = vsel %vm582, %v1194, -inf
      %1200 = vmax.xlane.f32.xlu0 %v1199
      %v1201 = vpop.xlane.xlu0 %1200
      %v1202 = vsub.f32 %v1194, %v1201
      %v1203 = vmul.f32 %v1202, 1.442695
      %v1204 = vpow.pop %v1203
      %v1205 = vsel %vm582, %v1204, 0.0
      %1206 = vadd.xlane.f32.xlu0 %v1205
      %v1207 = vpop.xlane.xlu0 %1206
      %v1208 = vrcp.pop %v1207
      %v1209 = vmul.f32 %v1204, %v1208
      %v1210 = vpack.c.bf16 %v1209, %v1209
      %1211 = vrot.lane.b32.xlu0 %v1039, 56
      %v1212 = vpop.permute.xlu0 %1211
      %v1214 = vsel %vm582, %v1210, 0
      %v1217 = vsel %vm646, %v1212, 0
      %1219 = vmatprep.subr.bf16.mxu0 0
      %1220 = vmatpush1.bf16.msra.mxu0 %v1217
      %1221 = vmatprep.subr.bf16.mxu0 0
      %1222 = vmatpush1.bf16.msra.mxu0 0
      %1223 = vmatprep.subr.bf16.mxu0 0
      %1224 = vmatpush1.bf16.msra.mxu0 0
      %1225 = vmatprep.subr.bf16.mxu0 0
      %1226 = vmatpush1.bf16.msra.mxu0 0
      %1227 = vmatprep.subr.bf16.mxu0 0
      %1228 = vmatpush1.bf16.msra.mxu0 0
      %1229 = vmatprep.subr.bf16.mxu0 0
      %1230 = vmatpush1.bf16.msra.mxu0 0
      %1231 = vmatprep.subr.bf16.mxu0 0
      %1232 = vmatpush1.bf16.msra.mxu0 0
      %1233 = vmatprep.subr.bf16.mxu0 0
      %1234 = vmatpush1.bf16.msra.mxu0 0
      %1235 = vmatprep.subr.bf16.mxu0 0
      %1236 = vmatpush1.bf16.msra.mxu0 0
      %1237 = vmatprep.subr.bf16.mxu0 0
      %1238 = vmatpush1.bf16.msra.mxu0 0
      %1239 = vmatprep.subr.bf16.mxu0 0
      %1240 = vmatpush1.bf16.msra.mxu0 0
      %1241 = vmatprep.subr.bf16.mxu0 0
      %1242 = vmatpush1.bf16.msra.mxu0 0
      %1243 = vmatprep.subr.bf16.mxu0 0
      %1244 = vmatpush1.bf16.msra.mxu0 0
      %1245 = vmatprep.subr.bf16.mxu0 0
      %1246 = vmatpush1.bf16.msra.mxu0 0
      %1247 = vmatprep.subr.bf16.mxu0 0
      %1248 = vmatpush1.bf16.msra.mxu0 0
      %1249 = vmatprep.subr.bf16.mxu0 0
      %1250 = vmatpush1.bf16.msra.mxu0 0
      %1251 = vmatprep.mubr.bf16.mxu0 0
      %1252 = vmatmul.mubr.bf16.gmra.mrb[0].mxu0 %v1214
      %v1253 = vpop.f32.mrb[0].mxu0
      %v1254 = vadd.f32 0.0, %v1253
      %v1255 = vpop.f32.mrb[0].mxu0
      %v1256 = vpop.f32.mrb[0].mxu0
      %v1257 = vpop.f32.mrb[0].mxu0
      %1258 = vdwg.mxu0
      %1260 = vrot.lane.b32.xlu0 %v1254, 8
      %v1261 = vpop.permute.xlu0 %1260
      %1263 = vst.msk [vmem:[#allocation2 + $0x8] sm:$0xff] %vm805, %v1261
      %1264 = vrot.lane.b32.xlu0 %v1039, 112
      %v1265 = vpop.permute.xlu0 %1264
      %1266 = vrot.lane.b32.xlu0 %v1039, 80
      %v1267 = vpop.permute.xlu0 %1266
      %v1269 = vsel %vm582, %v1265, 0
      %v1272 = vsel %vm582, %v1267, 0
      %1274 = vmatprep.subr.bf16.mxu0 0
      %1275 = vmatpush1.bf16.xpose.msra.mxu0 %v1272
      %1276 = vmatprep.subr.bf16.mxu0 0
      %1277 = vmatpush1.bf16.xpose.msra.mxu0 0
      %1278 = vmatprep.subr.bf16.mxu0 0
      %1279 = vmatpush1.bf16.xpose.msra.mxu0 0
      %1280 = vmatprep.subr.bf16.mxu0 0
      %1281 = vmatpush1.bf16.xpose.msra.mxu0 0
      %1282 = vmatprep.subr.bf16.mxu0 0
      %1283 = vmatpush1.bf16.xpose.msra.mxu0 0
      %1284 = vmatprep.subr.bf16.mxu0 0
      %1285 = vmatpush1.bf16.xpose.msra.mxu0 0
      %1286 = vmatprep.subr.bf16.mxu0 0
      %1287 = vmatpush1.bf16.xpose.msra.mxu0 0
      %1288 = vmatprep.subr.bf16.mxu0 0
      %1289 = vmatpush1.bf16.xpose.msra.mxu0 0
      %1290 = vmatprep.subr.bf16.mxu0 0
      %1291 = vmatpush1.bf16.xpose.msra.mxu0 0
      %1292 = vmatprep.subr.bf16.mxu0 0
      %1293 = vmatpush1.bf16.xpose.msra.mxu0 0
      %1294 = vmatprep.subr.bf16.mxu0 0
      %1295 = vmatpush1.bf16.xpose.msra.mxu0 0
      %1296 = vmatprep.subr.bf16.mxu0 0
      %1297 = vmatpush1.bf16.xpose.msra.mxu0 0
      %1298 = vmatprep.subr.bf16.mxu0 0
      %1299 = vmatpush1.bf16.xpose.msra.mxu0 0
      %1300 = vmatprep.subr.bf16.mxu0 0
      %1301 = vmatpush1.bf16.xpose.msra.mxu0 0
      %1302 = vmatprep.subr.bf16.mxu0 0
      %1303 = vmatpush1.bf16.xpose.msra.mxu0 0
      %1304 = vmatprep.subr.bf16.mxu0 0
      %1305 = vmatpush1.bf16.xpose.msra.mxu0 0
      %1306 = vmatprep.mubr.bf16.mxu0 0
      %1307 = vmatmul.mubr.bf16.gmra.mrb[0].mxu0 %v1269
      %v1308 = vpop.f32.mrb[0].mxu0
      %v1309 = vadd.f32 %v578, %v1308
      %v1310 = vpop.f32.mrb[0].mxu0
      %v1311 = vpop.f32.mrb[0].mxu0
      %v1312 = vpop.f32.mrb[0].mxu0
      %1313 = vdwg.mxu0
      %v1314 = vsel %vm582, %v1309, -inf
      %1315 = vmax.xlane.f32.xlu0 %v1314
      %v1316 = vpop.xlane.xlu0 %1315
      %v1317 = vsub.f32 %v1309, %v1316
      %v1318 = vmul.f32 %v1317, 1.442695
      %v1319 = vpow.pop %v1318
      %v1320 = vsel %vm582, %v1319, 0.0
      %1321 = vadd.xlane.f32.xlu0 %v1320
      %v1322 = vpop.xlane.xlu0 %1321
      %v1323 = vrcp.pop %v1322
      %v1324 = vmul.f32 %v1319, %v1323
      %v1325 = vpack.c.bf16 %v1324, %v1324
      %1326 = vrot.lane.b32.xlu0 %v1039, 48
      %v1327 = vpop.permute.xlu0 %1326
      %v1329 = vsel %vm582, %v1325, 0
      %v1332 = vsel %vm646, %v1327, 0
      %1334 = vmatprep.subr.bf16.mxu0 0
      %1335 = vmatpush1.bf16.msra.mxu0 %v1332
      %1336 = vmatprep.subr.bf16.mxu0 0
      %1337 = vmatpush1.bf16.msra.mxu0 0
      %1338 = vmatprep.subr.bf16.mxu0 0
      %1339 = vmatpush1.bf16.msra.mxu0 0
      %1340 = vmatprep.subr.bf16.mxu0 0
      %1341 = vmatpush1.bf16.msra.mxu0 0
      %1342 = vmatprep.subr.bf16.mxu0 0
      %1343 = vmatpush1.bf16.msra.mxu0 0
      %1344 = vmatprep.subr.bf16.mxu0 0
      %1345 = vmatpush1.bf16.msra.mxu0 0
      %1346 = vmatprep.subr.bf16.mxu0 0
      %1347 = vmatpush1.bf16.msra.mxu0 0
      %1348 = vmatprep.subr.bf16.mxu0 0
      %1349 = vmatpush1.bf16.msra.mxu0 0
      %1350 = vmatprep.subr.bf16.mxu0 0
      %1351 = vmatpush1.bf16.msra.mxu0 0
      %1352 = vmatprep.subr.bf16.mxu0 0
      %1353 = vmatpush1.bf16.msra.mxu0 0
      %1354 = vmatprep.subr.bf16.mxu0 0
      %1355 = vmatpush1.bf16.msra.mxu0 0
      %1356 = vmatprep.subr.bf16.mxu0 0
      %1357 = vmatpush1.bf16.msra.mxu0 0
      %1358 = vmatprep.subr.bf16.mxu0 0
      %1359 = vmatpush1.bf16.msra.mxu0 0
      %1360 = vmatprep.subr.bf16.mxu0 0
      %1361 = vmatpush1.bf16.msra.mxu0 0
      %1362 = vmatprep.subr.bf16.mxu0 0
      %1363 = vmatpush1.bf16.msra.mxu0 0
      %1364 = vmatprep.subr.bf16.mxu0 0
      %1365 = vmatpush1.bf16.msra.mxu0 0
      %1366 = vmatprep.mubr.bf16.mxu0 0
      %1367 = vmatmul.mubr.bf16.gmra.mrb[0].mxu0 %v1329
      %v1368 = vpop.f32.mrb[0].mxu0
      %v1369 = vadd.f32 0.0, %v1368
      %v1370 = vpop.f32.mrb[0].mxu0
      %v1371 = vpop.f32.mrb[0].mxu0
      %v1372 = vpop.f32.mrb[0].mxu0
      %1373 = vdwg.mxu0
      %1375 = vrot.lane.b32.xlu0 %v1369, 16
      %v1376 = vpop.permute.xlu0 %1375
      %1378 = vst.msk [vmem:[#allocation2 + $0x8] sm:$0xff] %vm921, %v1376
      %1379 = vrot.lane.b32.xlu0 %v1039, 104
      %v1380 = vpop.permute.xlu0 %1379
      %1381 = vrot.lane.b32.xlu0 %v1039, 72
      %v1382 = vpop.permute.xlu0 %1381
      %v1384 = vsel %vm582, %v1380, 0
      %v1387 = vsel %vm582, %v1382, 0
      %1389 = vmatprep.subr.bf16.mxu0 0
      %1390 = vmatpush1.bf16.xpose.msra.mxu0 %v1387
      %1391 = vmatprep.subr.bf16.mxu0 0
      %1392 = vmatpush1.bf16.xpose.msra.mxu0 0
      %1393 = vmatprep.subr.bf16.mxu0 0
      %1394 = vmatpush1.bf16.xpose.msra.mxu0 0
      %1395 = vmatprep.subr.bf16.mxu0 0
      %1396 = vmatpush1.bf16.xpose.msra.mxu0 0
      %1397 = vmatprep.subr.bf16.mxu0 0
      %1398 = vmatpush1.bf16.xpose.msra.mxu0 0
      %1399 = vmatprep.subr.bf16.mxu0 0
      %1400 = vmatpush1.bf16.xpose.msra.mxu0 0
      %1401 = vmatprep.subr.bf16.mxu0 0
      %1402 = vmatpush1.bf16.xpose.msra.mxu0 0
      %1403 = vmatprep.subr.bf16.mxu0 0
      %1404 = vmatpush1.bf16.xpose.msra.mxu0 0
      %1405 = vmatprep.subr.bf16.mxu0 0
      %1406 = vmatpush1.bf16.xpose.msra.mxu0 0
      %1407 = vmatprep.subr.bf16.mxu0 0
      %1408 = vmatpush1.bf16.xpose.msra.mxu0 0
      %1409 = vmatprep.subr.bf16.mxu0 0
      %1410 = vmatpush1.bf16.xpose.msra.mxu0 0
      %1411 = vmatprep.subr.bf16.mxu0 0
      %1412 = vmatpush1.bf16.xpose.msra.mxu0 0
      %1413 = vmatprep.subr.bf16.mxu0 0
      %1414 = vmatpush1.bf16.xpose.msra.mxu0 0
      %1415 = vmatprep.subr.bf16.mxu0 0
      %1416 = vmatpush1.bf16.xpose.msra.mxu0 0
      %1417 = vmatprep.subr.bf16.mxu0 0
      %1418 = vmatpush1.bf16.xpose.msra.mxu0 0
      %1419 = vmatprep.subr.bf16.mxu0 0
      %1420 = vmatpush1.bf16.xpose.msra.mxu0 0
      %1421 = vmatprep.mubr.bf16.mxu0 0
      %1422 = vmatmul.mubr.bf16.gmra.mrb[0].mxu0 %v1384
      %v1423 = vpop.f32.mrb[0].mxu0
      %v1424 = vadd.f32 %v578, %v1423
      %v1425 = vpop.f32.mrb[0].mxu0
      %v1426 = vpop.f32.mrb[0].mxu0
      %v1427 = vpop.f32.mrb[0].mxu0
      %1428 = vdwg.mxu0
      %v1429 = vsel %vm582, %v1424, -inf
      %1430 = vmax.xlane.f32.xlu0 %v1429
      %v1431 = vpop.xlane.xlu0 %1430
      %v1432 = vsub.f32 %v1424, %v1431
      %v1433 = vmul.f32 %v1432, 1.442695
      %v1434 = vpow.pop %v1433
      %v1435 = vsel %vm582, %v1434, 0.0
      %1436 = vadd.xlane.f32.xlu0 %v1435
      %v1437 = vpop.xlane.xlu0 %1436
      %v1438 = vrcp.pop %v1437
      %v1439 = vmul.f32 %v1434, %v1438
      %v1440 = vpack.c.bf16 %v1439, %v1439
      %1441 = vrot.lane.b32.xlu0 %v1039, 40
      %v1442 = vpop.permute.xlu0 %1441
      %v1444 = vsel %vm582, %v1440, 0
      %v1447 = vsel %vm646, %v1442, 0
      %1449 = vmatprep.subr.bf16.mxu0 0
      %1450 = vmatpush1.bf16.msra.mxu0 %v1447
      %1451 = vmatprep.subr.bf16.mxu0 0
      %1452 = vmatpush1.bf16.msra.mxu0 0
      %1453 = vmatprep.subr.bf16.mxu0 0
      %1454 = vmatpush1.bf16.msra.mxu0 0
      %1455 = vmatprep.subr.bf16.mxu0 0
      %1456 = vmatpush1.bf16.msra.mxu0 0
      %1457 = vmatprep.subr.bf16.mxu0 0
      %1458 = vmatpush1.bf16.msra.mxu0 0
      %1459 = vmatprep.subr.bf16.mxu0 0
      %1460 = vmatpush1.bf16.msra.mxu0 0
      %1461 = vmatprep.subr.bf16.mxu0 0
      %1462 = vmatpush1.bf16.msra.mxu0 0
      %1463 = vmatprep.subr.bf16.mxu0 0
      %1464 = vmatpush1.bf16.msra.mxu0 0
      %1465 = vmatprep.subr.bf16.mxu0 0
      %1466 = vmatpush1.bf16.msra.mxu0 0
      %1467 = vmatprep.subr.bf16.mxu0 0
      %1468 = vmatpush1.bf16.msra.mxu0 0
      %1469 = vmatprep.subr.bf16.mxu0 0
      %1470 = vmatpush1.bf16.msra.mxu0 0
      %1471 = vmatprep.subr.bf16.mxu0 0
      %1472 = vmatpush1.bf16.msra.mxu0 0
      %1473 = vmatprep.subr.bf16.mxu0 0
      %1474 = vmatpush1.bf16.msra.mxu0 0
      %1475 = vmatprep.subr.bf16.mxu0 0
      %1476 = vmatpush1.bf16.msra.mxu0 0
      %1477 = vmatprep.subr.bf16.mxu0 0
      %1478 = vmatpush1.bf16.msra.mxu0 0
      %1479 = vmatprep.subr.bf16.mxu0 0
      %1480 = vmatpush1.bf16.msra.mxu0 0
      %1481 = vmatprep.mubr.bf16.mxu0 0
      %1482 = vmatmul.mubr.bf16.gmra.mrb[0].mxu0 %v1444
      %v1483 = vpop.f32.mrb[0].mxu0
      %v1484 = vadd.f32 0.0, %v1483
      %v1485 = vpop.f32.mrb[0].mxu0
      %v1486 = vpop.f32.mrb[0].mxu0
      %v1487 = vpop.f32.mrb[0].mxu0
      %1488 = vdwg.mxu0
      %1490 = vrot.lane.b32.xlu0 %v1484, 24
      %v1491 = vpop.permute.xlu0 %1490
      %1493 = vst.msk [vmem:[#allocation2 + $0x8] sm:$0xff] %vm1037, %v1491
      %1495 = vrot.lane.b32.xlu0 %v572, 96
      %v1496 = vpop.permute.xlu0 %1495
      %v1498 = vsel %vm582, %v572, 0
      %v1501 = vsel %vm582, %v1496, 0
      %1503 = vmatprep.subr.bf16.mxu0 0
      %1504 = vmatpush1.bf16.xpose.msra.mxu0 %v1501
      %1505 = vmatprep.subr.bf16.mxu0 0
      %1506 = vmatpush1.bf16.xpose.msra.mxu0 0
      %1507 = vmatprep.subr.bf16.mxu0 0
      %1508 = vmatpush1.bf16.xpose.msra.mxu0 0
      %1509 = vmatprep.subr.bf16.mxu0 0
      %1510 = vmatpush1.bf16.xpose.msra.mxu0 0
      %1511 = vmatprep.subr.bf16.mxu0 0
      %1512 = vmatpush1.bf16.xpose.msra.mxu0 0
      %1513 = vmatprep.subr.bf16.mxu0 0
      %1514 = vmatpush1.bf16.xpose.msra.mxu0 0
      %1515 = vmatprep.subr.bf16.mxu0 0
      %1516 = vmatpush1.bf16.xpose.msra.mxu0 0
      %1517 = vmatprep.subr.bf16.mxu0 0
      %1518 = vmatpush1.bf16.xpose.msra.mxu0 0
      %1519 = vmatprep.subr.bf16.mxu0 0
      %1520 = vmatpush1.bf16.xpose.msra.mxu0 0
      %1521 = vmatprep.subr.bf16.mxu0 0
      %1522 = vmatpush1.bf16.xpose.msra.mxu0 0
      %1523 = vmatprep.subr.bf16.mxu0 0
      %1524 = vmatpush1.bf16.xpose.msra.mxu0 0
      %1525 = vmatprep.subr.bf16.mxu0 0
      %1526 = vmatpush1.bf16.xpose.msra.mxu0 0
      %1527 = vmatprep.subr.bf16.mxu0 0
      %1528 = vmatpush1.bf16.xpose.msra.mxu0 0
      %1529 = vmatprep.subr.bf16.mxu0 0
      %1530 = vmatpush1.bf16.xpose.msra.mxu0 0
      %1531 = vmatprep.subr.bf16.mxu0 0
      %1532 = vmatpush1.bf16.xpose.msra.mxu0 0
      %1533 = vmatprep.subr.bf16.mxu0 0
      %1534 = vmatpush1.bf16.xpose.msra.mxu0 0
      %1535 = vmatprep.mubr.bf16.mxu0 0
      %1536 = vmatmul.mubr.bf16.gmra.mrb[0].mxu0 %v1498
      %v1537 = vpop.f32.mrb[0].mxu0
      %v1538 = vadd.f32 %v578, %v1537
      %v1539 = vpop.f32.mrb[0].mxu0
      %v1540 = vpop.f32.mrb[0].mxu0
      %v1541 = vpop.f32.mrb[0].mxu0
      %1542 = vdwg.mxu0
      %v1543 = vsel %vm582, %v1538, -inf
      %1544 = vmax.xlane.f32.xlu0 %v1543
      %v1545 = vpop.xlane.xlu0 %1544
      %v1546 = vsub.f32 %v1538, %v1545
      %v1547 = vmul.f32 %v1546, 1.442695
      %v1548 = vpow.pop %v1547
      %v1549 = vsel %vm582, %v1548, 0.0
      %1550 = vadd.xlane.f32.xlu0 %v1549
      %v1551 = vpop.xlane.xlu0 %1550
      %v1552 = vrcp.pop %v1551
      %v1553 = vmul.f32 %v1548, %v1552
      %v1554 = vpack.c.bf16 %v1553, %v1553
      %1555 = vrot.lane.b32.xlu0 %v572, 64
      %v1556 = vpop.permute.xlu0 %1555
      %v1558 = vsel %vm582, %v1554, 0
      %v1561 = vsel %vm646, %v1556, 0
      %1563 = vmatprep.subr.bf16.mxu0 0
      %1564 = vmatpush1.bf16.msra.mxu0 %v1561
      %1565 = vmatprep.subr.bf16.mxu0 0
      %1566 = vmatpush1.bf16.msra.mxu0 0
      %1567 = vmatprep.subr.bf16.mxu0 0
      %1568 = vmatpush1.bf16.msra.mxu0 0
      %1569 = vmatprep.subr.bf16.mxu0 0
      %1570 = vmatpush1.bf16.msra.mxu0 0
      %1571 = vmatprep.subr.bf16.mxu0 0
      %1572 = vmatpush1.bf16.msra.mxu0 0
      %1573 = vmatprep.subr.bf16.mxu0 0
      %1574 = vmatpush1.bf16.msra.mxu0 0
      %1575 = vmatprep.subr.bf16.mxu0 0
      %1576 = vmatpush1.bf16.msra.mxu0 0
      %1577 = vmatprep.subr.bf16.mxu0 0
      %1578 = vmatpush1.bf16.msra.mxu0 0
      %1579 = vmatprep.subr.bf16.mxu0 0
      %1580 = vmatpush1.bf16.msra.mxu0 0
      %1581 = vmatprep.subr.bf16.mxu0 0
      %1582 = vmatpush1.bf16.msra.mxu0 0
      %1583 = vmatprep.subr.bf16.mxu0 0
      %1584 = vmatpush1.bf16.msra.mxu0 0
      %1585 = vmatprep.subr.bf16.mxu0 0
      %1586 = vmatpush1.bf16.msra.mxu0 0
      %1587 = vmatprep.subr.bf16.mxu0 0
      %1588 = vmatpush1.bf16.msra.mxu0 0
      %1589 = vmatprep.subr.bf16.mxu0 0
      %1590 = vmatpush1.bf16.msra.mxu0 0
      %1591 = vmatprep.subr.bf16.mxu0 0
      %1592 = vmatpush1.bf16.msra.mxu0 0
      %1593 = vmatprep.subr.bf16.mxu0 0
      %1594 = vmatpush1.bf16.msra.mxu0 0
      %1595 = vmatprep.mubr.bf16.mxu0 0
      %1596 = vmatmul.mubr.bf16.gmra.mrb[0].mxu0 %v1558
      %v1597 = vpop.f32.mrb[0].mxu0
      %v1598 = vadd.f32 0.0, %v1597
      %v1599 = vpop.f32.mrb[0].mxu0
      %v1600 = vpop.f32.mrb[0].mxu0
      %v1601 = vpop.f32.mrb[0].mxu0
      %1602 = vdwg.mxu0
      %1603 = vst.msk [vmem:[#allocation2 + $0x10] sm:$0xff] %vm582, %v1598
      %1604 = vrot.lane.b32.xlu0 %v572, 120
      %v1605 = vpop.permute.xlu0 %1604
      %1606 = vrot.lane.b32.xlu0 %v572, 88
      %v1607 = vpop.permute.xlu0 %1606
      %v1609 = vsel %vm582, %v1605, 0
      %v1612 = vsel %vm582, %v1607, 0
      %1614 = vmatprep.subr.bf16.mxu0 0
      %1615 = vmatpush1.bf16.xpose.msra.mxu0 %v1612
      %1616 = vmatprep.subr.bf16.mxu0 0
      %1617 = vmatpush1.bf16.xpose.msra.mxu0 0
      %1618 = vmatprep.subr.bf16.mxu0 0
      %1619 = vmatpush1.bf16.xpose.msra.mxu0 0
      %1620 = vmatprep.subr.bf16.mxu0 0
      %1621 = vmatpush1.bf16.xpose.msra.mxu0 0
      %1622 = vmatprep.subr.bf16.mxu0 0
      %1623 = vmatpush1.bf16.xpose.msra.mxu0 0
      %1624 = vmatprep.subr.bf16.mxu0 0
      %1625 = vmatpush1.bf16.xpose.msra.mxu0 0
      %1626 = vmatprep.subr.bf16.mxu0 0
      %1627 = vmatpush1.bf16.xpose.msra.mxu0 0
      %1628 = vmatprep.subr.bf16.mxu0 0
      %1629 = vmatpush1.bf16.xpose.msra.mxu0 0
      %1630 = vmatprep.subr.bf16.mxu0 0
      %1631 = vmatpush1.bf16.xpose.msra.mxu0 0
      %1632 = vmatprep.subr.bf16.mxu0 0
      %1633 = vmatpush1.bf16.xpose.msra.mxu0 0
      %1634 = vmatprep.subr.bf16.mxu0 0
      %1635 = vmatpush1.bf16.xpose.msra.mxu0 0
      %1636 = vmatprep.subr.bf16.mxu0 0
      %1637 = vmatpush1.bf16.xpose.msra.mxu0 0
      %1638 = vmatprep.subr.bf16.mxu0 0
      %1639 = vmatpush1.bf16.xpose.msra.mxu0 0
      %1640 = vmatprep.subr.bf16.mxu0 0
      %1641 = vmatpush1.bf16.xpose.msra.mxu0 0
      %1642 = vmatprep.subr.bf16.mxu0 0
      %1643 = vmatpush1.bf16.xpose.msra.mxu0 0
      %1644 = vmatprep.subr.bf16.mxu0 0
      %1645 = vmatpush1.bf16.xpose.msra.mxu0 0
      %1646 = vmatprep.mubr.bf16.mxu0 0
      %1647 = vmatmul.mubr.bf16.gmra.mrb[0].mxu0 %v1609
      %v1648 = vpop.f32.mrb[0].mxu0
      %v1649 = vadd.f32 %v578, %v1648
      %v1650 = vpop.f32.mrb[0].mxu0
      %v1651 = vpop.f32.mrb[0].mxu0
      %v1652 = vpop.f32.mrb[0].mxu0
      %1653 = vdwg.mxu0
      %v1654 = vsel %vm582, %v1649, -inf
      %1655 = vmax.xlane.f32.xlu0 %v1654
      %v1656 = vpop.xlane.xlu0 %1655
      %v1657 = vsub.f32 %v1649, %v1656
      %v1658 = vmul.f32 %v1657, 1.442695
      %v1659 = vpow.pop %v1658
      %v1660 = vsel %vm582, %v1659, 0.0
      %1661 = vadd.xlane.f32.xlu0 %v1660
      %v1662 = vpop.xlane.xlu0 %1661
      %v1663 = vrcp.pop %v1662
      %v1664 = vmul.f32 %v1659, %v1663
      %v1665 = vpack.c.bf16 %v1664, %v1664
      %1666 = vrot.lane.b32.xlu0 %v572, 56
      %v1667 = vpop.permute.xlu0 %1666
      %v1669 = vsel %vm582, %v1665, 0
      %v1672 = vsel %vm646, %v1667, 0
      %1674 = vmatprep.subr.bf16.mxu0 0
      %1675 = vmatpush1.bf16.msra.mxu0 %v1672
      %1676 = vmatprep.subr.bf16.mxu0 0
      %1677 = vmatpush1.bf16.msra.mxu0 0
      %1678 = vmatprep.subr.bf16.mxu0 0
      %1679 = vmatpush1.bf16.msra.mxu0 0
      %1680 = vmatprep.subr.bf16.mxu0 0
      %1681 = vmatpush1.bf16.msra.mxu0 0
      %1682 = vmatprep.subr.bf16.mxu0 0
      %1683 = vmatpush1.bf16.msra.mxu0 0
      %1684 = vmatprep.subr.bf16.mxu0 0
      %1685 = vmatpush1.bf16.msra.mxu0 0
      %1686 = vmatprep.subr.bf16.mxu0 0
      %1687 = vmatpush1.bf16.msra.mxu0 0
      %1688 = vmatprep.subr.bf16.mxu0 0
      %1689 = vmatpush1.bf16.msra.mxu0 0
      %1690 = vmatprep.subr.bf16.mxu0 0
      %1691 = vmatpush1.bf16.msra.mxu0 0
      %1692 = vmatprep.subr.bf16.mxu0 0
      %1693 = vmatpush1.bf16.msra.mxu0 0
      %1694 = vmatprep.subr.bf16.mxu0 0
      %1695 = vmatpush1.bf16.msra.mxu0 0
      %1696 = vmatprep.subr.bf16.mxu0 0
      %1697 = vmatpush1.bf16.msra.mxu0 0
      %1698 = vmatprep.subr.bf16.mxu0 0
      %1699 = vmatpush1.bf16.msra.mxu0 0
      %1700 = vmatprep.subr.bf16.mxu0 0
      %1701 = vmatpush1.bf16.msra.mxu0 0
      %1702 = vmatprep.subr.bf16.mxu0 0
      %1703 = vmatpush1.bf16.msra.mxu0 0
      %1704 = vmatprep.subr.bf16.mxu0 0
      %1705 = vmatpush1.bf16.msra.mxu0 0
      %1706 = vmatprep.mubr.bf16.mxu0 0
      %1707 = vmatmul.mubr.bf16.gmra.mrb[0].mxu0 %v1669
      %v1708 = vpop.f32.mrb[0].mxu0
      %v1709 = vadd.f32 0.0, %v1708
      %v1710 = vpop.f32.mrb[0].mxu0
      %v1711 = vpop.f32.mrb[0].mxu0
      %v1712 = vpop.f32.mrb[0].mxu0
      %1713 = vdwg.mxu0
      %1715 = vrot.lane.b32.xlu0 %v1709, 8
      %v1716 = vpop.permute.xlu0 %1715
      %1718 = vst.msk [vmem:[#allocation2 + $0x10] sm:$0xff] %vm805, %v1716
      %1719 = vrot.lane.b32.xlu0 %v572, 112
      %v1720 = vpop.permute.xlu0 %1719
      %1721 = vrot.lane.b32.xlu0 %v572, 80
      %v1722 = vpop.permute.xlu0 %1721
      %v1724 = vsel %vm582, %v1720, 0
      %v1727 = vsel %vm582, %v1722, 0
      %1729 = vmatprep.subr.bf16.mxu0 0
      %1730 = vmatpush1.bf16.xpose.msra.mxu0 %v1727
      %1731 = vmatprep.subr.bf16.mxu0 0
      %1732 = vmatpush1.bf16.xpose.msra.mxu0 0
      %1733 = vmatprep.subr.bf16.mxu0 0
      %1734 = vmatpush1.bf16.xpose.msra.mxu0 0
      %1735 = vmatprep.subr.bf16.mxu0 0
      %1736 = vmatpush1.bf16.xpose.msra.mxu0 0
      %1737 = vmatprep.subr.bf16.mxu0 0
      %1738 = vmatpush1.bf16.xpose.msra.mxu0 0
      %1739 = vmatprep.subr.bf16.mxu0 0
      %1740 = vmatpush1.bf16.xpose.msra.mxu0 0
      %1741 = vmatprep.subr.bf16.mxu0 0
      %1742 = vmatpush1.bf16.xpose.msra.mxu0 0
      %1743 = vmatprep.subr.bf16.mxu0 0
      %1744 = vmatpush1.bf16.xpose.msra.mxu0 0
      %1745 = vmatprep.subr.bf16.mxu0 0
      %1746 = vmatpush1.bf16.xpose.msra.mxu0 0
      %1747 = vmatprep.subr.bf16.mxu0 0
      %1748 = vmatpush1.bf16.xpose.msra.mxu0 0
      %1749 = vmatprep.subr.bf16.mxu0 0
      %1750 = vmatpush1.bf16.xpose.msra.mxu0 0
      %1751 = vmatprep.subr.bf16.mxu0 0
      %1752 = vmatpush1.bf16.xpose.msra.mxu0 0
      %1753 = vmatprep.subr.bf16.mxu0 0
      %1754 = vmatpush1.bf16.xpose.msra.mxu0 0
      %1755 = vmatprep.subr.bf16.mxu0 0
      %1756 = vmatpush1.bf16.xpose.msra.mxu0 0
      %1757 = vmatprep.subr.bf16.mxu0 0
      %1758 = vmatpush1.bf16.xpose.msra.mxu0 0
      %1759 = vmatprep.subr.bf16.mxu0 0
      %1760 = vmatpush1.bf16.xpose.msra.mxu0 0
      %1761 = vmatprep.mubr.bf16.mxu0 0
      %1762 = vmatmul.mubr.bf16.gmra.mrb[0].mxu0 %v1724
      %v1763 = vpop.f32.mrb[0].mxu0
      %v1764 = vadd.f32 %v578, %v1763
      %v1765 = vpop.f32.mrb[0].mxu0
      %v1766 = vpop.f32.mrb[0].mxu0
      %v1767 = vpop.f32.mrb[0].mxu0
      %1768 = vdwg.mxu0
      %v1769 = vsel %vm582, %v1764, -inf
      %1770 = vmax.xlane.f32.xlu0 %v1769
      %v1771 = vpop.xlane.xlu0 %1770
      %v1772 = vsub.f32 %v1764, %v1771
      %v1773 = vmul.f32 %v1772, 1.442695
      %v1774 = vpow.pop %v1773
      %v1775 = vsel %vm582, %v1774, 0.0
      %1776 = vadd.xlane.f32.xlu0 %v1775
      %v1777 = vpop.xlane.xlu0 %1776
      %v1778 = vrcp.pop %v1777
      %v1779 = vmul.f32 %v1774, %v1778
      %v1780 = vpack.c.bf16 %v1779, %v1779
      %1781 = vrot.lane.b32.xlu0 %v572, 48
      %v1782 = vpop.permute.xlu0 %1781
      %v1784 = vsel %vm582, %v1780, 0
      %v1787 = vsel %vm646, %v1782, 0
      %1789 = vmatprep.subr.bf16.mxu0 0
      %1790 = vmatpush1.bf16.msra.mxu0 %v1787
      %1791 = vmatprep.subr.bf16.mxu0 0
      %1792 = vmatpush1.bf16.msra.mxu0 0
      %1793 = vmatprep.subr.bf16.mxu0 0
      %1794 = vmatpush1.bf16.msra.mxu0 0
      %1795 = vmatprep.subr.bf16.mxu0 0
      %1796 = vmatpush1.bf16.msra.mxu0 0
      %1797 = vmatprep.subr.bf16.mxu0 0
      %1798 = vmatpush1.bf16.msra.mxu0 0
      %1799 = vmatprep.subr.bf16.mxu0 0
      %1800 = vmatpush1.bf16.msra.mxu0 0
      %1801 = vmatprep.subr.bf16.mxu0 0
      %1802 = vmatpush1.bf16.msra.mxu0 0
      %1803 = vmatprep.subr.bf16.mxu0 0
      %1804 = vmatpush1.bf16.msra.mxu0 0
      %1805 = vmatprep.subr.bf16.mxu0 0
      %1806 = vmatpush1.bf16.msra.mxu0 0
      %1807 = vmatprep.subr.bf16.mxu0 0
      %1808 = vmatpush1.bf16.msra.mxu0 0
      %1809 = vmatprep.subr.bf16.mxu0 0
      %1810 = vmatpush1.bf16.msra.mxu0 0
      %1811 = vmatprep.subr.bf16.mxu0 0
      %1812 = vmatpush1.bf16.msra.mxu0 0
      %1813 = vmatprep.subr.bf16.mxu0 0
      %1814 = vmatpush1.bf16.msra.mxu0 0
      %1815 = vmatprep.subr.bf16.mxu0 0
      %1816 = vmatpush1.bf16.msra.mxu0 0
      %1817 = vmatprep.subr.bf16.mxu0 0
      %1818 = vmatpush1.bf16.msra.mxu0 0
      %1819 = vmatprep.subr.bf16.mxu0 0
      %1820 = vmatpush1.bf16.msra.mxu0 0
      %1821 = vmatprep.mubr.bf16.mxu0 0
      %1822 = vmatmul.mubr.bf16.gmra.mrb[0].mxu0 %v1784
      %v1823 = vpop.f32.mrb[0].mxu0
      %v1824 = vadd.f32 0.0, %v1823
      %v1825 = vpop.f32.mrb[0].mxu0
      %v1826 = vpop.f32.mrb[0].mxu0
      %v1827 = vpop.f32.mrb[0].mxu0
      %1828 = vdwg.mxu0
      %1830 = vrot.lane.b32.xlu0 %v1824, 16
      %v1831 = vpop.permute.xlu0 %1830
      %1833 = vst.msk [vmem:[#allocation2 + $0x10] sm:$0xff] %vm921, %v1831
      %1834 = vrot.lane.b32.xlu0 %v572, 104
      %v1835 = vpop.permute.xlu0 %1834
      %1836 = vrot.lane.b32.xlu0 %v572, 72
      %v1837 = vpop.permute.xlu0 %1836
      %v1839 = vsel %vm582, %v1835, 0
      %v1842 = vsel %vm582, %v1837, 0
      %1844 = vmatprep.subr.bf16.mxu0 0
      %1845 = vmatpush1.bf16.xpose.msra.mxu0 %v1842
      %1846 = vmatprep.subr.bf16.mxu0 0
      %1847 = vmatpush1.bf16.xpose.msra.mxu0 0
      %1848 = vmatprep.subr.bf16.mxu0 0
      %1849 = vmatpush1.bf16.xpose.msra.mxu0 0
      %1850 = vmatprep.subr.bf16.mxu0 0
      %1851 = vmatpush1.bf16.xpose.msra.mxu0 0
      %1852 = vmatprep.subr.bf16.mxu0 0
      %1853 = vmatpush1.bf16.xpose.msra.mxu0 0
      %1854 = vmatprep.subr.bf16.mxu0 0
      %1855 = vmatpush1.bf16.xpose.msra.mxu0 0
      %1856 = vmatprep.subr.bf16.mxu0 0
      %1857 = vmatpush1.bf16.xpose.msra.mxu0 0
      %1858 = vmatprep.subr.bf16.mxu0 0
      %1859 = vmatpush1.bf16.xpose.msra.mxu0 0
      %1860 = vmatprep.subr.bf16.mxu0 0
      %1861 = vmatpush1.bf16.xpose.msra.mxu0 0
      %1862 = vmatprep.subr.bf16.mxu0 0
      %1863 = vmatpush1.bf16.xpose.msra.mxu0 0
      %1864 = vmatprep.subr.bf16.mxu0 0
      %1865 = vmatpush1.bf16.xpose.msra.mxu0 0
      %1866 = vmatprep.subr.bf16.mxu0 0
      %1867 = vmatpush1.bf16.xpose.msra.mxu0 0
      %1868 = vmatprep.subr.bf16.mxu0 0
      %1869 = vmatpush1.bf16.xpose.msra.mxu0 0
      %1870 = vmatprep.subr.bf16.mxu0 0
      %1871 = vmatpush1.bf16.xpose.msra.mxu0 0
      %1872 = vmatprep.subr.bf16.mxu0 0
      %1873 = vmatpush1.bf16.xpose.msra.mxu0 0
      %1874 = vmatprep.subr.bf16.mxu0 0
      %1875 = vmatpush1.bf16.xpose.msra.mxu0 0
      %1876 = vmatprep.mubr.bf16.mxu0 0
      %1877 = vmatmul.mubr.bf16.gmra.mrb[0].mxu0 %v1839
      %v1878 = vpop.f32.mrb[0].mxu0
      %v1879 = vadd.f32 %v578, %v1878
      %v1880 = vpop.f32.mrb[0].mxu0
      %v1881 = vpop.f32.mrb[0].mxu0
      %v1882 = vpop.f32.mrb[0].mxu0
      %1883 = vdwg.mxu0
      %v1884 = vsel %vm582, %v1879, -inf
      %1885 = vmax.xlane.f32.xlu0 %v1884
      %v1886 = vpop.xlane.xlu0 %1885
      %v1887 = vsub.f32 %v1879, %v1886
      %v1888 = vmul.f32 %v1887, 1.442695
      %v1889 = vpow.pop %v1888
      %v1890 = vsel %vm582, %v1889, 0.0
      %1891 = vadd.xlane.f32.xlu0 %v1890
      %v1892 = vpop.xlane.xlu0 %1891
      %v1893 = vrcp.pop %v1892
      %v1894 = vmul.f32 %v1889, %v1893
      %v1895 = vpack.c.bf16 %v1894, %v1894
      %1896 = vrot.lane.b32.xlu0 %v572, 40
      %v1897 = vpop.permute.xlu0 %1896
      %v1899 = vsel %vm582, %v1895, 0
      %v1902 = vsel %vm646, %v1897, 0
      %1904 = vmatprep.subr.bf16.mxu0 0
      %1905 = vmatpush1.bf16.msra.mxu0 %v1902
      %1906 = vmatprep.subr.bf16.mxu0 0
      %1907 = vmatpush1.bf16.msra.mxu0 0
      %1908 = vmatprep.subr.bf16.mxu0 0
      %1909 = vmatpush1.bf16.msra.mxu0 0
      %1910 = vmatprep.subr.bf16.mxu0 0
      %1911 = vmatpush1.bf16.msra.mxu0 0
      %1912 = vmatprep.subr.bf16.mxu0 0
      %1913 = vmatpush1.bf16.msra.mxu0 0
      %1914 = vmatprep.subr.bf16.mxu0 0
      %1915 = vmatpush1.bf16.msra.mxu0 0
      %1916 = vmatprep.subr.bf16.mxu0 0
      %1917 = vmatpush1.bf16.msra.mxu0 0
      %1918 = vmatprep.subr.bf16.mxu0 0
      %1919 = vmatpush1.bf16.msra.mxu0 0
      %1920 = vmatprep.subr.bf16.mxu0 0
      %1921 = vmatpush1.bf16.msra.mxu0 0
      %1922 = vmatprep.subr.bf16.mxu0 0
      %1923 = vmatpush1.bf16.msra.mxu0 0
      %1924 = vmatprep.subr.bf16.mxu0 0
      %1925 = vmatpush1.bf16.msra.mxu0 0
      %1926 = vmatprep.subr.bf16.mxu0 0
      %1927 = vmatpush1.bf16.msra.mxu0 0
      %1928 = vmatprep.subr.bf16.mxu0 0
      %1929 = vmatpush1.bf16.msra.mxu0 0
      %1930 = vmatprep.subr.bf16.mxu0 0
      %1931 = vmatpush1.bf16.msra.mxu0 0
      %1932 = vmatprep.subr.bf16.mxu0 0
      %1933 = vmatpush1.bf16.msra.mxu0 0
      %1934 = vmatprep.subr.bf16.mxu0 0
      %1935 = vmatpush1.bf16.msra.mxu0 0
      %1936 = vmatprep.mubr.bf16.mxu0 0
      %1937 = vmatmul.mubr.bf16.gmra.mrb[0].mxu0 %v1899
      %v1938 = vpop.f32.mrb[0].mxu0
      %v1939 = vadd.f32 0.0, %v1938
      %v1940 = vpop.f32.mrb[0].mxu0
      %v1941 = vpop.f32.mrb[0].mxu0
      %v1942 = vpop.f32.mrb[0].mxu0
      %1943 = vdwg.mxu0
      %1945 = vrot.lane.b32.xlu0 %v1939, 24
      %v1946 = vpop.permute.xlu0 %1945
      %1948 = vst.msk [vmem:[#allocation2 + $0x10] sm:$0xff] %vm1037, %v1946
      %v1949 = vrot.slane %v572, 4
      %1950 = vrot.lane.b32.xlu0 %v1949, 96
      %v1951 = vpop.permute.xlu0 %1950
      %v1953 = vsel %vm582, %v1949, 0
      %v1956 = vsel %vm582, %v1951, 0
      %1958 = vmatprep.subr.bf16.mxu0 0
      %1959 = vmatpush1.bf16.xpose.msra.mxu0 %v1956
      %1960 = vmatprep.subr.bf16.mxu0 0
      %1961 = vmatpush1.bf16.xpose.msra.mxu0 0
      %1962 = vmatprep.subr.bf16.mxu0 0
      %1963 = vmatpush1.bf16.xpose.msra.mxu0 0
      %1964 = vmatprep.subr.bf16.mxu0 0
      %1965 = vmatpush1.bf16.xpose.msra.mxu0 0
      %1966 = vmatprep.subr.bf16.mxu0 0
      %1967 = vmatpush1.bf16.xpose.msra.mxu0 0
      %1968 = vmatprep.subr.bf16.mxu0 0
      %1969 = vmatpush1.bf16.xpose.msra.mxu0 0
      %1970 = vmatprep.subr.bf16.mxu0 0
      %1971 = vmatpush1.bf16.xpose.msra.mxu0 0
      %1972 = vmatprep.subr.bf16.mxu0 0
      %1973 = vmatpush1.bf16.xpose.msra.mxu0 0
      %1974 = vmatprep.subr.bf16.mxu0 0
      %1975 = vmatpush1.bf16.xpose.msra.mxu0 0
      %1976 = vmatprep.subr.bf16.mxu0 0
      %1977 = vmatpush1.bf16.xpose.msra.mxu0 0
      %1978 = vmatprep.subr.bf16.mxu0 0
      %1979 = vmatpush1.bf16.xpose.msra.mxu0 0
      %1980 = vmatprep.subr.bf16.mxu0 0
      %1981 = vmatpush1.bf16.xpose.msra.mxu0 0
      %1982 = vmatprep.subr.bf16.mxu0 0
      %1983 = vmatpush1.bf16.xpose.msra.mxu0 0
      %1984 = vmatprep.subr.bf16.mxu0 0
      %1985 = vmatpush1.bf16.xpose.msra.mxu0 0
      %1986 = vmatprep.subr.bf16.mxu0 0
      %1987 = vmatpush1.bf16.xpose.msra.mxu0 0
      %1988 = vmatprep.subr.bf16.mxu0 0
      %1989 = vmatpush1.bf16.xpose.msra.mxu0 0
      %1990 = vmatprep.mubr.bf16.mxu0 0
      %1991 = vmatmul.mubr.bf16.gmra.mrb[0].mxu0 %v1953
      %v1992 = vpop.f32.mrb[0].mxu0
      %v1993 = vadd.f32 %v578, %v1992
      %v1994 = vpop.f32.mrb[0].mxu0
      %v1995 = vpop.f32.mrb[0].mxu0
      %v1996 = vpop.f32.mrb[0].mxu0
      %1997 = vdwg.mxu0
      %v1998 = vsel %vm582, %v1993, -inf
      %1999 = vmax.xlane.f32.xlu0 %v1998
      %v2000 = vpop.xlane.xlu0 %1999
      %v2001 = vsub.f32 %v1993, %v2000
      %v2002 = vmul.f32 %v2001, 1.442695
      %v2003 = vpow.pop %v2002
      %v2004 = vsel %vm582, %v2003, 0.0
      %2005 = vadd.xlane.f32.xlu0 %v2004
      %v2006 = vpop.xlane.xlu0 %2005
      %v2007 = vrcp.pop %v2006
      %v2008 = vmul.f32 %v2003, %v2007
      %v2009 = vpack.c.bf16 %v2008, %v2008
      %2010 = vrot.lane.b32.xlu0 %v1949, 64
      %v2011 = vpop.permute.xlu0 %2010
      %v2013 = vsel %vm582, %v2009, 0
      %v2016 = vsel %vm646, %v2011, 0
      %2018 = vmatprep.subr.bf16.mxu0 0
      %2019 = vmatpush1.bf16.msra.mxu0 %v2016
      %2020 = vmatprep.subr.bf16.mxu0 0
      %2021 = vmatpush1.bf16.msra.mxu0 0
      %2022 = vmatprep.subr.bf16.mxu0 0
      %2023 = vmatpush1.bf16.msra.mxu0 0
      %2024 = vmatprep.subr.bf16.mxu0 0
      %2025 = vmatpush1.bf16.msra.mxu0 0
      %2026 = vmatprep.subr.bf16.mxu0 0
      %2027 = vmatpush1.bf16.msra.mxu0 0
      %2028 = vmatprep.subr.bf16.mxu0 0
      %2029 = vmatpush1.bf16.msra.mxu0 0
      %2030 = vmatprep.subr.bf16.mxu0 0
      %2031 = vmatpush1.bf16.msra.mxu0 0
      %2032 = vmatprep.subr.bf16.mxu0 0
      %2033 = vmatpush1.bf16.msra.mxu0 0
      %2034 = vmatprep.subr.bf16.mxu0 0
      %2035 = vmatpush1.bf16.msra.mxu0 0
      %2036 = vmatprep.subr.bf16.mxu0 0
      %2037 = vmatpush1.bf16.msra.mxu0 0
      %2038 = vmatprep.subr.bf16.mxu0 0
      %2039 = vmatpush1.bf16.msra.mxu0 0
      %2040 = vmatprep.subr.bf16.mxu0 0
      %2041 = vmatpush1.bf16.msra.mxu0 0
      %2042 = vmatprep.subr.bf16.mxu0 0
      %2043 = vmatpush1.bf16.msra.mxu0 0
      %2044 = vmatprep.subr.bf16.mxu0 0
      %2045 = vmatpush1.bf16.msra.mxu0 0
      %2046 = vmatprep.subr.bf16.mxu0 0
      %2047 = vmatpush1.bf16.msra.mxu0 0
      %2048 = vmatprep.subr.bf16.mxu0 0
      %2049 = vmatpush1.bf16.msra.mxu0 0
      %2050 = vmatprep.mubr.bf16.mxu0 0
      %2051 = vmatmul.mubr.bf16.gmra.mrb[0].mxu0 %v2013
      %v2052 = vpop.f32.mrb[0].mxu0
      %v2053 = vadd.f32 0.0, %v2052
      %v2054 = vpop.f32.mrb[0].mxu0
      %v2055 = vpop.f32.mrb[0].mxu0
      %v2056 = vpop.f32.mrb[0].mxu0
      %2057 = vdwg.mxu0
      %2058 = vst.msk [vmem:[#allocation2 + $0x18] sm:$0xff] %vm582, %v2053
      %2059 = vrot.lane.b32.xlu0 %v1949, 120
      %v2060 = vpop.permute.xlu0 %2059
      %2061 = vrot.lane.b32.xlu0 %v1949, 88
      %v2062 = vpop.permute.xlu0 %2061
      %v2064 = vsel %vm582, %v2060, 0
      %v2067 = vsel %vm582, %v2062, 0
      %2069 = vmatprep.subr.bf16.mxu0 0
      %2070 = vmatpush1.bf16.xpose.msra.mxu0 %v2067
      %2071 = vmatprep.subr.bf16.mxu0 0
      %2072 = vmatpush1.bf16.xpose.msra.mxu0 0
      %2073 = vmatprep.subr.bf16.mxu0 0
      %2074 = vmatpush1.bf16.xpose.msra.mxu0 0
      %2075 = vmatprep.subr.bf16.mxu0 0
      %2076 = vmatpush1.bf16.xpose.msra.mxu0 0
      %2077 = vmatprep.subr.bf16.mxu0 0
      %2078 = vmatpush1.bf16.xpose.msra.mxu0 0
      %2079 = vmatprep.subr.bf16.mxu0 0
      %2080 = vmatpush1.bf16.xpose.msra.mxu0 0
      %2081 = vmatprep.subr.bf16.mxu0 0
      %2082 = vmatpush1.bf16.xpose.msra.mxu0 0
      %2083 = vmatprep.subr.bf16.mxu0 0
      %2084 = vmatpush1.bf16.xpose.msra.mxu0 0
      %2085 = vmatprep.subr.bf16.mxu0 0
      %2086 = vmatpush1.bf16.xpose.msra.mxu0 0
      %2087 = vmatprep.subr.bf16.mxu0 0
      %2088 = vmatpush1.bf16.xpose.msra.mxu0 0
      %2089 = vmatprep.subr.bf16.mxu0 0
      %2090 = vmatpush1.bf16.xpose.msra.mxu0 0
      %2091 = vmatprep.subr.bf16.mxu0 0
      %2092 = vmatpush1.bf16.xpose.msra.mxu0 0
      %2093 = vmatprep.subr.bf16.mxu0 0
      %2094 = vmatpush1.bf16.xpose.msra.mxu0 0
      %2095 = vmatprep.subr.bf16.mxu0 0
      %2096 = vmatpush1.bf16.xpose.msra.mxu0 0
      %2097 = vmatprep.subr.bf16.mxu0 0
      %2098 = vmatpush1.bf16.xpose.msra.mxu0 0
      %2099 = vmatprep.subr.bf16.mxu0 0
      %2100 = vmatpush1.bf16.xpose.msra.mxu0 0
      %2101 = vmatprep.mubr.bf16.mxu0 0
      %2102 = vmatmul.mubr.bf16.gmra.mrb[0].mxu0 %v2064
      %v2103 = vpop.f32.mrb[0].mxu0
      %v2104 = vadd.f32 %v578, %v2103
      %v2105 = vpop.f32.mrb[0].mxu0
      %v2106 = vpop.f32.mrb[0].mxu0
      %v2107 = vpop.f32.mrb[0].mxu0
      %2108 = vdwg.mxu0
      %v2109 = vsel %vm582, %v2104, -inf
      %2110 = vmax.xlane.f32.xlu0 %v2109
      %v2111 = vpop.xlane.xlu0 %2110
      %v2112 = vsub.f32 %v2104, %v2111
      %v2113 = vmul.f32 %v2112, 1.442695
      %v2114 = vpow.pop %v2113
      %v2115 = vsel %vm582, %v2114, 0.0
      %2116 = vadd.xlane.f32.xlu0 %v2115
      %v2117 = vpop.xlane.xlu0 %2116
      %v2118 = vrcp.pop %v2117
      %v2119 = vmul.f32 %v2114, %v2118
      %v2120 = vpack.c.bf16 %v2119, %v2119
      %2121 = vrot.lane.b32.xlu0 %v1949, 56
      %v2122 = vpop.permute.xlu0 %2121
      %v2124 = vsel %vm582, %v2120, 0
      %v2127 = vsel %vm646, %v2122, 0
      %2129 = vmatprep.subr.bf16.mxu0 0
      %2130 = vmatpush1.bf16.msra.mxu0 %v2127
      %2131 = vmatprep.subr.bf16.mxu0 0
      %2132 = vmatpush1.bf16.msra.mxu0 0
      %2133 = vmatprep.subr.bf16.mxu0 0
      %2134 = vmatpush1.bf16.msra.mxu0 0
      %2135 = vmatprep.subr.bf16.mxu0 0
      %2136 = vmatpush1.bf16.msra.mxu0 0
      %2137 = vmatprep.subr.bf16.mxu0 0
      %2138 = vmatpush1.bf16.msra.mxu0 0
      %2139 = vmatprep.subr.bf16.mxu0 0
      %2140 = vmatpush1.bf16.msra.mxu0 0
      %2141 = vmatprep.subr.bf16.mxu0 0
      %2142 = vmatpush1.bf16.msra.mxu0 0
      %2143 = vmatprep.subr.bf16.mxu0 0
      %2144 = vmatpush1.bf16.msra.mxu0 0
      %2145 = vmatprep.subr.bf16.mxu0 0
      %2146 = vmatpush1.bf16.msra.mxu0 0
      %2147 = vmatprep.subr.bf16.mxu0 0
      %2148 = vmatpush1.bf16.msra.mxu0 0
      %2149 = vmatprep.subr.bf16.mxu0 0
      %2150 = vmatpush1.bf16.msra.mxu0 0
      %2151 = vmatprep.subr.bf16.mxu0 0
      %2152 = vmatpush1.bf16.msra.mxu0 0
      %2153 = vmatprep.subr.bf16.mxu0 0
      %2154 = vmatpush1.bf16.msra.mxu0 0
      %2155 = vmatprep.subr.bf16.mxu0 0
      %2156 = vmatpush1.bf16.msra.mxu0 0
      %2157 = vmatprep.subr.bf16.mxu0 0
      %2158 = vmatpush1.bf16.msra.mxu0 0
      %2159 = vmatprep.subr.bf16.mxu0 0
      %2160 = vmatpush1.bf16.msra.mxu0 0
      %2161 = vmatprep.mubr.bf16.mxu0 0
      %2162 = vmatmul.mubr.bf16.gmra.mrb[0].mxu0 %v2124
      %v2163 = vpop.f32.mrb[0].mxu0
      %v2164 = vadd.f32 0.0, %v2163
      %v2165 = vpop.f32.mrb[0].mxu0
      %v2166 = vpop.f32.mrb[0].mxu0
      %v2167 = vpop.f32.mrb[0].mxu0
      %2168 = vdwg.mxu0
      %2170 = vrot.lane.b32.xlu0 %v2164, 8
      %v2171 = vpop.permute.xlu0 %2170
      %2173 = vst.msk [vmem:[#allocation2 + $0x18] sm:$0xff] %vm805, %v2171
      %2174 = vrot.lane.b32.xlu0 %v1949, 112
      %v2175 = vpop.permute.xlu0 %2174
      %2176 = vrot.lane.b32.xlu0 %v1949, 80
      %v2177 = vpop.permute.xlu0 %2176
      %v2179 = vsel %vm582, %v2175, 0
      %v2182 = vsel %vm582, %v2177, 0
      %2184 = vmatprep.subr.bf16.mxu0 0
      %2185 = vmatpush1.bf16.xpose.msra.mxu0 %v2182
      %2186 = vmatprep.subr.bf16.mxu0 0
      %2187 = vmatpush1.bf16.xpose.msra.mxu0 0
      %2188 = vmatprep.subr.bf16.mxu0 0
      %2189 = vmatpush1.bf16.xpose.msra.mxu0 0
      %2190 = vmatprep.subr.bf16.mxu0 0
      %2191 = vmatpush1.bf16.xpose.msra.mxu0 0
      %2192 = vmatprep.subr.bf16.mxu0 0
      %2193 = vmatpush1.bf16.xpose.msra.mxu0 0
      %2194 = vmatprep.subr.bf16.mxu0 0
      %2195 = vmatpush1.bf16.xpose.msra.mxu0 0
      %2196 = vmatprep.subr.bf16.mxu0 0
      %2197 = vmatpush1.bf16.xpose.msra.mxu0 0
      %2198 = vmatprep.subr.bf16.mxu0 0
      %2199 = vmatpush1.bf16.xpose.msra.mxu0 0
      %2200 = vmatprep.subr.bf16.mxu0 0
      %2201 = vmatpush1.bf16.xpose.msra.mxu0 0
      %2202 = vmatprep.subr.bf16.mxu0 0
      %2203 = vmatpush1.bf16.xpose.msra.mxu0 0
      %2204 = vmatprep.subr.bf16.mxu0 0
      %2205 = vmatpush1.bf16.xpose.msra.mxu0 0
      %2206 = vmatprep.subr.bf16.mxu0 0
      %2207 = vmatpush1.bf16.xpose.msra.mxu0 0
      %2208 = vmatprep.subr.bf16.mxu0 0
      %2209 = vmatpush1.bf16.xpose.msra.mxu0 0
      %2210 = vmatprep.subr.bf16.mxu0 0
      %2211 = vmatpush1.bf16.xpose.msra.mxu0 0
      %2212 = vmatprep.subr.bf16.mxu0 0
      %2213 = vmatpush1.bf16.xpose.msra.mxu0 0
      %2214 = vmatprep.subr.bf16.mxu0 0
      %2215 = vmatpush1.bf16.xpose.msra.mxu0 0
      %2216 = vmatprep.mubr.bf16.mxu0 0
      %2217 = vmatmul.mubr.bf16.gmra.mrb[0].mxu0 %v2179
      %v2218 = vpop.f32.mrb[0].mxu0
      %v2219 = vadd.f32 %v578, %v2218
      %v2220 = vpop.f32.mrb[0].mxu0
      %v2221 = vpop.f32.mrb[0].mxu0
      %v2222 = vpop.f32.mrb[0].mxu0
      %2223 = vdwg.mxu0
      %v2224 = vsel %vm582, %v2219, -inf
      %2225 = vmax.xlane.f32.xlu0 %v2224
      %v2226 = vpop.xlane.xlu0 %2225
      %v2227 = vsub.f32 %v2219, %v2226
      %v2228 = vmul.f32 %v2227, 1.442695
      %v2229 = vpow.pop %v2228
      %v2230 = vsel %vm582, %v2229, 0.0
      %2231 = vadd.xlane.f32.xlu0 %v2230
      %v2232 = vpop.xlane.xlu0 %2231
      %v2233 = vrcp.pop %v2232
      %v2234 = vmul.f32 %v2229, %v2233
      %v2235 = vpack.c.bf16 %v2234, %v2234
      %2236 = vrot.lane.b32.xlu0 %v1949, 48
      %v2237 = vpop.permute.xlu0 %2236
      %v2239 = vsel %vm582, %v2235, 0
      %v2242 = vsel %vm646, %v2237, 0
      %2244 = vmatprep.subr.bf16.mxu0 0
      %2245 = vmatpush1.bf16.msra.mxu0 %v2242
      %2246 = vmatprep.subr.bf16.mxu0 0
      %2247 = vmatpush1.bf16.msra.mxu0 0
      %2248 = vmatprep.subr.bf16.mxu0 0
      %2249 = vmatpush1.bf16.msra.mxu0 0
      %2250 = vmatprep.subr.bf16.mxu0 0
      %2251 = vmatpush1.bf16.msra.mxu0 0
      %2252 = vmatprep.subr.bf16.mxu0 0
      %2253 = vmatpush1.bf16.msra.mxu0 0
      %2254 = vmatprep.subr.bf16.mxu0 0
      %2255 = vmatpush1.bf16.msra.mxu0 0
      %2256 = vmatprep.subr.bf16.mxu0 0
      %2257 = vmatpush1.bf16.msra.mxu0 0
      %2258 = vmatprep.subr.bf16.mxu0 0
      %2259 = vmatpush1.bf16.msra.mxu0 0
      %2260 = vmatprep.subr.bf16.mxu0 0
      %2261 = vmatpush1.bf16.msra.mxu0 0
      %2262 = vmatprep.subr.bf16.mxu0 0
      %2263 = vmatpush1.bf16.msra.mxu0 0
      %2264 = vmatprep.subr.bf16.mxu0 0
      %2265 = vmatpush1.bf16.msra.mxu0 0
      %2266 = vmatprep.subr.bf16.mxu0 0
      %2267 = vmatpush1.bf16.msra.mxu0 0
      %2268 = vmatprep.subr.bf16.mxu0 0
      %2269 = vmatpush1.bf16.msra.mxu0 0
      %2270 = vmatprep.subr.bf16.mxu0 0
      %2271 = vmatpush1.bf16.msra.mxu0 0
      %2272 = vmatprep.subr.bf16.mxu0 0
      %2273 = vmatpush1.bf16.msra.mxu0 0
      %2274 = vmatprep.subr.bf16.mxu0 0
      %2275 = vmatpush1.bf16.msra.mxu0 0
      %2276 = vmatprep.mubr.bf16.mxu0 0
      %2277 = vmatmul.mubr.bf16.gmra.mrb[0].mxu0 %v2239
      %v2278 = vpop.f32.mrb[0].mxu0
      %v2279 = vadd.f32 0.0, %v2278
      %v2280 = vpop.f32.mrb[0].mxu0
      %v2281 = vpop.f32.mrb[0].mxu0
      %v2282 = vpop.f32.mrb[0].mxu0
      %2283 = vdwg.mxu0
      %2285 = vrot.lane.b32.xlu0 %v2279, 16
      %v2286 = vpop.permute.xlu0 %2285
      %2288 = vst.msk [vmem:[#allocation2 + $0x18] sm:$0xff] %vm921, %v2286
      %2289 = vrot.lane.b32.xlu0 %v1949, 104
      %v2290 = vpop.permute.xlu0 %2289
      %2291 = vrot.lane.b32.xlu0 %v1949, 72
      %v2292 = vpop.permute.xlu0 %2291
      %v2294 = vsel %vm582, %v2290, 0
      %v2297 = vsel %vm582, %v2292, 0
      %2299 = vmatprep.subr.bf16.mxu0 0
      %2300 = vmatpush1.bf16.xpose.msra.mxu0 %v2297
      %2301 = vmatprep.subr.bf16.mxu0 0
      %2302 = vmatpush1.bf16.xpose.msra.mxu0 0
      %2303 = vmatprep.subr.bf16.mxu0 0
      %2304 = vmatpush1.bf16.xpose.msra.mxu0 0
      %2305 = vmatprep.subr.bf16.mxu0 0
      %2306 = vmatpush1.bf16.xpose.msra.mxu0 0
      %2307 = vmatprep.subr.bf16.mxu0 0
      %2308 = vmatpush1.bf16.xpose.msra.mxu0 0
      %2309 = vmatprep.subr.bf16.mxu0 0
      %2310 = vmatpush1.bf16.xpose.msra.mxu0 0
      %2311 = vmatprep.subr.bf16.mxu0 0
      %2312 = vmatpush1.bf16.xpose.msra.mxu0 0
      %2313 = vmatprep.subr.bf16.mxu0 0
      %2314 = vmatpush1.bf16.xpose.msra.mxu0 0
      %2315 = vmatprep.subr.bf16.mxu0 0
      %2316 = vmatpush1.bf16.xpose.msra.mxu0 0
      %2317 = vmatprep.subr.bf16.mxu0 0
      %2318 = vmatpush1.bf16.xpose.msra.mxu0 0
      %2319 = vmatprep.subr.bf16.mxu0 0
      %2320 = vmatpush1.bf16.xpose.msra.mxu0 0
      %2321 = vmatprep.subr.bf16.mxu0 0
      %2322 = vmatpush1.bf16.xpose.msra.mxu0 0
      %2323 = vmatprep.subr.bf16.mxu0 0
      %2324 = vmatpush1.bf16.xpose.msra.mxu0 0
      %2325 = vmatprep.subr.bf16.mxu0 0
      %2326 = vmatpush1.bf16.xpose.msra.mxu0 0
      %2327 = vmatprep.subr.bf16.mxu0 0
      %2328 = vmatpush1.bf16.xpose.msra.mxu0 0
      %2329 = vmatprep.subr.bf16.mxu0 0
      %2330 = vmatpush1.bf16.xpose.msra.mxu0 0
      %2331 = vmatprep.mubr.bf16.mxu0 0
      %2332 = vmatmul.mubr.bf16.gmra.mrb[0].mxu0 %v2294
      %v2333 = vpop.f32.mrb[0].mxu0
      %v2334 = vadd.f32 %v578, %v2333
      %v2335 = vpop.f32.mrb[0].mxu0
      %v2336 = vpop.f32.mrb[0].mxu0
      %v2337 = vpop.f32.mrb[0].mxu0
      %2338 = vdwg.mxu0
      %v2339 = vsel %vm582, %v2334, -inf
      %2340 = vmax.xlane.f32.xlu0 %v2339
      %v2341 = vpop.xlane.xlu0 %2340
      %v2342 = vsub.f32 %v2334, %v2341
      %v2343 = vmul.f32 %v2342, 1.442695
      %v2344 = vpow.pop %v2343
      %v2345 = vsel %vm582, %v2344, 0.0
      %2346 = vadd.xlane.f32.xlu0 %v2345
      %v2347 = vpop.xlane.xlu0 %2346
      %v2348 = vrcp.pop %v2347
      %v2349 = vmul.f32 %v2344, %v2348
      %v2350 = vpack.c.bf16 %v2349, %v2349
      %2351 = vrot.lane.b32.xlu0 %v1949, 40
      %v2352 = vpop.permute.xlu0 %2351
      %v2354 = vsel %vm582, %v2350, 0
      %v2357 = vsel %vm646, %v2352, 0
      %2359 = vmatprep.subr.bf16.mxu0 0
      %2360 = vmatpush1.bf16.msra.mxu0 %v2357
      %2361 = vmatprep.subr.bf16.mxu0 0
      %2362 = vmatpush1.bf16.msra.mxu0 0
      %2363 = vmatprep.subr.bf16.mxu0 0
      %2364 = vmatpush1.bf16.msra.mxu0 0
      %2365 = vmatprep.subr.bf16.mxu0 0
      %2366 = vmatpush1.bf16.msra.mxu0 0
      %2367 = vmatprep.subr.bf16.mxu0 0
      %2368 = vmatpush1.bf16.msra.mxu0 0
      %2369 = vmatprep.subr.bf16.mxu0 0
      %2370 = vmatpush1.bf16.msra.mxu0 0
      %2371 = vmatprep.subr.bf16.mxu0 0
      %2372 = vmatpush1.bf16.msra.mxu0 0
      %2373 = vmatprep.subr.bf16.mxu0 0
      %2374 = vmatpush1.bf16.msra.mxu0 0
      %2375 = vmatprep.subr.bf16.mxu0 0
      %2376 = vmatpush1.bf16.msra.mxu0 0
      %2377 = vmatprep.subr.bf16.mxu0 0
      %2378 = vmatpush1.bf16.msra.mxu0 0
      %2379 = vmatprep.subr.bf16.mxu0 0
      %2380 = vmatpush1.bf16.msra.mxu0 0
      %2381 = vmatprep.subr.bf16.mxu0 0
      %2382 = vmatpush1.bf16.msra.mxu0 0
      %2383 = vmatprep.subr.bf16.mxu0 0
      %2384 = vmatpush1.bf16.msra.mxu0 0
      %2385 = vmatprep.subr.bf16.mxu0 0
      %2386 = vmatpush1.bf16.msra.mxu0 0
      %2387 = vmatprep.subr.bf16.mxu0 0
      %2388 = vmatpush1.bf16.msra.mxu0 0
      %2389 = vmatprep.subr.bf16.mxu0 0
      %2390 = vmatpush1.bf16.msra.mxu0 0
      %2391 = vmatprep.mubr.bf16.mxu0 0
      %2392 = vmatmul.mubr.bf16.gmra.mrb[0].mxu0 %v2354
      %v2393 = vpop.f32.mrb[0].mxu0
      %v2394 = vadd.f32 0.0, %v2393
      %v2395 = vpop.f32.mrb[0].mxu0
      %v2396 = vpop.f32.mrb[0].mxu0
      %v2397 = vpop.f32.mrb[0].mxu0
      %2398 = vdwg.mxu0
      %2400 = vrot.lane.b32.xlu0 %v2394, 24
      %v2401 = vpop.permute.xlu0 %2400
      %2403 = vst.msk [vmem:[#allocation2 + $0x18] sm:$0xff] %vm1037, %v2401
      %v2404 = vld [vmem:[#allocation2] sm:$0xff]
      %v2405 = vld [vmem:[#allocation2 + $0x8] sm:$0xff]
      %v2406 = vld [vmem:[#allocation2 + $0x10] sm:$0xff]
      %v2407 = vld [vmem:[#allocation2 + $0x18] sm:$0xff]
      %v2408 = vpack.c.bf16 %v2405, %v2404
      %v2409 = vpack.c.bf16 %v2407, %v2406
      %v2410 = vld [vmem:[%s4] sm:$0xf]
      %v2411 = vld [vmem:[%s4 + $0x4] sm:$0xf]
      %v2412 = vld [vmem:[%s4 + $0x8] sm:$0xf]
      %v2413 = vld [vmem:[%s4 + $0xc] sm:$0xf]
      %v2414 = vld [vmem:[%s5] sm:$0x1]
      %v2416 = vlaneseq
      %v2417 = vshrl.u32 %v2416, 7
      %v2418 = vsub.s32 0, %v2417
      %v2419 = vrot.slane %v2414, %v2418
      %v2425 = vunpack.c.l.b16 %v2410
      %v2426 = vunpack.c.l.b16 %v2411
      %v2427 = vunpack.c.l.b16 %v2412
      %v2428 = vunpack.c.l.b16 %v2413
      %v2429 = vpack.c.b16 %v2426, %v2425
      %v2430 = vpack.c.b16 %v2428, %v2427
      %v2434 = vsel %vm424, %v2408, 0
      %v2437 = vsel %vm424, %v2409, 0
      %2439 = vmatprep.subr.bf16.mxu0 0
      %2440 = vmatpush1.bf16.msra.mxu0 %v2429
      %2441 = vmatprep.subr.bf16.mxu0 0
      %2442 = vmatpush1.bf16.msra.mxu0 %v2430
      %2443 = vmatprep.subr.bf16.mxu0 0
      %2444 = vmatpush1.bf16.msra.mxu0 0
      %2445 = vmatprep.subr.bf16.mxu0 0
      %2446 = vmatpush1.bf16.msra.mxu0 0
      %2447 = vmatprep.subr.bf16.mxu0 0
      %2448 = vmatpush1.bf16.msra.mxu0 0
      %2449 = vmatprep.subr.bf16.mxu0 0
      %2450 = vmatpush1.bf16.msra.mxu0 0
      %2451 = vmatprep.subr.bf16.mxu0 0
      %2452 = vmatpush1.bf16.msra.mxu0 0
      %2453 = vmatprep.subr.bf16.mxu0 0
      %2454 = vmatpush1.bf16.msra.mxu0 0
      %2455 = vmatprep.subr.bf16.mxu0 0
      %2456 = vmatpush1.bf16.msra.mxu0 0
      %2457 = vmatprep.subr.bf16.mxu0 0
      %2458 = vmatpush1.bf16.msra.mxu0 0
      %2459 = vmatprep.subr.bf16.mxu0 0
      %2460 = vmatpush1.bf16.msra.mxu0 0
      %2461 = vmatprep.subr.bf16.mxu0 0
      %2462 = vmatpush1.bf16.msra.mxu0 0
      %2463 = vmatprep.subr.bf16.mxu0 0
      %2464 = vmatpush1.bf16.msra.mxu0 0
      %2465 = vmatprep.subr.bf16.mxu0 0
      %2466 = vmatpush1.bf16.msra.mxu0 0
      %2467 = vmatprep.subr.bf16.mxu0 0
      %2468 = vmatpush1.bf16.msra.mxu0 0
      %2469 = vmatprep.subr.bf16.mxu0 0
      %2470 = vmatpush1.bf16.msra.mxu0 0
      %2471 = vmatprep.mubr.bf16.mxu0 0
      %2472 = vmatmul.mubr.bf16.gmra.mrb[0].mxu0 %v2434
      %v2473 = vpop.f32.mrb[0].mxu0
      %v2474 = vadd.f32 %v2419, %v2473
      %v2475 = vpop.f32.mrb[0].mxu0
      %v2476 = vpop.f32.mrb[0].mxu0
      %v2477 = vadd.f32 %v2419, %v2476
      %v2478 = vpop.f32.mrb[0].mxu0
      %2479 = vmatprep.mubr.bf16.mxu0 0
      %2480 = vmatmul.mubr.bf16.gmra.mrb[0].mxu0 %v2437
      %v2481 = vpop.f32.mrb[0].mxu0
      %v2482 = vadd.f32 %v2419, %v2481
      %v2483 = vpop.f32.mrb[0].mxu0
      %v2484 = vpop.f32.mrb[0].mxu0
      %v2485 = vadd.f32 %v2419, %v2484
      %v2486 = vpop.f32.mrb[0].mxu0
      %2487 = vdwg.mxu0
      %v2488 = vadd.f32 %v2474, %v418
      %v2489 = vadd.f32 %v2477, %v419
      %v2490 = vadd.f32 %v2482, %v420
      %v2491 = vadd.f32 %v2485, %v421
      %v2492 = vld [vmem:[%s6] sm:$0x1]
      %v2493 = vld [vmem:[%s7] sm:$0x1]
      %v2494 = vsel %vm424, %v2488, 0.0
      %2495 = vadd.xlane.f32.xlu0 %v2494
      %v2496 = vpop.xlane.xlu0 %2495
      %v2497 = vsel %vm424, %v2489, 0.0
      %2498 = vadd.xlane.f32.xlu0 %v2497
      %v2499 = vpop.xlane.xlu0 %2498
      %v2500 = vsel %vm424, %v2490, 0.0
      %2501 = vadd.xlane.f32.xlu0 %v2500
      %v2502 = vpop.xlane.xlu0 %2501
      %v2503 = vsel %vm424, %v2491, 0.0
      %2504 = vadd.xlane.f32.xlu0 %v2503
      %v2505 = vpop.xlane.xlu0 %2504
      %v2506 = vmul.f32 %v2496, %v437
      %v2507 = vmul.f32 %v2499, %v437
      %v2508 = vmul.f32 %v2502, %v437
      %v2509 = vmul.f32 %v2505, %v437
      %v2510 = vsub.f32 %v2488, %v2506
      %v2511 = vsub.f32 %v2489, %v2507
      %v2512 = vsub.f32 %v2490, %v2508
      %v2513 = vsub.f32 %v2491, %v2509
      %v2514 = vmul.f32 %v2510, %v2510
      %v2515 = vmul.f32 %v2511, %v2511
      %v2516 = vmul.f32 %v2512, %v2512
      %v2517 = vmul.f32 %v2513, %v2513
      %v2518 = vsel %vm424, %v2514, 0.0
      %2519 = vadd.xlane.f32.xlu0 %v2518
      %v2520 = vpop.xlane.xlu0 %2519
      %v2521 = vsel %vm424, %v2515, 0.0
      %2522 = vadd.xlane.f32.xlu0 %v2521
      %v2523 = vpop.xlane.xlu0 %2522
      %v2524 = vsel %vm424, %v2516, 0.0
      %2525 = vadd.xlane.f32.xlu0 %v2524
      %v2526 = vpop.xlane.xlu0 %2525
      %v2527 = vsel %vm424, %v2517, 0.0
      %2528 = vadd.xlane.f32.xlu0 %v2527
      %v2529 = vpop.xlane.xlu0 %2528
      %v2530 = vmul.f32 %v2520, %v437
      %v2531 = vmul.f32 %v2523, %v437
      %v2532 = vmul.f32 %v2526, %v437
      %v2533 = vmul.f32 %v2529, %v437
      %v2534 = vadd.f32 %v2530, 1e-05
      %v2535 = vadd.f32 %v2531, 1e-05
      %v2536 = vadd.f32 %v2532, 1e-05
      %v2537 = vadd.f32 %v2533, 1e-05
      %v2538 = vrsqrt.pop %v2534
      %v2539 = vrsqrt.pop %v2535
      %v2540 = vrsqrt.pop %v2536
      %v2541 = vrsqrt.pop %v2537
      %v2542 = vmul.f32 %v2510, %v2538
      %v2543 = vmul.f32 %v2511, %v2539
      %v2544 = vmul.f32 %v2512, %v2540
      %v2545 = vmul.f32 %v2513, %v2541
      %v2547 = vlaneseq
      %v2548 = vshrl.u32 %v2547, 7
      %v2549 = vsub.s32 0, %v2548
      %v2550 = vrot.slane %v2492, %v2549
      %v2552 = vmul.f32 %v2542, %v2550
      %v2553 = vmul.f32 %v2543, %v2550
      %v2554 = vmul.f32 %v2544, %v2550
      %v2555 = vmul.f32 %v2545, %v2550
      %v2557 = vlaneseq
      %v2558 = vshrl.u32 %v2557, 7
      %v2559 = vsub.s32 0, %v2558
      %v2560 = vrot.slane %v2493, %v2559
      %v2562 = vadd.f32 %v2552, %v2560
      %v2563 = vadd.f32 %v2553, %v2560
      %v2564 = vadd.f32 %v2554, %v2560
      %v2565 = vadd.f32 %v2555, %v2560
      %v2566 = vpack.c.bf16 %v2563, %v2562
      %v2567 = vpack.c.bf16 %v2565, %v2564
      %v2568 = vld [vmem:[%s8] sm:$0xf]
      %v2569 = vld [vmem:[%s8 + $0x4] sm:$0xf]
      %v2570 = vld [vmem:[%s8 + $0x8] sm:$0xf]
      %v2571 = vld [vmem:[%s8 + $0xc] sm:$0xf]
      %v2572 = vld [vmem:[%s9] sm:$0x1]
      %v2574 = vlaneseq
      %v2575 = vshrl.u32 %v2574, 7
      %v2576 = vsub.s32 0, %v2575
      %v2577 = vrot.slane %v2572, %v2576
      %v2583 = vunpack.c.l.b16 %v2568
      %v2584 = vunpack.c.l.b16 %v2569
      %v2585 = vunpack.c.l.b16 %v2570
      %v2586 = vunpack.c.l.b16 %v2571
      %v2587 = vpack.c.b16 %v2584, %v2583
      %v2588 = vpack.c.b16 %v2586, %v2585
      %v2592 = vsel %vm424, %v2566, 0
      %v2595 = vsel %vm424, %v2567, 0
      %2597 = vmatprep.subr.bf16.mxu0 0
      %2598 = vmatpush1.bf16.msra.mxu0 %v2587
      %2599 = vmatprep.subr.bf16.mxu0 0
      %2600 = vmatpush1.bf16.msra.mxu0 %v2588
      %2601 = vmatprep.subr.bf16.mxu0 0
      %2602 = vmatpush1.bf16.msra.mxu0 0
      %2603 = vmatprep.subr.bf16.mxu0 0
      %2604 = vmatpush1.bf16.msra.mxu0 0
      %2605 = vmatprep.subr.bf16.mxu0 0
      %2606 = vmatpush1.bf16.msra.mxu0 0
      %2607 = vmatprep.subr.bf16.mxu0 0
      %2608 = vmatpush1.bf16.msra.mxu0 0
      %2609 = vmatprep.subr.bf16.mxu0 0
      %2610 = vmatpush1.bf16.msra.mxu0 0
      %2611 = vmatprep.subr.bf16.mxu0 0
      %2612 = vmatpush1.bf16.msra.mxu0 0
      %2613 = vmatprep.subr.bf16.mxu0 0
      %2614 = vmatpush1.bf16.msra.mxu0 0
      %2615 = vmatprep.subr.bf16.mxu0 0
      %2616 = vmatpush1.bf16.msra.mxu0 0
      %2617 = vmatprep.subr.bf16.mxu0 0
      %2618 = vmatpush1.bf16.msra.mxu0 0
      %2619 = vmatprep.subr.bf16.mxu0 0
      %2620 = vmatpush1.bf16.msra.mxu0 0
      %2621 = vmatprep.subr.bf16.mxu0 0
      %2622 = vmatpush1.bf16.msra.mxu0 0
      %2623 = vmatprep.subr.bf16.mxu0 0
      %2624 = vmatpush1.bf16.msra.mxu0 0
      %2625 = vmatprep.subr.bf16.mxu0 0
      %2626 = vmatpush1.bf16.msra.mxu0 0
      %2627 = vmatprep.subr.bf16.mxu0 0
      %2628 = vmatpush1.bf16.msra.mxu0 0
      %2629 = vmatprep.mubr.bf16.mxu0 0
      %2630 = vmatmul.mubr.bf16.gmra.mrb[0].mxu0 %v2592
      %v2631 = vpop.f32.mrb[0].mxu0
      %v2632 = vadd.f32 %v2577, %v2631
      %v2633 = vpop.f32.mrb[0].mxu0
      %v2634 = vpop.f32.mrb[0].mxu0
      %v2635 = vadd.f32 %v2577, %v2634
      %v2636 = vpop.f32.mrb[0].mxu0
      %2637 = vmatprep.mubr.bf16.mxu0 0
      %2638 = vmatmul.mubr.bf16.gmra.mrb[0].mxu0 %v2595
      %v2639 = vpop.f32.mrb[0].mxu0
      %v2640 = vadd.f32 %v2577, %v2639
      %v2641 = vpop.f32.mrb[0].mxu0
      %v2642 = vpop.f32.mrb[0].mxu0
      %v2643 = vadd.f32 %v2577, %v2642
      %v2644 = vpop.f32.mrb[0].mxu0
      %2645 = vdwg.mxu0
      %v2646 = vmul.f32 %v2632, 0.5
      %v2647 = vmul.f32 %v2635, 0.5
      %v2648 = vmul.f32 %v2640, 0.5
      %v2649 = vmul.f32 %v2643, 0.5
      %v2650 = vmul.f32 %v2632, 0.044715
      %v2651 = vmul.f32 %v2635, 0.044715
      %v2652 = vmul.f32 %v2640, 0.044715
      %v2653 = vmul.f32 %v2643, 0.044715
      %v2654 = vmul.f32 %v2650, %v2632
      %v2655 = vmul.f32 %v2651, %v2635
      %v2656 = vmul.f32 %v2652, %v2640
      %v2657 = vmul.f32 %v2653, %v2643
      %v2658 = vmul.f32 %v2654, %v2632
      %v2659 = vmul.f32 %v2655, %v2635
      %v2660 = vmul.f32 %v2656, %v2640
      %v2661 = vmul.f32 %v2657, %v2643
      %v2662 = vadd.f32 %v2632, %v2658
      %v2663 = vadd.f32 %v2635, %v2659
      %v2664 = vadd.f32 %v2640, %v2660
      %v2665 = vadd.f32 %v2643, %v2661
      %v2666 = vmul.f32 %v2662, 0.7978846
      %v2667 = vmul.f32 %v2663, 0.7978846
      %v2668 = vmul.f32 %v2664, 0.7978846
      %v2669 = vmul.f32 %v2665, 0.7978846
      %v2670 = vtanh.pop %v2666
      %v2671 = vtanh.pop %v2667
      %v2672 = vtanh.pop %v2668
      %v2673 = vtanh.pop %v2669
      %v2674 = vadd.f32 %v2670, 1.0
      %v2675 = vadd.f32 %v2671, 1.0
      %v2676 = vadd.f32 %v2672, 1.0
      %v2677 = vadd.f32 %v2673, 1.0
      %v2678 = vmul.f32 %v2646, %v2674
      %v2679 = vmul.f32 %v2647, %v2675
      %v2680 = vmul.f32 %v2648, %v2676
      %v2681 = vmul.f32 %v2649, %v2677
      %v2682 = vpack.c.bf16 %v2679, %v2678
      %v2683 = vpack.c.bf16 %v2681, %v2680
      %v2684 = vld [vmem:[%s10] sm:$0xf]
      %v2685 = vld [vmem:[%s10 + $0x4] sm:$0xf]
      %v2686 = vld [vmem:[%s10 + $0x8] sm:$0xf]
      %v2687 = vld [vmem:[%s10 + $0xc] sm:$0xf]
      %v2688 = vld [vmem:[%s10 + $0x10] sm:$0xf]
      %v2689 = vld [vmem:[%s10 + $0x14] sm:$0xf]
      %v2690 = vld [vmem:[%s10 + $0x18] sm:$0xf]
      %v2691 = vld [vmem:[%s10 + $0x1c] sm:$0xf]
      %v2692 = vld [vmem:[%s10 + $0x20] sm:$0xf]
      %v2693 = vld [vmem:[%s10 + $0x24] sm:$0xf]
      %v2694 = vld [vmem:[%s10 + $0x28] sm:$0xf]
      %v2695 = vld [vmem:[%s10 + $0x2c] sm:$0xf]
      %v2696 = vld [vmem:[%s10 + $0x30] sm:$0xf]
      %v2697 = vld [vmem:[%s10 + $0x34] sm:$0xf]
      %v2698 = vld [vmem:[%s10 + $0x38] sm:$0xf]
      %v2699 = vld [vmem:[%s10 + $0x3c] sm:$0xf]
      %v2700 = vld [vmem:[%s11] sm:$0x1]
      %v2702 = vlaneseq
      %v2703 = vshrl.u32 %v2702, 7
      %v2704 = vsub.s32 0, %v2703
      %v2705 = vrot.slane %v2700, %v2704
      %v2723 = vunpack.c.l.b16 %v2684
      %v2724 = vunpack.c.l.b16 %v2685
      %v2725 = vunpack.c.l.b16 %v2686
      %v2726 = vunpack.c.l.b16 %v2687
      %v2727 = vunpack.c.l.b16 %v2688
      %v2728 = vunpack.c.l.b16 %v2689
      %v2729 = vunpack.c.l.b16 %v2690
      %v2730 = vunpack.c.l.b16 %v2691
      %v2731 = vunpack.c.l.b16 %v2692
      %v2732 = vunpack.c.l.b16 %v2693
      %v2733 = vunpack.c.l.b16 %v2694
      %v2734 = vunpack.c.l.b16 %v2695
      %v2735 = vunpack.c.l.b16 %v2696
      %v2736 = vunpack.c.l.b16 %v2697
      %v2737 = vunpack.c.l.b16 %v2698
      %v2738 = vunpack.c.l.b16 %v2699
      %v2739 = vpack.c.b16 %v2724, %v2723
      %v2740 = vpack.c.b16 %v2726, %v2725
      %v2741 = vpack.c.b16 %v2728, %v2727
      %v2742 = vpack.c.b16 %v2730, %v2729
      %v2743 = vpack.c.b16 %v2732, %v2731
      %v2744 = vpack.c.b16 %v2734, %v2733
      %v2745 = vpack.c.b16 %v2736, %v2735
      %v2746 = vpack.c.b16 %v2738, %v2737
      %2755 = vmatprep.subr.bf16.mxu0 0
      %2756 = vmatpush1.bf16.msra.mxu0 %v2739
      %2757 = vmatprep.subr.bf16.mxu0 0
      %2758 = vmatpush1.bf16.msra.mxu0 %v2740
      %2759 = vmatprep.subr.bf16.mxu0 0
      %2760 = vmatpush1.bf16.msra.mxu0 %v2741
      %2761 = vmatprep.subr.bf16.mxu0 0
      %2762 = vmatpush1.bf16.msra.mxu0 %v2742
      %2763 = vmatprep.subr.bf16.mxu0 0
      %2764 = vmatpush1.bf16.msra.mxu0 %v2743
      %2765 = vmatprep.subr.bf16.mxu0 0
      %2766 = vmatpush1.bf16.msra.mxu0 %v2744
      %2767 = vmatprep.subr.bf16.mxu0 0
      %2768 = vmatpush1.bf16.msra.mxu0 %v2745
      %2769 = vmatprep.subr.bf16.mxu0 0
      %2770 = vmatpush1.bf16.msra.mxu0 %v2746
      %2771 = vmatprep.subr.bf16.mxu0 0
      %2772 = vmatpush1.bf16.msra.mxu0 0
      %2773 = vmatprep.subr.bf16.mxu0 0
      %2774 = vmatpush1.bf16.msra.mxu0 0
      %2775 = vmatprep.subr.bf16.mxu0 0
      %2776 = vmatpush1.bf16.msra.mxu0 0
      %2777 = vmatprep.subr.bf16.mxu0 0
      %2778 = vmatpush1.bf16.msra.mxu0 0
      %2779 = vmatprep.subr.bf16.mxu0 0
      %2780 = vmatpush1.bf16.msra.mxu0 0
      %2781 = vmatprep.subr.bf16.mxu0 0
      %2782 = vmatpush1.bf16.msra.mxu0 0
      %2783 = vmatprep.subr.bf16.mxu0 0
      %2784 = vmatpush1.bf16.msra.mxu0 0
      %2785 = vmatprep.subr.bf16.mxu0 0
      %2786 = vmatpush1.bf16.msra.mxu0 0
      %2787 = vmatprep.mubr.bf16.mxu0 0
      %2788 = vmatmul.mubr.bf16.gmra.mrb[0].mxu0 %v2682
      %v2789 = vpop.f32.mrb[0].mxu0
      %v2790 = vadd.f32 %v2705, %v2789
      %v2791 = vpop.f32.mrb[0].mxu0
      %v2792 = vpop.f32.mrb[0].mxu0
      %v2793 = vadd.f32 %v2705, %v2792
      %v2794 = vpop.f32.mrb[0].mxu0
      %2795 = vmatprep.mubr.bf16.mxu0 0
      %2796 = vmatmul.mubr.bf16.gmra.mrb[0].mxu0 %v2683
      %v2797 = vpop.f32.mrb[0].mxu0
      %v2798 = vadd.f32 %v2705, %v2797
      %v2799 = vpop.f32.mrb[0].mxu0
      %v2800 = vpop.f32.mrb[0].mxu0
      %v2801 = vadd.f32 %v2705, %v2800
      %v2802 = vpop.f32.mrb[0].mxu0
      %2803 = vdwg.mxu0
      %v2804 = vadd.f32 %v2790, %v2488
      %v2805 = vadd.f32 %v2793, %v2489
      %v2806 = vadd.f32 %v2798, %v2490
      %v2807 = vadd.f32 %v2801, %v2491
      %2808 = vst.msk [vmem:[%s415] sm:$0xff] %vm424, %v2804
      %2809 = vst.msk [vmem:[%s415 + $0x8] sm:$0xff] %vm424, %v2805
      %2810 = vst.msk [vmem:[%s415 + $0x10] sm:$0xff] %vm424, %v2806
      %2811 = vst.msk [vmem:[%s415 + $0x18] sm:$0xff] %vm424, %v2807
      %s2812 = smul.u32 4, %s23
      %p2813 = scmp.lt.s32.totalorder %s2812, 7
      %s2814 = scalar_select %p2813, %s2812, 7
      %s2815 = smul.addr %s2814, 8
      %s2816 = scalar_lea.vmem %s12, %s2815
      // Predicated region
      $region69: #{tpu_custom_call.1} parent=67 // pred_check
        %p2817 = pneg %p298
      $region70: #{tpu_custom_call.1} parent=67 // pred_check_branch
        %2819 = sbr.rel (%p2817) target = $region72
      $region71: #{tpu_custom_call.1} parent=67 // pred_region
        %s2820 = smul.u32 4, %s23
      $region72: #{tpu_custom_call.1} parent=67 // pred_fallthru
        _
    $region68: #{tpu_custom_call.1} parent=5 // pred_fallthru
      _
    %p2821 = scmp.le.s32.totalorder 2, %s18
    // Predicated region
    $region73: #{tpu_custom_call.1} parent=5 // pred_check
      %p2822 = pneg %p2821
    $region74: #{tpu_custom_call.1} parent=5 // pred_check_branch
      %2824 = sbr.rel (%p2822) target = $region76
    $region75: #{tpu_custom_call.1} parent=5 // pred_region
      %s2825 = ssub.s32 %s18, 2
      // Predicated region
      $region77: #{tpu_custom_call.1} parent=75 // pred_check
        %p2826 = pneg %p304
      $region78: #{tpu_custom_call.1} parent=75 // pred_check_branch
        %2828 = sbr.rel (%p2826) target = $region80
      $region79: #{tpu_custom_call.1} parent=75 // pred_region
        %s2829 = smul.u32 4, %s24
        %p2830 = scmp.lt.s32.totalorder %s2829, 7
        %s2831 = scalar_select %p2830, %s2829, 7
        %s2832 = smul.addr %s2831, 8
        %s2833 = scalar_lea.vmem %s12, %s2832
      $region80: #{tpu_custom_call.1} parent=75 // pred_fallthru
        _
    $region76: #{tpu_custom_call.1} parent=5 // pred_fallthru
      _
  $region6: #{tpu_custom_call.1} parent=0 // loop_footer
    %s22 = sadd.s32 1, %s18
  $region7: #{tpu_custom_call.1} parent=0 // loop_footer_branch
    %17 = sbr.rel target = $region3
  $region8: #{tpu_custom_call.1} parent=0 // loop_exit
    _

</llo_original>
